<compile_context>
chip_gen: v5e
topology: v5e:2x2
jax: 0.10.0
libtpu: 0.0.40
codegen_flags: <defaults>
</compile_context>

<pallas_src>
import numpy as np
import jax
import jax.numpy as jnp
from jax.experimental import pallas as pl
from jax.experimental.pallas import tpu as pltpu

_HIGHEST = jax.lax.Precision.HIGHEST


# ---------------------------------------------------------------------------
# align_corners=True bilinear interpolation constants (host side)
# ---------------------------------------------------------------------------
def _align_corners_coords(in_size, out_size):
    if out_size == 1:
        src = np.zeros((1,), np.float64)
    else:
        src = np.arange(out_size, dtype=np.float64) * (in_size - 1) / (out_size - 1)
    i0 = np.clip(np.floor(src).astype(np.int64), 0, in_size - 1)
    i1 = np.minimum(i0 + 1, in_size - 1)
    return i0, i1, src - i0


def _width_interp_matrix_padded(in_w, out_w):
    """(in_w, out_w + 2): columns 1..out_w interpolate, columns 0 / out_w+1 are the
    zero halo needed by the following 3x3 conv.  in_w == out_w gives identity + halo."""
    x0, x1, fr = _align_corners_coords(in_w, out_w)
    m = np.zeros((in_w, out_w + 2), np.float32)
    for xo in range(out_w):
        m[int(x0[xo]), xo + 1] += 1.0 - float(fr[xo])
        m[int(x1[xo]), xo + 1] += float(fr[xo])
    return jnp.asarray(m)


def _height_interp_arrays(in_h, out_h):
    y0, y1, fr = _align_corners_coords(in_h, out_h)
    return (jnp.asarray(y0, jnp.int32), jnp.asarray(y1, jnp.int32),
            jnp.asarray(fr, jnp.float32))


def _height_interp_arrays_padded(in_h, out_h):
    """Indexed by *padded* output row 0..out_h+1; rmask zeroes the two halo rows."""
    y0, y1, fr = _align_corners_coords(in_h, out_h)
    y0p = np.zeros((out_h + 2,), np.int64)
    y1p = np.zeros((out_h + 2,), np.int64)
    frp = np.zeros((out_h + 2,), np.float64)
    msk = np.zeros((out_h + 2,), np.float32)
    y0p[1:out_h + 1] = y0
    y1p[1:out_h + 1] = y1
    frp[1:out_h + 1] = fr
    msk[1:out_h + 1] = 1.0
    return (jnp.asarray(y0p, jnp.int32), jnp.asarray(y1p, jnp.int32),
            jnp.asarray(frp, jnp.float32), jnp.asarray(msk, jnp.float32))


def _stack_dx_taps(w_hwio):
    """(3, 3, Cin, Cout) -> (3, 3*Cout, Cin): the three dx taps of one dy share a single
    MXU matmul; row index is dx*Cout + cout."""
    kh, kw, cin, cout = w_hwio.shape
    return jnp.transpose(w_hwio, (0, 1, 3, 2)).reshape(kh, kw * cout, cin)


def _fold_bn(gamma, beta, mean, var, eps=1e-5):
    scale = gamma / jnp.sqrt(var + eps)
    return scale, beta - mean * scale


def _pick_row_tile(ho):
    for tr in (128, 64, 32, 16, 8):
        if ho % tr == 0 and ho // tr >= 2:
            return tr
    return ho


# ---------------------------------------------------------------------------
# in-kernel helper: bilinear upsample (+ zero halo) of one source into VMEM scratch
# ---------------------------------------------------------------------------
def _upsample_rows_into_padded(src_ref, dst_ref, wmat, y0_ref, y1_ref, wy_ref,
                               src_idx, n_rows):
    """dst_ref (n_rows+2, C, Wout+2) <- zero-haloed bilinear upsample of
    src_ref (Hin, C, Win).  Height blend uses SMEM indices/weights; width interp and the
    width halo are one lane-dense matmul per row."""
    zero_row = jnp.zeros(dst_ref.shape[1:], dst_ref.dtype)
    dst_ref[0] = zero_row
    dst_ref[n_rows + 1] = zero_row

    def body(i, carry):
        r0 = src_ref[y0_ref[src_idx, i]]
        r1 = src_ref[y1_ref[src_idx, i]]
        t = wy_ref[src_idx, i]
        blended = r0 + t * (r1 - r0)                                  # (C, Win)
        dst_ref[i + 1] = jnp.dot(blended, wmat,
                                 preferred_element_type=jnp.float32,
                                 precision=_HIGHEST)                  # (C, Wout+2)
        return carry

    jax.lax.fori_loop(0, n_rows, body, 0)


# ---------------------------------------------------------------------------
# Kernel A: up_2x2(x2) + up_4x4(x3) + channel-split 3x3 fuse conv + BN + ReLU
# ---------------------------------------------------------------------------
def _make_fuse_kernel(H, W, CF):
    def kernel(y0s, y1s, wys,                                   # SMEM (3, H)
               x1_ref, x2_ref, x3_ref, wm1_ref, wm2_ref, wm4_ref,
               wf_ref, sf_ref, bf_ref,
               o_ref,                                           # (H, CF, W)
               p1_ref, p2_ref, p3_ref):                         # scratch (H+2, C, W+2)
        srcs = (x1_ref, x2_ref, x3_ref)
        wms = (wm1_ref, wm2_ref, wm4_ref)
        pads = (p1_ref, p2_ref, p3_ref)

        # Build the three zero-haloed, upsampled sources in VMEM (no pad/concat in HBM).
        for s in range(3):
            _upsample_rows_into_padded(srcs[s], pads[s], wms[s][...],
                                       y0s, y1s, wys, s, H)

        wf = [[wf_ref[s, dy] for dy in range(3)] for s in range(3)]   # (3*CF, C) tiles
        scale = sf_ref[...]                                           # (CF, 1)
        bias = bf_ref[...]

        def row(y, carry):
            acc = jnp.zeros((CF, W), jnp.float32)
            for s in range(3):                    # Cin split: x1 | up2(x2) | up4(x3)
                for dy in range(3):
                    prow = pads[s][y + dy]                            # (C, W+2)
                    res = jnp.dot(wf[s][dy], prow,
                                  preferred_element_type=jnp.float32,
                                  precision=_HIGHEST)                 # (3*CF, W+2)
                    acc = (acc + res[0:CF, 0:W]
                               + res[CF:2 * CF, 1:W + 1]
                               + res[2 * CF:3 * CF, 2:W + 2])
            o_ref[y] = jnp.maximum(acc * scale + bias, 0.0).astype(o_ref.dtype)
            return carry

        jax.lax.fori_loop(0, H, row, 0)

    return kernel


def fuse_stage(x1t, x2t, x3t, w_fuse, scale, bias):
    """x*t: (N, H*, C, W*) rows with channels on sublanes / width on lanes.
    Returns the fuse activation as (N, H, CF, W)."""
    n, h, c, w = x1t.shape
    h2, w2 = x2t.shape[1], x2t.shape[3]
    h4, w4 = x3t.shape[1], x3t.shape[3]
    cf = w_fuse.shape[-1]

    wm1 = _width_interp_matrix_padded(w, w)      # identity + halo (scale 1)
    wm2 = _width_interp_matrix_padded(w2, w)     # x2 width interp + halo
    wm4 = _width_interp_matrix_padded(w4, w)     # x4 width interp + halo
    hcoords = [_height_interp_arrays(hh, h) for hh in (h, h2, h4)]
    y0s = jnp.stack([a[0] for a in hcoords])     # (3, H) int32
    y1s = jnp.stack([a[1] for a in hcoords])
    wys = jnp.stack([a[2] for a in hcoords])     # (3, H) float32

    wf_all = jnp.stack([_stack_dx_taps(w_fuse[:, :, s * c:(s + 1) * c, :])
                        for s in range(3)])      # (3, 3, 3*CF, C)

    return pl.pallas_call(
        _make_fuse_kernel(h, w, cf),
        out_shape=jax.ShapeDtypeStruct((n, h, cf, w), x1t.dtype),
        grid_spec=pltpu.PrefetchScalarGridSpec(
            num_scalar_prefetch=3,
            grid=(n,),
            in_specs=[
                pl.BlockSpec((None, h, c, w), lambda i, *_: (i, 0, 0, 0)),
                pl.BlockSpec((None, h2, c, w2), lambda i, *_: (i, 0, 0, 0)),
                pl.BlockSpec((None, h4, c, w4), lambda i, *_: (i, 0, 0, 0)),
                pl.BlockSpec((w, w + 2), lambda i, *_: (0, 0)),
                pl.BlockSpec((w2, w + 2), lambda i, *_: (0, 0)),
                pl.BlockSpec((w4, w + 2), lambda i, *_: (0, 0)),
                pl.BlockSpec((3, 3, 3 * cf, c), lambda i, *_: (0, 0, 0, 0)),
                pl.BlockSpec((cf, 1), lambda i, *_: (0, 0)),
                pl.BlockSpec((cf, 1), lambda i, *_: (0, 0)),
            ],
            out_specs=pl.BlockSpec((None, h, cf, w), lambda i, *_: (i, 0, 0, 0)),
            scratch_shapes=[pltpu.VMEM((h + 2, c, w + 2), jnp.float32)] * 3,
        ),
        compiler_params=pltpu.CompilerParams(dimension_semantics=("parallel",)),
    )(y0s, y1s, wys,
      x1t, x2t, x3t, wm1, wm2, wm4, wf_all,
      scale.reshape(cf, 1), bias.reshape(cf, 1))


# ---------------------------------------------------------------------------
# Kernel B: up_2x2 + c1 (3x3 conv + BN + ReLU) + c2 (1x1 + BN + ReLU) + c3 + sigmoid
# ---------------------------------------------------------------------------
def _make_head_kernel(C1, WO, TR):
    def kernel(y0p, y1p, wyp, rmask,                            # SMEM (Ho+2,)
               f_ref, wm_ref, w1_ref, s1_ref, b1_ref,
               w2_ref, s2_ref, b2_ref, w3_ref, b3_ref,
               o_ref,                                           # (TR, OUT_C, WO)
               pad_ref):                                        # scratch (TR+2, CF, WO+2)
        base = pl.program_id(1) * TR
        wm = wm_ref[...]

        # --- up_2x2 of this row tile (+ halo rows), zero-haloed, into VMEM -----------
        def build(i, carry):
            g = base + i                                        # global padded row
            r0 = f_ref[y0p[g]]
            r1 = f_ref[y1p[g]]
            t = wyp[g]
            blended = (r0 + t * (r1 - r0)) * rmask[g]           # (CF, W); halo rows -> 0
            pad_ref[i] = jnp.dot(blended, wm,
                                 preferred_element_type=jnp.float32,
                                 precision=_HIGHEST)            # (CF, WO+2)
            return carry

        jax.lax.fori_loop(0, TR + 2, build, 0)

        w1 = [w1_ref[dy] for dy in range(3)]                    # (3*C1, CF)
        s1 = s1_ref[...]
        b1 = b1_ref[...]
        w2 = w2_ref[...]
        s2 = s2_ref[...]
        b2 = b2_ref[...]
        w3 = w3_ref[...]
        b3 = b3_ref[...]

        def row(y, carry):
            # c1: 3x3 conv with the three dx taps stacked into one matmul per dy.
            acc = jnp.zeros((C1, WO), jnp.float32)
            for dy in range(3):
                prow = pad_ref[y + dy]                                    # (CF, WO+2)
                res = jnp.dot(w1[dy], prow,
                              preferred_element_type=jnp.float32,
                              precision=_HIGHEST)                         # (3*C1, WO+2)
                acc = (acc + res[0:C1, 0:WO]
                           + res[C1:2 * C1, 1:WO + 1]
                           + res[2 * C1:3 * C1, 2:WO + 2])
            h = jnp.maximum(acc * s1 + b1, 0.0)                           # c1 BN + ReLU
            h = jnp.dot(w2, h, preferred_element_type=jnp.float32,
                        precision=_HIGHEST)
            h = jnp.maximum(h * s2 + b2, 0.0)                             # c2 BN + ReLU
            h = jnp.dot(w3, h, preferred_element_type=jnp.float32,
                        precision=_HIGHEST) + b3                          # c3 + bias
            o_ref[y] = jax.nn.sigmoid(h).astype(o_ref.dtype)              # (OUT_C, WO)
            return carry

        jax.lax.fori_loop(0, TR, row, 0)

    return kernel


def head_stage(f, w_c1, s1, b1, w_c2, s2, b2, w_c3, b3):
    """f: (N, H, CF, W) fuse activation.  Returns (N, 2H, OUT_C, 2W)."""
    n, h, cf, w = f.shape
    c1 = w_c1.shape[-1]
    c2 = w_c2.shape[-1]
    outc = w_c3.shape[-1]
    ho, wo = 2 * h, 2 * w
    tr = _pick_row_tile(ho)

    wm = _width_interp_matrix_padded(w, wo)
    y0p, y1p, wyp, rmask = _height_interp_arrays_padded(h, ho)
    w1cat = _stack_dx_taps(w_c1)                                # (3, 3*C1, CF)
    w2t = w_c2.reshape(c1, c2).T                                # (C2, C1)
    w3t = w_c3.reshape(c2, outc).T                              # (OUT_C, C2)

    return pl.pallas_call(
        _make_head_kernel(c1, wo, tr),
        out_shape=jax.ShapeDtypeStruct((n, ho, outc, wo), f.dtype),
        grid_spec=pltpu.PrefetchScalarGridSpec(
            num_scalar_prefetch=4,
            grid=(n, ho // tr),
            in_specs=[
                pl.BlockSpec((None, h, cf, w), lambda i, j, *_: (i, 0, 0, 0)),
                pl.BlockSpec((w, wo + 2), lambda i, j, *_: (0, 0)),
                pl.BlockSpec((3, 3 * c1, cf), lambda i, j, *_: (0, 0, 0)),
                pl.BlockSpec((c1, 1), lambda i, j, *_: (0, 0)),
                pl.BlockSpec((c1, 1), lambda i, j, *_: (0, 0)),
                pl.BlockSpec((c2, c1), lambda i, j, *_: (0, 0)),
                pl.BlockSpec((c2, 1), lambda i, j, *_: (0, 0)),
                pl.BlockSpec((c2, 1), lambda i, j, *_: (0, 0)),
                pl.BlockSpec((outc, c2), lambda i, j, *_: (0, 0)),
                pl.BlockSpec((outc, 1), lambda i, j, *_: (0, 0)),
            ],
            out_specs=pl.BlockSpec((None, tr, outc, wo), lambda i, j, *_: (i, j, 0, 0)),
            scratch_shapes=[pltpu.VMEM((tr + 2, cf, wo + 2), jnp.float32)],
        ),
        compiler_params=pltpu.CompilerParams(
            dimension_semantics=("parallel", "parallel")),
    )(y0p, y1p, wyp, rmask,
      f, wm, w1cat, s1.reshape(c1, 1), b1.reshape(c1, 1),
      w2t, s2.reshape(c2, 1), b2.reshape(c2, 1),
      w3t, b3.reshape(outc, 1))


# ---------------------------------------------------------------------------
# Full output_block forward (inputs/outputs NCHW like the PyTorch module)
# ---------------------------------------------------------------------------
def output_block_forward(x1, x2, x3, p, eps=1e-5):
    to_hcw = lambda a: jnp.transpose(a, (0, 2, 1, 3))          # NCHW -> (N, H, C, W)
    sf, bf = _fold_bn(*p['bn_fuse'], eps=eps)
    s1, b1 = _fold_bn(*p['bn_c1'], eps=eps)
    s2, b2 = _fold_bn(*p['bn_c2'], eps=eps)

    fuse = fuse_stage(to_hcw(x1), to_hcw(x2), to_hcw(x3), p['w_fuse'], sf, bf)
    y = head_stage(fuse, p['w_c1'], s1, b1, p['w_c2'], s2, b2, p['w_c3'], p['b_c3'])
    return jnp.transpose(y, (0, 2, 1, 3))                      # (N, OUT_C, 2H, 2W)


# ---------------------------------------------------------------------------
# Pure-JAX reference mirroring the PyTorch forward (inference-mode BN)
# ---------------------------------------------------------------------------
def _conv_ref(x, w, padding):
    return jax.lax.conv_general_dilated(
        x, w, window_strides=(1, 1), padding=padding,
        dimension_numbers=('NHWC', 'HWIO', 'NHWC'), precision=_HIGHEST)


def _bn_ref(x, gamma, beta, mean, var, eps=1e-5):
    return (x - mean) * (gamma / jnp.sqrt(var + eps)) + beta


def _upsample_ref(x, scale):
    n, h, w, c = x.shape
    ho, wo = h * scale, w * scale
    ys = jnp.arange(ho) * ((h - 1) / (ho - 1))
    xs = jnp.arange(wo) * ((w - 1) / (wo - 1))
    y0 = jnp.floor(ys).astype(jnp.int32)
    y1 = jnp.minimum(y0 + 1, h - 1)
    wy = (ys - y0).astype(x.dtype)[None, :, None, None]
    x0 = jnp.floor(xs).astype(jnp.int32)
    x1 = jnp.minimum(x0 + 1, w - 1)
    wx = (xs - x0).astype(x.dtype)[None, None, :, None]
    rows = x[:, y0] * (1.0 - wy) + x[:, y1] * wy
    return rows[:, :, x0] * (1.0 - wx) + rows[:, :, x1] * wx


def _reference_forward(x1, x2, x3, p):
    to_nhwc = lambda t: jnp.transpose(t, (0, 2, 3, 1))
    x1, x2, x3 = to_nhwc(x1), to_nhwc(x2), to_nhwc(x3)
    x = jnp.concatenate([x1, _upsample_ref(x2, 2), _upsample_ref(x3, 4)], axis=-1)
    x = jnp.maximum(_bn_ref(_conv_ref(x, p['w_fuse'], 'SAME'), *p['bn_fuse']), 0.0)
    x = _upsample_ref(x, 2)
    x = jnp.maximum(_bn_ref(_conv_ref(x, p['w_c1'], 'SAME'), *p['bn_c1']), 0.0)
    x = jnp.maximum(_bn_ref(_conv_ref(x, p['w_c2'], 'VALID'), *p['bn_c2']), 0.0)
    x = _conv_ref(x, p['w_c3'], 'VALID') + p['b_c3']
    return jnp.transpose(jax.nn.sigmoid(x), (0, 3, 1, 2))


if __name__ == "__main__":
    key = jax.random.PRNGKey(0)
    N, IN_C, OUT_C = 2, 4, 1
    H, W = 16, 16                     # x1 spatial; final output is (2H, 2W)

    ks = jax.random.split(key, 11)
    x1 = jax.random.normal(ks[0], (N, IN_C, H, W), jnp.float32)
    x2 = jax.random.normal(ks[1], (N, IN_C, H // 2, W // 2), jnp.float32)
    x3 = jax.random.normal(ks[2], (N, IN_C, H // 4, W // 4), jnp.float32)

    def conv_w(k, kh, kw, cin, cout):
        return (jax.random.normal(k, (kh, kw, cin, cout), jnp.float32)
                / np.sqrt(kh * kw * cin))

    def bn_p(k, c):
        k1, k2, k3, k4 = jax.random.split(k, 4)
        gamma = jax.random.uniform(k1, (c,), jnp.float32, 0.5, 1.5)
        beta = 0.1 * jax.random.normal(k2, (c,), jnp.float32)
        mean = 0.1 * jax.random.normal(k3, (c,), jnp.float32)
        var = jax.random.uniform(k4, (c,), jnp.float32, 0.5, 1.5)
        return gamma, beta, mean, var

    p = {
        'w_fuse': conv_w(ks[3], 3, 3, 3 * IN_C, IN_C),
        'bn_fuse': bn_p(ks[4], IN_C),
        'w_c1': conv_w(ks[5], 3, 3, IN_C, 128),
        'bn_c1': bn_p(ks[6], 128),
        'w_c2': conv_w(ks[7], 1, 1, 128, 64),
        'bn_c2': bn_p(ks[8], 64),
        'w_c3': conv_w(ks[9], 1, 1, 64, OUT_C),
        'b_c3': 0.1 * jax.random.normal(ks[10], (OUT_C,), jnp.float32),
    }

    y = jax.block_until_ready(output_block_forward(x1, x2, x3, p))
    y_ref = jax.block_until_ready(_reference_forward(x1, x2, x3, p))

    assert y.shape == (N, OUT_C, 2 * H, 2 * W), y.shape
    err = float(jnp.max(jnp.abs(y - y_ref)))
    assert err < 5e-4, f"max abs error vs reference: {err}"
    print("KERNEL_OK")
</pallas_src>

<mosaic_0001>
module attributes {stable_mosaic.version = 11 : i64} {
  func.func @kernel(%arg0: i32, %arg1: memref<3x16xi32, #tpu.memory_space<smem>>, %arg2: memref<3x16xi32, #tpu.memory_space<smem>>, %arg3: memref<3x16xf32, #tpu.memory_space<smem>>, %arg4: memref<1x16x4x16xf32, #tpu.memory_space<vmem>>, %arg5: memref<1x8x4x8xf32, #tpu.memory_space<vmem>>, %arg6: memref<1x4x4x4xf32, #tpu.memory_space<vmem>>, %arg7: memref<16x18xf32, #tpu.memory_space<vmem>>, %arg8: memref<8x18xf32, #tpu.memory_space<vmem>>, %arg9: memref<4x18xf32, #tpu.memory_space<vmem>>, %arg10: memref<3x3x12x4xf32, #tpu.memory_space<vmem>>, %arg11: memref<4x1xf32, #tpu.memory_space<vmem>>, %arg12: memref<4x1xf32, #tpu.memory_space<vmem>>, %arg13: memref<1x16x4x16xf32, #tpu.memory_space<vmem>>, %arg14: memref<18x4x18xf32, #tpu.memory_space<vmem>>, %arg15: memref<18x4x18xf32, #tpu.memory_space<vmem>>, %arg16: memref<18x4x18xf32, #tpu.memory_space<vmem>>) attributes {dimension_semantics = [#tpu.dimension_semantics<parallel>], iteration_bounds = array<i64: 2>, scalar_prefetch = 3 : i64, scratch_operands = 3 : i64, tpu.core_type = #tpu.core_type<tc>, window_params = [{transform_indices = @transform_0, window_bounds = array<i64: 1, 16, 4, 16>}, {transform_indices = @transform_1, window_bounds = array<i64: 1, 8, 4, 8>}, {transform_indices = @transform_2, window_bounds = array<i64: 1, 4, 4, 4>}, {pipeline_mode = #tpu.pipeline_mode<synchronous>, transform_indices = @transform_3, window_bounds = array<i64: 16, 18>}, {pipeline_mode = #tpu.pipeline_mode<synchronous>, transform_indices = @transform_4, window_bounds = array<i64: 8, 18>}, {pipeline_mode = #tpu.pipeline_mode<synchronous>, transform_indices = @transform_5, window_bounds = array<i64: 4, 18>}, {pipeline_mode = #tpu.pipeline_mode<synchronous>, transform_indices = @transform_6, window_bounds = array<i64: 3, 3, 12, 4>}, {pipeline_mode = #tpu.pipeline_mode<synchronous>, transform_indices = @transform_7, window_bounds = array<i64: 4, 1>}, {pipeline_mode = #tpu.pipeline_mode<synchronous>, transform_indices = @transform_8, window_bounds = array<i64: 4, 1>}, {transform_indices = @transform_9, window_bounds = array<i64: 1, 16, 4, 16>}]} {
    %c0 = arith.constant 0 : index
    %c0_0 = arith.constant 0 : index
    %0 = vector.load %arg7[%c0, %c0_0] : memref<16x18xf32, #tpu.memory_space<vmem>>, vector<16x18xf32>
    %cst = arith.constant 0.000000e+00 : f32
    %1 = vector.broadcast %cst : f32 to vector<4x18xf32>
    %c0_1 = arith.constant 0 : index
    %c0_2 = arith.constant 0 : index
    %c0_3 = arith.constant 0 : index
    %2 = vector.load %arg14[%c0_1, %c0_2, %c0_3] : memref<18x4x18xf32, #tpu.memory_space<vmem>>, vector<1x4x18xf32>
    %3 = vector.shape_cast %2 : vector<1x4x18xf32> to vector<4x18xf32>
    %4 = vector.shape_cast %1 : vector<4x18xf32> to vector<1x4x18xf32>
    tpu.vector_store %arg14[%c0_1, %c0_2, %c0_3], %4 {strides = array<i32>} : memref<18x4x18xf32, #tpu.memory_space<vmem>>, vector<1x4x18xf32>,
    %c17 = arith.constant 17 : index
    %c0_4 = arith.constant 0 : index
    %c0_5 = arith.constant 0 : index
    %5 = vector.load %arg14[%c17, %c0_4, %c0_5] : memref<18x4x18xf32, #tpu.memory_space<vmem>>, vector<1x4x18xf32>
    %6 = vector.shape_cast %5 : vector<1x4x18xf32> to vector<4x18xf32>
    %7 = vector.shape_cast %1 : vector<4x18xf32> to vector<1x4x18xf32>
    tpu.vector_store %arg14[%c17, %c0_4, %c0_5], %7 {strides = array<i32>} : memref<18x4x18xf32, #tpu.memory_space<vmem>>, vector<1x4x18xf32>,
    %c0_i32 = arith.constant 0 : i32
    %c16_i32 = arith.constant 16 : i32
    %8 = arith.addi %c0_i32, %c16_i32 : i32
    %c1_i32 = arith.constant 1 : i32
    scf.for %arg17 = %c0_i32 to %8 step %c1_i32  : i32 {
      %c0_75 = arith.constant 0 : index
      %48 = arith.index_cast %arg17 : i32 to index
      %49 = memref.load %arg1[%c0_75, %48] : memref<3x16xi32, #tpu.memory_space<smem>>
      %c0_76 = arith.constant 0 : index
      %50 = arith.index_cast %49 : i32 to index
      %c0_77 = arith.constant 0 : index
      %c0_78 = arith.constant 0 : index
      %51 = vector.load %arg4[%c0_76, %50, %c0_77, %c0_78] : memref<1x16x4x16xf32, #tpu.memory_space<vmem>>, vector<1x1x4x16xf32>
      %52 = vector.shape_cast %51 : vector<1x1x4x16xf32> to vector<4x16xf32>
      %c0_79 = arith.constant 0 : index
      %53 = arith.index_cast %arg17 : i32 to index
      %54 = memref.load %arg2[%c0_79, %53] : memref<3x16xi32, #tpu.memory_space<smem>>
      %c0_80 = arith.constant 0 : index
      %55 = arith.index_cast %54 : i32 to index
      %c0_81 = arith.constant 0 : index
      %c0_82 = arith.constant 0 : index
      %56 = vector.load %arg4[%c0_80, %55, %c0_81, %c0_82] : memref<1x16x4x16xf32, #tpu.memory_space<vmem>>, vector<1x1x4x16xf32>
      %57 = vector.shape_cast %56 : vector<1x1x4x16xf32> to vector<4x16xf32>
      %c0_83 = arith.constant 0 : index
      %58 = arith.index_cast %arg17 : i32 to index
      %59 = memref.load %arg3[%c0_83, %58] : memref<3x16xf32, #tpu.memory_space<smem>>
      %60 = arith.subf %57, %52 : vector<4x16xf32>
      %61 = vector.broadcast %59 : f32 to vector<4x16xf32>
      %62 = arith.mulf %61, %60 : vector<4x16xf32>
      %63 = arith.addf %52, %62 : vector<4x16xf32>
      %cst_84 = arith.constant dense<0.000000e+00> : vector<4x18xf32>
      %64 = tpu.matmul %63, %0, %cst_84 {dimension_numbers = #tpu.dot_dimension_numbers<[1], [0], [0], [1], [0, 0, 1, 1], [], []>, precision = #tpu.contract_precision<fp32>} : vector<4x16xf32>, vector<16x18xf32>, vector<4x18xf32> -> vector<4x18xf32>
      %c1_i32_85 = arith.constant 1 : i32
      %65 = arith.addi %arg17, %c1_i32_85 : i32
      %66 = arith.index_cast %65 : i32 to index
      %c0_86 = arith.constant 0 : index
      %c0_87 = arith.constant 0 : index
      %67 = vector.load %arg14[%66, %c0_86, %c0_87] : memref<18x4x18xf32, #tpu.memory_space<vmem>>, vector<1x4x18xf32>
      %68 = vector.shape_cast %67 : vector<1x4x18xf32> to vector<4x18xf32>
      %69 = vector.shape_cast %64 : vector<4x18xf32> to vector<1x4x18xf32>
      tpu.vector_store %arg14[%66, %c0_86, %c0_87], %69 {strides = array<i32>} : memref<18x4x18xf32, #tpu.memory_space<vmem>>, vector<1x4x18xf32>,
    }
    %c16_i32_6 = arith.constant 16 : i32
    %c0_7 = arith.constant 0 : index
    %c0_8 = arith.constant 0 : index
    %9 = vector.load %arg8[%c0_7, %c0_8] : memref<8x18xf32, #tpu.memory_space<vmem>>, vector<8x18xf32>
    %cst_9 = arith.constant 0.000000e+00 : f32
    %10 = vector.broadcast %cst_9 : f32 to vector<4x18xf32>
    %c0_10 = arith.constant 0 : index
    %c0_11 = arith.constant 0 : index
    %c0_12 = arith.constant 0 : index
    %11 = vector.load %arg15[%c0_10, %c0_11, %c0_12] : memref<18x4x18xf32, #tpu.memory_space<vmem>>, vector<1x4x18xf32>
    %12 = vector.shape_cast %11 : vector<1x4x18xf32> to vector<4x18xf32>
    %13 = vector.shape_cast %10 : vector<4x18xf32> to vector<1x4x18xf32>
    tpu.vector_store %arg15[%c0_10, %c0_11, %c0_12], %13 {strides = array<i32>} : memref<18x4x18xf32, #tpu.memory_space<vmem>>, vector<1x4x18xf32>,
    %c17_13 = arith.constant 17 : index
    %c0_14 = arith.constant 0 : index
    %c0_15 = arith.constant 0 : index
    %14 = vector.load %arg15[%c17_13, %c0_14, %c0_15] : memref<18x4x18xf32, #tpu.memory_space<vmem>>, vector<1x4x18xf32>
    %15 = vector.shape_cast %14 : vector<1x4x18xf32> to vector<4x18xf32>
    %16 = vector.shape_cast %10 : vector<4x18xf32> to vector<1x4x18xf32>
    tpu.vector_store %arg15[%c17_13, %c0_14, %c0_15], %16 {strides = array<i32>} : memref<18x4x18xf32, #tpu.memory_space<vmem>>, vector<1x4x18xf32>,
    %c0_i32_16 = arith.constant 0 : i32
    %c16_i32_17 = arith.constant 16 : i32
    %17 = arith.addi %c0_i32_16, %c16_i32_17 : i32
    %c1_i32_18 = arith.constant 1 : i32
    scf.for %arg17 = %c0_i32_16 to %17 step %c1_i32_18  : i32 {
      %c1_75 = arith.constant 1 : index
      %48 = arith.index_cast %arg17 : i32 to index
      %49 = memref.load %arg1[%c1_75, %48] : memref<3x16xi32, #tpu.memory_space<smem>>
      %c0_76 = arith.constant 0 : index
      %50 = arith.index_cast %49 : i32 to index
      %c0_77 = arith.constant 0 : index
      %c0_78 = arith.constant 0 : index
      %51 = vector.load %arg5[%c0_76, %50, %c0_77, %c0_78] : memref<1x8x4x8xf32, #tpu.memory_space<vmem>>, vector<1x1x4x8xf32>
      %52 = vector.shape_cast %51 : vector<1x1x4x8xf32> to vector<4x8xf32>
      %c1_79 = arith.constant 1 : index
      %53 = arith.index_cast %arg17 : i32 to index
      %54 = memref.load %arg2[%c1_79, %53] : memref<3x16xi32, #tpu.memory_space<smem>>
      %c0_80 = arith.constant 0 : index
      %55 = arith.index_cast %54 : i32 to index
      %c0_81 = arith.constant 0 : index
      %c0_82 = arith.constant 0 : index
      %56 = vector.load %arg5[%c0_80, %55, %c0_81, %c0_82] : memref<1x8x4x8xf32, #tpu.memory_space<vmem>>, vector<1x1x4x8xf32>
      %57 = vector.shape_cast %56 : vector<1x1x4x8xf32> to vector<4x8xf32>
      %c1_83 = arith.constant 1 : index
      %58 = arith.index_cast %arg17 : i32 to index
      %59 = memref.load %arg3[%c1_83, %58] : memref<3x16xf32, #tpu.memory_space<smem>>
      %60 = arith.subf %57, %52 : vector<4x8xf32>
      %61 = vector.broadcast %59 : f32 to vector<4x8xf32>
      %62 = arith.mulf %61, %60 : vector<4x8xf32>
      %63 = arith.addf %52, %62 : vector<4x8xf32>
      %cst_84 = arith.constant dense<0.000000e+00> : vector<4x18xf32>
      %64 = tpu.matmul %63, %9, %cst_84 {dimension_numbers = #tpu.dot_dimension_numbers<[1], [0], [0], [1], [0, 0, 1, 1], [], []>, precision = #tpu.contract_precision<fp32>} : vector<4x8xf32>, vector<8x18xf32>, vector<4x18xf32> -> vector<4x18xf32>
      %c1_i32_85 = arith.constant 1 : i32
      %65 = arith.addi %arg17, %c1_i32_85 : i32
      %66 = arith.index_cast %65 : i32 to index
      %c0_86 = arith.constant 0 : index
      %c0_87 = arith.constant 0 : index
      %67 = vector.load %arg15[%66, %c0_86, %c0_87] : memref<18x4x18xf32, #tpu.memory_space<vmem>>, vector<1x4x18xf32>
      %68 = vector.shape_cast %67 : vector<1x4x18xf32> to vector<4x18xf32>
      %69 = vector.shape_cast %64 : vector<4x18xf32> to vector<1x4x18xf32>
      tpu.vector_store %arg15[%66, %c0_86, %c0_87], %69 {strides = array<i32>} : memref<18x4x18xf32, #tpu.memory_space<vmem>>, vector<1x4x18xf32>,
    }
    %c16_i32_19 = arith.constant 16 : i32
    %c0_20 = arith.constant 0 : index
    %c0_21 = arith.constant 0 : index
    %18 = vector.load %arg9[%c0_20, %c0_21] : memref<4x18xf32, #tpu.memory_space<vmem>>, vector<4x18xf32>
    %cst_22 = arith.constant 0.000000e+00 : f32
    %19 = vector.broadcast %cst_22 : f32 to vector<4x18xf32>
    %c0_23 = arith.constant 0 : index
    %c0_24 = arith.constant 0 : index
    %c0_25 = arith.constant 0 : index
    %20 = vector.load %arg16[%c0_23, %c0_24, %c0_25] : memref<18x4x18xf32, #tpu.memory_space<vmem>>, vector<1x4x18xf32>
    %21 = vector.shape_cast %20 : vector<1x4x18xf32> to vector<4x18xf32>
    %22 = vector.shape_cast %19 : vector<4x18xf32> to vector<1x4x18xf32>
    tpu.vector_store %arg16[%c0_23, %c0_24, %c0_25], %22 {strides = array<i32>} : memref<18x4x18xf32, #tpu.memory_space<vmem>>, vector<1x4x18xf32>,
    %c17_26 = arith.constant 17 : index
    %c0_27 = arith.constant 0 : index
    %c0_28 = arith.constant 0 : index
    %23 = vector.load %arg16[%c17_26, %c0_27, %c0_28] : memref<18x4x18xf32, #tpu.memory_space<vmem>>, vector<1x4x18xf32>
    %24 = vector.shape_cast %23 : vector<1x4x18xf32> to vector<4x18xf32>
    %25 = vector.shape_cast %19 : vector<4x18xf32> to vector<1x4x18xf32>
    tpu.vector_store %arg16[%c17_26, %c0_27, %c0_28], %25 {strides = array<i32>} : memref<18x4x18xf32, #tpu.memory_space<vmem>>, vector<1x4x18xf32>,
    %c0_i32_29 = arith.constant 0 : i32
    %c16_i32_30 = arith.constant 16 : i32
    %26 = arith.addi %c0_i32_29, %c16_i32_30 : i32
    %c1_i32_31 = arith.constant 1 : i32
    scf.for %arg17 = %c0_i32_29 to %26 step %c1_i32_31  : i32 {
      %c2_75 = arith.constant 2 : index
      %48 = arith.index_cast %arg17 : i32 to index
      %49 = memref.load %arg1[%c2_75, %48] : memref<3x16xi32, #tpu.memory_space<smem>>
      %c0_76 = arith.constant 0 : index
      %50 = arith.index_cast %49 : i32 to index
      %c0_77 = arith.constant 0 : index
      %c0_78 = arith.constant 0 : index
      %51 = vector.load %arg6[%c0_76, %50, %c0_77, %c0_78] : memref<1x4x4x4xf32, #tpu.memory_space<vmem>>, vector<1x1x4x4xf32>
      %52 = vector.shape_cast %51 : vector<1x1x4x4xf32> to vector<4x4xf32>
      %c2_79 = arith.constant 2 : index
      %53 = arith.index_cast %arg17 : i32 to index
      %54 = memref.load %arg2[%c2_79, %53] : memref<3x16xi32, #tpu.memory_space<smem>>
      %c0_80 = arith.constant 0 : index
      %55 = arith.index_cast %54 : i32 to index
      %c0_81 = arith.constant 0 : index
      %c0_82 = arith.constant 0 : index
      %56 = vector.load %arg6[%c0_80, %55, %c0_81, %c0_82] : memref<1x4x4x4xf32, #tpu.memory_space<vmem>>, vector<1x1x4x4xf32>
      %57 = vector.shape_cast %56 : vector<1x1x4x4xf32> to vector<4x4xf32>
      %c2_83 = arith.constant 2 : index
      %58 = arith.index_cast %arg17 : i32 to index
      %59 = memref.load %arg3[%c2_83, %58] : memref<3x16xf32, #tpu.memory_space<smem>>
      %60 = arith.subf %57, %52 : vector<4x4xf32>
      %61 = vector.broadcast %59 : f32 to vector<4x4xf32>
      %62 = arith.mulf %61, %60 : vector<4x4xf32>
      %63 = arith.addf %52, %62 : vector<4x4xf32>
      %cst_84 = arith.constant dense<0.000000e+00> : vector<4x18xf32>
      %64 = tpu.matmul %63, %18, %cst_84 {dimension_numbers = #tpu.dot_dimension_numbers<[1], [0], [0], [1], [0, 0, 1, 1], [], []>, precision = #tpu.contract_precision<fp32>} : vector<4x4xf32>, vector<4x18xf32>, vector<4x18xf32> -> vector<4x18xf32>
      %c1_i32_85 = arith.constant 1 : i32
      %65 = arith.addi %arg17, %c1_i32_85 : i32
      %66 = arith.index_cast %65 : i32 to index
      %c0_86 = arith.constant 0 : index
      %c0_87 = arith.constant 0 : index
      %67 = vector.load %arg16[%66, %c0_86, %c0_87] : memref<18x4x18xf32, #tpu.memory_space<vmem>>, vector<1x4x18xf32>
      %68 = vector.shape_cast %67 : vector<1x4x18xf32> to vector<4x18xf32>
      %69 = vector.shape_cast %64 : vector<4x18xf32> to vector<1x4x18xf32>
      tpu.vector_store %arg16[%66, %c0_86, %c0_87], %69 {strides = array<i32>} : memref<18x4x18xf32, #tpu.memory_space<vmem>>, vector<1x4x18xf32>,
    }
    %c16_i32_32 = arith.constant 16 : i32
    %c0_33 = arith.constant 0 : index
    %c0_34 = arith.constant 0 : index
    %c0_35 = arith.constant 0 : index
    %c0_36 = arith.constant 0 : index
    %27 = vector.load %arg10[%c0_33, %c0_34, %c0_35, %c0_36] : memref<3x3x12x4xf32, #tpu.memory_space<vmem>>, vector<1x1x12x4xf32>
    %28 = vector.shape_cast %27 : vector<1x1x12x4xf32> to vector<12x4xf32>
    %c0_37 = arith.constant 0 : index
    %c1 = arith.constant 1 : index
    %c0_38 = arith.constant 0 : index
    %c0_39 = arith.constant 0 : index
    %29 = vector.load %arg10[%c0_37, %c1, %c0_38, %c0_39] : memref<3x3x12x4xf32, #tpu.memory_space<vmem>>, vector<1x1x12x4xf32>
    %30 = vector.shape_cast %29 : vector<1x1x12x4xf32> to vector<12x4xf32>
    %c0_40 = arith.constant 0 : index
    %c2 = arith.constant 2 : index
    %c0_41 = arith.constant 0 : index
    %c0_42 = arith.constant 0 : index
    %31 = vector.load %arg10[%c0_40, %c2, %c0_41, %c0_42] : memref<3x3x12x4xf32, #tpu.memory_space<vmem>>, vector<1x1x12x4xf32>
    %32 = vector.shape_cast %31 : vector<1x1x12x4xf32> to vector<12x4xf32>
    %c1_43 = arith.constant 1 : index
    %c0_44 = arith.constant 0 : index
    %c0_45 = arith.constant 0 : index
    %c0_46 = arith.constant 0 : index
    %33 = vector.load %arg10[%c1_43, %c0_44, %c0_45, %c0_46] : memref<3x3x12x4xf32, #tpu.memory_space<vmem>>, vector<1x1x12x4xf32>
    %34 = vector.shape_cast %33 : vector<1x1x12x4xf32> to vector<12x4xf32>
    %c1_47 = arith.constant 1 : index
    %c1_48 = arith.constant 1 : index
    %c0_49 = arith.constant 0 : index
    %c0_50 = arith.constant 0 : index
    %35 = vector.load %arg10[%c1_47, %c1_48, %c0_49, %c0_50] : memref<3x3x12x4xf32, #tpu.memory_space<vmem>>, vector<1x1x12x4xf32>
    %36 = vector.shape_cast %35 : vector<1x1x12x4xf32> to vector<12x4xf32>
    %c1_51 = arith.constant 1 : index
    %c2_52 = arith.constant 2 : index
    %c0_53 = arith.constant 0 : index
    %c0_54 = arith.constant 0 : index
    %37 = vector.load %arg10[%c1_51, %c2_52, %c0_53, %c0_54] : memref<3x3x12x4xf32, #tpu.memory_space<vmem>>, vector<1x1x12x4xf32>
    %38 = vector.shape_cast %37 : vector<1x1x12x4xf32> to vector<12x4xf32>
    %c2_55 = arith.constant 2 : index
    %c0_56 = arith.constant 0 : index
    %c0_57 = arith.constant 0 : index
    %c0_58 = arith.constant 0 : index
    %39 = vector.load %arg10[%c2_55, %c0_56, %c0_57, %c0_58] : memref<3x3x12x4xf32, #tpu.memory_space<vmem>>, vector<1x1x12x4xf32>
    %40 = vector.shape_cast %39 : vector<1x1x12x4xf32> to vector<12x4xf32>
    %c2_59 = arith.constant 2 : index
    %c1_60 = arith.constant 1 : index
    %c0_61 = arith.constant 0 : index
    %c0_62 = arith.constant 0 : index
    %41 = vector.load %arg10[%c2_59, %c1_60, %c0_61, %c0_62] : memref<3x3x12x4xf32, #tpu.memory_space<vmem>>, vector<1x1x12x4xf32>
    %42 = vector.shape_cast %41 : vector<1x1x12x4xf32> to vector<12x4xf32>
    %c2_63 = arith.constant 2 : index
    %c2_64 = arith.constant 2 : index
    %c0_65 = arith.constant 0 : index
    %c0_66 = arith.constant 0 : index
    %43 = vector.load %arg10[%c2_63, %c2_64, %c0_65, %c0_66] : memref<3x3x12x4xf32, #tpu.memory_space<vmem>>, vector<1x1x12x4xf32>
    %44 = vector.shape_cast %43 : vector<1x1x12x4xf32> to vector<12x4xf32>
    %c0_67 = arith.constant 0 : index
    %c0_68 = arith.constant 0 : index
    %45 = vector.load %arg11[%c0_67, %c0_68] : memref<4x1xf32, #tpu.memory_space<vmem>>, vector<4x1xf32>
    %c0_69 = arith.constant 0 : index
    %c0_70 = arith.constant 0 : index
    %46 = vector.load %arg12[%c0_69, %c0_70] : memref<4x1xf32, #tpu.memory_space<vmem>>, vector<4x1xf32>
    %c0_i32_71 = arith.constant 0 : i32
    %c16_i32_72 = arith.constant 16 : i32
    %47 = arith.addi %c0_i32_71, %c16_i32_72 : i32
    %c1_i32_73 = arith.constant 1 : i32
    scf.for %arg17 = %c0_i32_71 to %47 step %c1_i32_73  : i32 {
      %cst_75 = arith.constant 0.000000e+00 : f32
      %48 = vector.broadcast %cst_75 : f32 to vector<4x16xf32>
      %c0_i32_76 = arith.constant 0 : i32
      %49 = arith.addi %arg17, %c0_i32_76 : i32
      %50 = arith.index_cast %49 : i32 to index
      %c0_77 = arith.constant 0 : index
      %c0_78 = arith.constant 0 : index
      %51 = vector.load %arg14[%50, %c0_77, %c0_78] : memref<18x4x18xf32, #tpu.memory_space<vmem>>, vector<1x4x18xf32>
      %52 = vector.shape_cast %51 : vector<1x4x18xf32> to vector<4x18xf32>
      %cst_79 = arith.constant dense<0.000000e+00> : vector<12x18xf32>
      %53 = tpu.matmul %28, %52, %cst_79 {dimension_numbers = #tpu.dot_dimension_numbers<[1], [0], [0], [1], [0, 0, 1, 1], [], []>, precision = #tpu.contract_precision<fp32>} : vector<12x4xf32>, vector<4x18xf32>, vector<12x18xf32> -> vector<12x18xf32>
      %54 = vector.extract_strided_slice %53 {offsets = [0, 0], sizes = [4, 16], strides = [1, 1]} : vector<12x18xf32> to vector<4x16xf32>
      %55 = arith.addf %48, %54 : vector<4x16xf32>
      %56 = vector.extract_strided_slice %53 {offsets = [4, 1], sizes = [4, 16], strides = [1, 1]} : vector<12x18xf32> to vector<4x16xf32>
      %57 = arith.addf %55, %56 : vector<4x16xf32>
      %58 = vector.extract_strided_slice %53 {offsets = [8, 2], sizes = [4, 16], strides = [1, 1]} : vector<12x18xf32> to vector<4x16xf32>
      %59 = arith.addf %57, %58 : vector<4x16xf32>
      %c1_i32_80 = arith.constant 1 : i32
      %60 = arith.addi %arg17, %c1_i32_80 : i32
      %61 = arith.index_cast %60 : i32 to index
      %c0_81 = arith.constant 0 : index
      %c0_82 = arith.constant 0 : index
      %62 = vector.load %arg14[%61, %c0_81, %c0_82] : memref<18x4x18xf32, #tpu.memory_space<vmem>>, vector<1x4x18xf32>
      %63 = vector.shape_cast %62 : vector<1x4x18xf32> to vector<4x18xf32>
      %cst_83 = arith.constant dense<0.000000e+00> : vector<12x18xf32>
      %64 = tpu.matmul %30, %63, %cst_83 {dimension_numbers = #tpu.dot_dimension_numbers<[1], [0], [0], [1], [0, 0, 1, 1], [], []>, precision = #tpu.contract_precision<fp32>} : vector<12x4xf32>, vector<4x18xf32>, vector<12x18xf32> -> vector<12x18xf32>
      %65 = vector.extract_strided_slice %64 {offsets = [0, 0], sizes = [4, 16], strides = [1, 1]} : vector<12x18xf32> to vector<4x16xf32>
      %66 = arith.addf %59, %65 : vector<4x16xf32>
      %67 = vector.extract_strided_slice %64 {offsets = [4, 1], sizes = [4, 16], strides = [1, 1]} : vector<12x18xf32> to vector<4x16xf32>
      %68 = arith.addf %66, %67 : vector<4x16xf32>
      %69 = vector.extract_strided_slice %64 {offsets = [8, 2], sizes = [4, 16], strides = [1, 1]} : vector<12x18xf32> to vector<4x16xf32>
      %70 = arith.addf %68, %69 : vector<4x16xf32>
      %c2_i32 = arith.constant 2 : i32
      %71 = arith.addi %arg17, %c2_i32 : i32
      %72 = arith.index_cast %71 : i32 to index
      %c0_84 = arith.constant 0 : index
      %c0_85 = arith.constant 0 : index
      %73 = vector.load %arg14[%72, %c0_84, %c0_85] : memref<18x4x18xf32, #tpu.memory_space<vmem>>, vector<1x4x18xf32>
      %74 = vector.shape_cast %73 : vector<1x4x18xf32> to vector<4x18xf32>
      %cst_86 = arith.constant dense<0.000000e+00> : vector<12x18xf32>
      %75 = tpu.matmul %32, %74, %cst_86 {dimension_numbers = #tpu.dot_dimension_numbers<[1], [0], [0], [1], [0, 0, 1, 1], [], []>, precision = #tpu.contract_precision<fp32>} : vector<12x4xf32>, vector<4x18xf32>, vector<12x18xf32> -> vector<12x18xf32>
      %76 = vector.extract_strided_slice %75 {offsets = [0, 0], sizes = [4, 16], strides = [1, 1]} : vector<12x18xf32> to vector<4x16xf32>
      %77 = arith.addf %70, %76 : vector<4x16xf32>
      %78 = vector.extract_strided_slice %75 {offsets = [4, 1], sizes = [4, 16], strides = [1, 1]} : vector<12x18xf32> to vector<4x16xf32>
      %79 = arith.addf %77, %78 : vector<4x16xf32>
      %80 = vector.extract_strided_slice %75 {offsets = [8, 2], sizes = [4, 16], strides = [1, 1]} : vector<12x18xf32> to vector<4x16xf32>
      %81 = arith.addf %79, %80 : vector<4x16xf32>
      %c0_i32_87 = arith.constant 0 : i32
      %82 = arith.addi %arg17, %c0_i32_87 : i32
      %83 = arith.index_cast %82 : i32 to index
      %c0_88 = arith.constant 0 : index
      %c0_89 = arith.constant 0 : index
      %84 = vector.load %arg15[%83, %c0_88, %c0_89] : memref<18x4x18xf32, #tpu.memory_space<vmem>>, vector<1x4x18xf32>
      %85 = vector.shape_cast %84 : vector<1x4x18xf32> to vector<4x18xf32>
      %cst_90 = arith.constant dense<0.000000e+00> : vector<12x18xf32>
      %86 = tpu.matmul %34, %85, %cst_90 {dimension_numbers = #tpu.dot_dimension_numbers<[1], [0], [0], [1], [0, 0, 1, 1], [], []>, precision = #tpu.contract_precision<fp32>} : vector<12x4xf32>, vector<4x18xf32>, vector<12x18xf32> -> vector<12x18xf32>
      %87 = vector.extract_strided_slice %86 {offsets = [0, 0], sizes = [4, 16], strides = [1, 1]} : vector<12x18xf32> to vector<4x16xf32>
      %88 = arith.addf %81, %87 : vector<4x16xf32>
      %89 = vector.extract_strided_slice %86 {offsets = [4, 1], sizes = [4, 16], strides = [1, 1]} : vector<12x18xf32> to vector<4x16xf32>
      %90 = arith.addf %88, %89 : vector<4x16xf32>
      %91 = vector.extract_strided_slice %86 {offsets = [8, 2], sizes = [4, 16], strides = [1, 1]} : vector<12x18xf32> to vector<4x16xf32>
      %92 = arith.addf %90, %91 : vector<4x16xf32>
      %c1_i32_91 = arith.constant 1 : i32
      %93 = arith.addi %arg17, %c1_i32_91 : i32
      %94 = arith.index_cast %93 : i32 to index
      %c0_92 = arith.constant 0 : index
      %c0_93 = arith.constant 0 : index
      %95 = vector.load %arg15[%94, %c0_92, %c0_93] : memref<18x4x18xf32, #tpu.memory_space<vmem>>, vector<1x4x18xf32>
      %96 = vector.shape_cast %95 : vector<1x4x18xf32> to vector<4x18xf32>
      %cst_94 = arith.constant dense<0.000000e+00> : vector<12x18xf32>
      %97 = tpu.matmul %36, %96, %cst_94 {dimension_numbers = #tpu.dot_dimension_numbers<[1], [0], [0], [1], [0, 0, 1, 1], [], []>, precision = #tpu.contract_precision<fp32>} : vector<12x4xf32>, vector<4x18xf32>, vector<12x18xf32> -> vector<12x18xf32>
      %98 = vector.extract_strided_slice %97 {offsets = [0, 0], sizes = [4, 16], strides = [1, 1]} : vector<12x18xf32> to vector<4x16xf32>
      %99 = arith.addf %92, %98 : vector<4x16xf32>
      %100 = vector.extract_strided_slice %97 {offsets = [4, 1], sizes = [4, 16], strides = [1, 1]} : vector<12x18xf32> to vector<4x16xf32>
      %101 = arith.addf %99, %100 : vector<4x16xf32>
      %102 = vector.extract_strided_slice %97 {offsets = [8, 2], sizes = [4, 16], strides = [1, 1]} : vector<12x18xf32> to vector<4x16xf32>
      %103 = arith.addf %101, %102 : vector<4x16xf32>
      %c2_i32_95 = arith.constant 2 : i32
      %104 = arith.addi %arg17, %c2_i32_95 : i32
      %105 = arith.index_cast %104 : i32 to index
      %c0_96 = arith.constant 0 : index
      %c0_97 = arith.constant 0 : index
      %106 = vector.load %arg15[%105, %c0_96, %c0_97] : memref<18x4x18xf32, #tpu.memory_space<vmem>>, vector<1x4x18xf32>
      %107 = vector.shape_cast %106 : vector<1x4x18xf32> to vector<4x18xf32>
      %cst_98 = arith.constant dense<0.000000e+00> : vector<12x18xf32>
      %108 = tpu.matmul %38, %107, %cst_98 {dimension_numbers = #tpu.dot_dimension_numbers<[1], [0], [0], [1], [0, 0, 1, 1], [], []>, precision = #tpu.contract_precision<fp32>} : vector<12x4xf32>, vector<4x18xf32>, vector<12x18xf32> -> vector<12x18xf32>
      %109 = vector.extract_strided_slice %108 {offsets = [0, 0], sizes = [4, 16], strides = [1, 1]} : vector<12x18xf32> to vector<4x16xf32>
      %110 = arith.addf %103, %109 : vector<4x16xf32>
      %111 = vector.extract_strided_slice %108 {offsets = [4, 1], sizes = [4, 16], strides = [1, 1]} : vector<12x18xf32> to vector<4x16xf32>
      %112 = arith.addf %110, %111 : vector<4x16xf32>
      %113 = vector.extract_strided_slice %108 {offsets = [8, 2], sizes = [4, 16], strides = [1, 1]} : vector<12x18xf32> to vector<4x16xf32>
      %114 = arith.addf %112, %113 : vector<4x16xf32>
      %c0_i32_99 = arith.constant 0 : i32
      %115 = arith.addi %arg17, %c0_i32_99 : i32
      %116 = arith.index_cast %115 : i32 to index
      %c0_100 = arith.constant 0 : index
      %c0_101 = arith.constant 0 : index
      %117 = vector.load %arg16[%116, %c0_100, %c0_101] : memref<18x4x18xf32, #tpu.memory_space<vmem>>, vector<1x4x18xf32>
      %118 = vector.shape_cast %117 : vector<1x4x18xf32> to vector<4x18xf32>
      %cst_102 = arith.constant dense<0.000000e+00> : vector<12x18xf32>
      %119 = tpu.matmul %40, %118, %cst_102 {dimension_numbers = #tpu.dot_dimension_numbers<[1], [0], [0], [1], [0, 0, 1, 1], [], []>, precision = #tpu.contract_precision<fp32>} : vector<12x4xf32>, vector<4x18xf32>, vector<12x18xf32> -> vector<12x18xf32>
      %120 = vector.extract_strided_slice %119 {offsets = [0, 0], sizes = [4, 16], strides = [1, 1]} : vector<12x18xf32> to vector<4x16xf32>
      %121 = arith.addf %114, %120 : vector<4x16xf32>
      %122 = vector.extract_strided_slice %119 {offsets = [4, 1], sizes = [4, 16], strides = [1, 1]} : vector<12x18xf32> to vector<4x16xf32>
      %123 = arith.addf %121, %122 : vector<4x16xf32>
      %124 = vector.extract_strided_slice %119 {offsets = [8, 2], sizes = [4, 16], strides = [1, 1]} : vector<12x18xf32> to vector<4x16xf32>
      %125 = arith.addf %123, %124 : vector<4x16xf32>
      %c1_i32_103 = arith.constant 1 : i32
      %126 = arith.addi %arg17, %c1_i32_103 : i32
      %127 = arith.index_cast %126 : i32 to index
      %c0_104 = arith.constant 0 : index
      %c0_105 = arith.constant 0 : index
      %128 = vector.load %arg16[%127, %c0_104, %c0_105] : memref<18x4x18xf32, #tpu.memory_space<vmem>>, vector<1x4x18xf32>
      %129 = vector.shape_cast %128 : vector<1x4x18xf32> to vector<4x18xf32>
      %cst_106 = arith.constant dense<0.000000e+00> : vector<12x18xf32>
      %130 = tpu.matmul %42, %129, %cst_106 {dimension_numbers = #tpu.dot_dimension_numbers<[1], [0], [0], [1], [0, 0, 1, 1], [], []>, precision = #tpu.contract_precision<fp32>} : vector<12x4xf32>, vector<4x18xf32>, vector<12x18xf32> -> vector<12x18xf32>
      %131 = vector.extract_strided_slice %130 {offsets = [0, 0], sizes = [4, 16], strides = [1, 1]} : vector<12x18xf32> to vector<4x16xf32>
      %132 = arith.addf %125, %131 : vector<4x16xf32>
      %133 = vector.extract_strided_slice %130 {offsets = [4, 1], sizes = [4, 16], strides = [1, 1]} : vector<12x18xf32> to vector<4x16xf32>
      %134 = arith.addf %132, %133 : vector<4x16xf32>
      %135 = vector.extract_strided_slice %130 {offsets = [8, 2], sizes = [4, 16], strides = [1, 1]} : vector<12x18xf32> to vector<4x16xf32>
      %136 = arith.addf %134, %135 : vector<4x16xf32>
      %c2_i32_107 = arith.constant 2 : i32
      %137 = arith.addi %arg17, %c2_i32_107 : i32
      %138 = arith.index_cast %137 : i32 to index
      %c0_108 = arith.constant 0 : index
      %c0_109 = arith.constant 0 : index
      %139 = vector.load %arg16[%138, %c0_108, %c0_109] : memref<18x4x18xf32, #tpu.memory_space<vmem>>, vector<1x4x18xf32>
      %140 = vector.shape_cast %139 : vector<1x4x18xf32> to vector<4x18xf32>
      %cst_110 = arith.constant dense<0.000000e+00> : vector<12x18xf32>
      %141 = tpu.matmul %44, %140, %cst_110 {dimension_numbers = #tpu.dot_dimension_numbers<[1], [0], [0], [1], [0, 0, 1, 1], [], []>, precision = #tpu.contract_precision<fp32>} : vector<12x4xf32>, vector<4x18xf32>, vector<12x18xf32> -> vector<12x18xf32>
      %142 = vector.extract_strided_slice %141 {offsets = [0, 0], sizes = [4, 16], strides = [1, 1]} : vector<12x18xf32> to vector<4x16xf32>
      %143 = arith.addf %136, %142 : vector<4x16xf32>
      %144 = vector.extract_strided_slice %141 {offsets = [4, 1], sizes = [4, 16], strides = [1, 1]} : vector<12x18xf32> to vector<4x16xf32>
      %145 = arith.addf %143, %144 : vector<4x16xf32>
      %146 = vector.extract_strided_slice %141 {offsets = [8, 2], sizes = [4, 16], strides = [1, 1]} : vector<12x18xf32> to vector<4x16xf32>
      %147 = arith.addf %145, %146 : vector<4x16xf32>
      %148 = vector.broadcast %45 : vector<4x1xf32> to vector<4x16xf32>
      %149 = arith.mulf %147, %148 : vector<4x16xf32>
      %150 = vector.broadcast %46 : vector<4x1xf32> to vector<4x16xf32>
      %151 = arith.addf %149, %150 : vector<4x16xf32>
      %cst_111 = arith.constant 0.000000e+00 : f32
      %152 = vector.broadcast %cst_111 : f32 to vector<4x16xf32>
      %153 = arith.maximumf %151, %152 : vector<4x16xf32>
      %c0_112 = arith.constant 0 : index
      %154 = arith.index_cast %arg17 : i32 to index
      %c0_113 = arith.constant 0 : index
      %c0_114 = arith.constant 0 : index
      %155 = vector.load %arg13[%c0_112, %154, %c0_113, %c0_114] : memref<1x16x4x16xf32, #tpu.memory_space<vmem>>, vector<1x1x4x16xf32>
      %156 = vector.shape_cast %155 : vector<1x1x4x16xf32> to vector<4x16xf32>
      %157 = vector.shape_cast %153 : vector<4x16xf32> to vector<1x1x4x16xf32>
      tpu.vector_store %arg13[%c0_112, %154, %c0_113, %c0_114], %157 {strides = array<i32>} : memref<1x16x4x16xf32, #tpu.memory_space<vmem>>, vector<1x1x4x16xf32>,
    }
    %c16_i32_74 = arith.constant 16 : i32
    return
  }
  func.func @transform_0(%arg0: i32, %arg1: memref<3x16xi32, #tpu.memory_space<smem>>, %arg2: memref<3x16xi32, #tpu.memory_space<smem>>, %arg3: memref<3x16xf32, #tpu.memory_space<smem>>) -> (i32, i32, i32, i32) {
    %c0_i32 = arith.constant 0 : i32
    %c0_i32_0 = arith.constant 0 : i32
    %c0_i32_1 = arith.constant 0 : i32
    %c0_i32_2 = arith.constant 0 : i32
    return %arg0, %c0_i32, %c0_i32_0, %c0_i32_1 : i32, i32, i32, i32
  }
  func.func @transform_1(%arg0: i32, %arg1: memref<3x16xi32, #tpu.memory_space<smem>>, %arg2: memref<3x16xi32, #tpu.memory_space<smem>>, %arg3: memref<3x16xf32, #tpu.memory_space<smem>>) -> (i32, i32, i32, i32) {
    %c0_i32 = arith.constant 0 : i32
    %c0_i32_0 = arith.constant 0 : i32
    %c0_i32_1 = arith.constant 0 : i32
    %c0_i32_2 = arith.constant 0 : i32
    return %arg0, %c0_i32, %c0_i32_0, %c0_i32_1 : i32, i32, i32, i32
  }
  func.func @transform_2(%arg0: i32, %arg1: memref<3x16xi32, #tpu.memory_space<smem>>, %arg2: memref<3x16xi32, #tpu.memory_space<smem>>, %arg3: memref<3x16xf32, #tpu.memory_space<smem>>) -> (i32, i32, i32, i32) {
    %c0_i32 = arith.constant 0 : i32
    %c0_i32_0 = arith.constant 0 : i32
    %c0_i32_1 = arith.constant 0 : i32
    %c0_i32_2 = arith.constant 0 : i32
    return %arg0, %c0_i32, %c0_i32_0, %c0_i32_1 : i32, i32, i32, i32
  }
  func.func @transform_3(%arg0: i32, %arg1: memref<3x16xi32, #tpu.memory_space<smem>>, %arg2: memref<3x16xi32, #tpu.memory_space<smem>>, %arg3: memref<3x16xf32, #tpu.memory_space<smem>>) -> (i32, i32) {
    %c0_i32 = arith.constant 0 : i32
    %c0_i32_0 = arith.constant 0 : i32
    %c0_i32_1 = arith.constant 0 : i32
    return %c0_i32, %c0_i32_0 : i32, i32
  }
  func.func @transform_4(%arg0: i32, %arg1: memref<3x16xi32, #tpu.memory_space<smem>>, %arg2: memref<3x16xi32, #tpu.memory_space<smem>>, %arg3: memref<3x16xf32, #tpu.memory_space<smem>>) -> (i32, i32) {
    %c0_i32 = arith.constant 0 : i32
    %c0_i32_0 = arith.constant 0 : i32
    %c0_i32_1 = arith.constant 0 : i32
    return %c0_i32, %c0_i32_0 : i32, i32
  }
  func.func @transform_5(%arg0: i32, %arg1: memref<3x16xi32, #tpu.memory_space<smem>>, %arg2: memref<3x16xi32, #tpu.memory_space<smem>>, %arg3: memref<3x16xf32, #tpu.memory_space<smem>>) -> (i32, i32) {
    %c0_i32 = arith.constant 0 : i32
    %c0_i32_0 = arith.constant 0 : i32
    %c0_i32_1 = arith.constant 0 : i32
    return %c0_i32, %c0_i32_0 : i32, i32
  }
  func.func @transform_6(%arg0: i32, %arg1: memref<3x16xi32, #tpu.memory_space<smem>>, %arg2: memref<3x16xi32, #tpu.memory_space<smem>>, %arg3: memref<3x16xf32, #tpu.memory_space<smem>>) -> (i32, i32, i32, i32) {
    %c0_i32 = arith.constant 0 : i32
    %c0_i32_0 = arith.constant 0 : i32
    %c0_i32_1 = arith.constant 0 : i32
    %c0_i32_2 = arith.constant 0 : i32
    %c0_i32_3 = arith.constant 0 : i32
    return %c0_i32, %c0_i32_0, %c0_i32_1, %c0_i32_2 : i32, i32, i32, i32
  }
  func.func @transform_7(%arg0: i32, %arg1: memref<3x16xi32, #tpu.memory_space<smem>>, %arg2: memref<3x16xi32, #tpu.memory_space<smem>>, %arg3: memref<3x16xf32, #tpu.memory_space<smem>>) -> (i32, i32) {
    %c0_i32 = arith.constant 0 : i32
    %c0_i32_0 = arith.constant 0 : i32
    %c0_i32_1 = arith.constant 0 : i32
    return %c0_i32, %c0_i32_0 : i32, i32
  }
  func.func @transform_8(%arg0: i32, %arg1: memref<3x16xi32, #tpu.memory_space<smem>>, %arg2: memref<3x16xi32, #tpu.memory_space<smem>>, %arg3: memref<3x16xf32, #tpu.memory_space<smem>>) -> (i32, i32) {
    %c0_i32 = arith.constant 0 : i32
    %c0_i32_0 = arith.constant 0 : i32
    %c0_i32_1 = arith.constant 0 : i32
    return %c0_i32, %c0_i32_0 : i32, i32
  }
  func.func @transform_9(%arg0: i32, %arg1: memref<3x16xi32, #tpu.memory_space<smem>>, %arg2: memref<3x16xi32, #tpu.memory_space<smem>>, %arg3: memref<3x16xf32, #tpu.memory_space<smem>>) -> (i32, i32, i32, i32) {
    %c0_i32 = arith.constant 0 : i32
    %c0_i32_0 = arith.constant 0 : i32
    %c0_i32_1 = arith.constant 0 : i32
    %c0_i32_2 = arith.constant 0 : i32
    return %arg0, %c0_i32, %c0_i32_0, %c0_i32_1 : i32, i32, i32, i32
  }
}

</mosaic_0001>

<llo_original>
// kernel: tpu_custom_call.1
$region0: #{tpu_custom_call.1}
  #allocation0 [shape = 'u32[]', space=smem, size = 0x4, offset = 0x4, fixed_abs, tag = 'smem constant byte address 0x4 - core index']
  #allocation1 [shape = 'u32[72,128]{1,0:T(1,128)}', space=vmem, size = 0x9000, scoped, tag = 'internal scratch']
  #allocation2 [shape = 'f32[18,4,18]{2,1,0:T(4,128)}', space=vmem, size = 0x9000, scoped, tag = 'scratch operand']
  #allocation3 [shape = 'f32[18,4,18]{2,1,0:T(4,128)}', space=vmem, size = 0x9000, scoped, tag = 'scratch operand']
  #allocation4 [shape = 'f32[18,4,18]{2,1,0:T(4,128)}', space=vmem, size = 0x9000, scoped, tag = 'scratch operand']
  #allocation5 [shape = 's32[1]{0}', space=sflag, size = 0x4, scoped, tag = 'scoped memory for tpu_custom_call.1']
  #allocation6 [shape = 'u8[2048]{0}', space=smem, size = 0x800, scoped, tag = 'prefetched SMEM operand 0']
  #allocation7 [shape = 'u8[2048]{0}', space=smem, size = 0x800, scoped, tag = 'prefetched SMEM operand 1']
  #allocation8 [shape = 'u8[2048]{0}', space=smem, size = 0x800, scoped, tag = 'prefetched SMEM operand 2']
  %s0 = inlined_call_operand.vmem [shape: s32[3,16], index: 0, kind: input, shape index: {}]
  %s1 = inlined_call_operand.hbm [shape: s32[3,16], index: 1, kind: input, shape index: {}]
  %s2 = inlined_call_operand.hbm [shape: f32[3,16], index: 2, kind: input, shape index: {}]
  %s3 = inlined_call_operand.vmem [shape: f32[2,16,4,16], index: 3, kind: input, shape index: {}]
  %s4 = inlined_call_operand.hbm [shape: f32[2,8,4,8], index: 4, kind: input, shape index: {}]
  %s5 = inlined_call_operand.vmem [shape: f32[2,4,4,4], index: 5, kind: input, shape index: {}]
  %s6 = inlined_call_operand.vmem [shape: f32[16,18], index: 6, kind: input, shape index: {}]
  %s7 = inlined_call_operand.vmem [shape: f32[8,18], index: 7, kind: input, shape index: {}]
  %s8 = inlined_call_operand.vmem [shape: f32[4,18], index: 8, kind: input, shape index: {}]
  %s9 = inlined_call_operand.vmem [shape: f32[3,3,12,4], index: 9, kind: input, shape index: {}]
  %s10 = inlined_call_operand.vmem [shape: f32[4,1], index: 10, kind: input, shape index: {}]
  %s11 = inlined_call_operand.vmem [shape: f32[4,1], index: 11, kind: input, shape index: {}]
  %s12 = inlined_call_operand.hbm [shape: f32[2,16,4,16], index: 12, kind: output, shape index: {}]
  %s13 = sld [smem:[#allocation0]]
  $region101: #{tpu_custom_call.1} parent=0
    _
  %s15 = ssub.s32 1, %s13
  %s16 = scalar_select 0, %s15, %s13
  %s18 = sshll.u32 %s0, 4
  %s19 = int_to_ptr.vmem [resolvable:$true] %s18
  %21 = dma.vmem_to_smem %s19, 64, [#allocation6], [#allocation5]
  %s23 = sshll.u32 %s1, 4
  %s24 = int_to_ptr.hbm [resolvable:$true] %s23
  %26 = dma.hbm_to_smem %s24, 64, [#allocation7], [#allocation5]
  %s28 = sshll.u32 %s2, 4
  %s29 = int_to_ptr.hbm [resolvable:$true] %s28
  %31 = dma.hbm_to_smem %s29, 64, [#allocation8], [#allocation5]
  %33 = dma.done [#allocation5], 192
  %34 = sfence
  $region1: #{tpu_custom_call.1} parent=0
    #allocation9 [shape = 'u8[32768]{0}', space=vmem, size = 0x8000, scoped, tag = 'input window, operand 4']
    #allocation10 [shape = 's32[2]{0}', space=sflag, size = 0x8, scoped, tag = 'scoped memory for tpu_custom_call.1']
    #allocation11 [shape = 's32[2]{0}', space=sflag, size = 0x8, scoped, tag = 'scoped memory for tpu_custom_call.1']
    #allocation12 [shape = 'u8[65536]{0}', space=vmem, size = 0x10000, scoped, tag = 'output window, operand 0']
    %35 = vsyncpa [#allocation10], 0
    %s36 = scalar_lea.sflag [#allocation10], 1
    %37 = vsyncpa %s36, 0
    %38 = vsyncpa [#allocation11], 0
    %s39 = scalar_lea.sflag [#allocation11], 1
    %40 = vsyncpa %s39, 0
    loop: start=0, step=1, limit=4
    $region2: #{tpu_custom_call.1} parent=1 // loop_pre_header
      _
    $region3: #{tpu_custom_call.1} parent=1 // loop_header
      %s42 = sphi 0, %s46
      %p43 = scmp.ge.s32.totalorder %s42, 4
      %s52 = sphi 0, %s54
      %s55 = sphi 0, %s52
      %s56 = sphi 0, %s55
      %s72 = sphi 0, %s56
      %s78 = sphi 0, %s80
      %s81 = sphi 0, %s78
      %s82 = sphi 0, %s81
      %s98 = sphi 0, %s82
      %s104 = sphi 0, %s106
      %s107 = sphi 0, %s104
      %s108 = sphi 0, %s107
      %s124 = sphi 0, %s108
      %s128 = sphi 0, %s128
      %s130 = sphi 0, %s128
      %s131 = sphi 0, %s130
      %s145 = sphi 0, %s131
      %s149 = sphi 0, %s149
      %s151 = sphi 0, %s149
      %s152 = sphi 0, %s151
      %s166 = sphi 0, %s152
      %s170 = sphi 0, %s170
      %s172 = sphi 0, %s170
      %s173 = sphi 0, %s172
      %s187 = sphi 0, %s173
      %s191 = sphi 0, %s191
      %s193 = sphi 0, %s191
      %s194 = sphi 0, %s193
      %s208 = sphi 0, %s194
      %s212 = sphi 0, %s212
      %s214 = sphi 0, %s212
      %s215 = sphi 0, %s214
      %s229 = sphi 0, %s215
      %s233 = sphi 0, %s233
      %s235 = sphi 0, %s233
      %s236 = sphi 0, %s235
      %s250 = sphi 0, %s236
      %s256 = sphi 0, %s258
      %s259 = sphi 0, %s256
      %s260 = sphi 0, %s259
      %s276 = sphi 0, %s260
    $region4: #{tpu_custom_call.1} parent=1 // loop_header_branch
      %45 = sbr.rel (%p43) target = $region8
    $region5: #{tpu_custom_call.1} parent=1 // loop_body
      %s47 = ssub.s32 %s42, 1
      %s48 = ssub.s32 %s42, 2
      %s49 = sadd.s32 %s42, 1
      %s50 = ssub.s32 %s42, %s49
      %p51 = scmp.eq.s32.totalorder %s50, 0
      %s53 = sadd.s32 %s52, 1
      %s54 = scalar_select %p51, %s52, %s53
      %p57 = pneg %p51
      %p58 = scmp.eq.s32.totalorder %s42, 1
      %p59 = por %p57, %p58
      %p60 = scmp.ne.s32.totalorder %s52, %s55
      %p61 = scmp.eq.s32.totalorder %s42, 0
      %p62 = por %p60, %p61
      %p63 = scmp.ne.s32.totalorder %s52, %s55
      %p64 = scmp.eq.s32.totalorder %s47, 1
      %p65 = por %p63, %p64
      %p66 = scmp.ne.s32.totalorder %s55, %s56
      %p67 = scmp.eq.s32.totalorder %s47, 0
      %p68 = por %p66, %p67
      %p69 = scmp.ne.s32.totalorder %s55, %s56
      %p70 = scmp.eq.s32.totalorder %s48, 1
      %p71 = por %p69, %p70
      %p73 = scmp.ne.s32.totalorder %s56, %s72
      %p74 = scmp.eq.s32.totalorder %s48, 0
      %p75 = por %p73, %p74
      %s76 = ssub.s32 %s42, %s49
      %p77 = scmp.eq.s32.totalorder %s76, 0
      %s79 = sadd.s32 %s78, 1
      %s80 = scalar_select %p77, %s78, %s79
      %p83 = pneg %p77
      %p84 = scmp.eq.s32.totalorder %s42, 1
      %p85 = por %p83, %p84
      %p86 = scmp.ne.s32.totalorder %s78, %s81
      %p87 = scmp.eq.s32.totalorder %s42, 0
      %p88 = por %p86, %p87
      %p89 = scmp.ne.s32.totalorder %s78, %s81
      %p90 = scmp.eq.s32.totalorder %s47, 1
      %p91 = por %p89, %p90
      %p92 = scmp.ne.s32.totalorder %s81, %s82
      %p93 = scmp.eq.s32.totalorder %s47, 0
      %p94 = por %p92, %p93
      %p95 = scmp.ne.s32.totalorder %s81, %s82
      %p96 = scmp.eq.s32.totalorder %s48, 1
      %p97 = por %p95, %p96
      %p99 = scmp.ne.s32.totalorder %s82, %s98
      %p100 = scmp.eq.s32.totalorder %s48, 0
      %p101 = por %p99, %p100
      %s102 = ssub.s32 %s42, %s49
      %p103 = scmp.eq.s32.totalorder %s102, 0
      %s105 = sadd.s32 %s104, 1
      %s106 = scalar_select %p103, %s104, %s105
      %p109 = pneg %p103
      %p110 = scmp.eq.s32.totalorder %s42, 1
      %p111 = por %p109, %p110
      %p112 = scmp.ne.s32.totalorder %s104, %s107
      %p113 = scmp.eq.s32.totalorder %s42, 0
      %p114 = por %p112, %p113
      %p115 = scmp.ne.s32.totalorder %s104, %s107
      %p116 = scmp.eq.s32.totalorder %s47, 1
      %p117 = por %p115, %p116
      %p118 = scmp.ne.s32.totalorder %s107, %s108
      %p119 = scmp.eq.s32.totalorder %s47, 0
      %p120 = por %p118, %p119
      %p121 = scmp.ne.s32.totalorder %s107, %s108
      %p122 = scmp.eq.s32.totalorder %s48, 1
      %p123 = por %p121, %p122
      %p125 = scmp.ne.s32.totalorder %s108, %s124
      %p126 = scmp.eq.s32.totalorder %s48, 0
      %p127 = por %p125, %p126
      %s129 = sadd.s32 %s128, 1
      %p132 = scmp.eq.s32.totalorder %s42, 1
      %p133 = scmp.ne.s32.totalorder %s128, %s130
      %p134 = scmp.eq.s32.totalorder %s42, 0
      %p135 = por %p133, %p134
      %p136 = scmp.ne.s32.totalorder %s128, %s130
      %p137 = scmp.eq.s32.totalorder %s47, 1
      %p138 = por %p136, %p137
      %p139 = scmp.ne.s32.totalorder %s130, %s131
      %p140 = scmp.eq.s32.totalorder %s47, 0
      %p141 = por %p139, %p140
      %p142 = scmp.ne.s32.totalorder %s130, %s131
      %p143 = scmp.eq.s32.totalorder %s48, 1
      %p144 = por %p142, %p143
      %p146 = scmp.ne.s32.totalorder %s131, %s145
      %p147 = scmp.eq.s32.totalorder %s48, 0
      %p148 = por %p146, %p147
      %s150 = sadd.s32 %s149, 1
      %p153 = scmp.eq.s32.totalorder %s42, 1
      %p154 = scmp.ne.s32.totalorder %s149, %s151
      %p155 = scmp.eq.s32.totalorder %s42, 0
      %p156 = por %p154, %p155
      %p157 = scmp.ne.s32.totalorder %s149, %s151
      %p158 = scmp.eq.s32.totalorder %s47, 1
      %p159 = por %p157, %p158
      %p160 = scmp.ne.s32.totalorder %s151, %s152
      %p161 = scmp.eq.s32.totalorder %s47, 0
      %p162 = por %p160, %p161
      %p163 = scmp.ne.s32.totalorder %s151, %s152
      %p164 = scmp.eq.s32.totalorder %s48, 1
      %p165 = por %p163, %p164
      %p167 = scmp.ne.s32.totalorder %s152, %s166
      %p168 = scmp.eq.s32.totalorder %s48, 0
      %p169 = por %p167, %p168
      %s171 = sadd.s32 %s170, 1
      %p174 = scmp.eq.s32.totalorder %s42, 1
      %p175 = scmp.ne.s32.totalorder %s170, %s172
      %p176 = scmp.eq.s32.totalorder %s42, 0
      %p177 = por %p175, %p176
      %p178 = scmp.ne.s32.totalorder %s170, %s172
      %p179 = scmp.eq.s32.totalorder %s47, 1
      %p180 = por %p178, %p179
      %p181 = scmp.ne.s32.totalorder %s172, %s173
      %p182 = scmp.eq.s32.totalorder %s47, 0
      %p183 = por %p181, %p182
      %p184 = scmp.ne.s32.totalorder %s172, %s173
      %p185 = scmp.eq.s32.totalorder %s48, 1
      %p186 = por %p184, %p185
      %p188 = scmp.ne.s32.totalorder %s173, %s187
      %p189 = scmp.eq.s32.totalorder %s48, 0
      %p190 = por %p188, %p189
      %s192 = sadd.s32 %s191, 1
      %p195 = scmp.eq.s32.totalorder %s42, 1
      %p196 = scmp.ne.s32.totalorder %s191, %s193
      %p197 = scmp.eq.s32.totalorder %s42, 0
      %p198 = por %p196, %p197
      %p199 = scmp.ne.s32.totalorder %s191, %s193
      %p200 = scmp.eq.s32.totalorder %s47, 1
      %p201 = por %p199, %p200
      %p202 = scmp.ne.s32.totalorder %s193, %s194
      %p203 = scmp.eq.s32.totalorder %s47, 0
      %p204 = por %p202, %p203
      %p205 = scmp.ne.s32.totalorder %s193, %s194
      %p206 = scmp.eq.s32.totalorder %s48, 1
      %p207 = por %p205, %p206
      %p209 = scmp.ne.s32.totalorder %s194, %s208
      %p210 = scmp.eq.s32.totalorder %s48, 0
      %p211 = por %p209, %p210
      %s213 = sadd.s32 %s212, 1
      %p216 = scmp.eq.s32.totalorder %s42, 1
      %p217 = scmp.ne.s32.totalorder %s212, %s214
      %p218 = scmp.eq.s32.totalorder %s42, 0
      %p219 = por %p217, %p218
      %p220 = scmp.ne.s32.totalorder %s212, %s214
      %p221 = scmp.eq.s32.totalorder %s47, 1
      %p222 = por %p220, %p221
      %p223 = scmp.ne.s32.totalorder %s214, %s215
      %p224 = scmp.eq.s32.totalorder %s47, 0
      %p225 = por %p223, %p224
      %p226 = scmp.ne.s32.totalorder %s214, %s215
      %p227 = scmp.eq.s32.totalorder %s48, 1
      %p228 = por %p226, %p227
      %p230 = scmp.ne.s32.totalorder %s215, %s229
      %p231 = scmp.eq.s32.totalorder %s48, 0
      %p232 = por %p230, %p231
      %s234 = sadd.s32 %s233, 1
      %p237 = scmp.eq.s32.totalorder %s42, 1
      %p238 = scmp.ne.s32.totalorder %s233, %s235
      %p239 = scmp.eq.s32.totalorder %s42, 0
      %p240 = por %p238, %p239
      %p241 = scmp.ne.s32.totalorder %s233, %s235
      %p242 = scmp.eq.s32.totalorder %s47, 1
      %p243 = por %p241, %p242
      %p244 = scmp.ne.s32.totalorder %s235, %s236
      %p245 = scmp.eq.s32.totalorder %s47, 0
      %p246 = por %p244, %p245
      %p247 = scmp.ne.s32.totalorder %s235, %s236
      %p248 = scmp.eq.s32.totalorder %s48, 1
      %p249 = por %p247, %p248
      %p251 = scmp.ne.s32.totalorder %s236, %s250
      %p252 = scmp.eq.s32.totalorder %s48, 0
      %p253 = por %p251, %p252
      %s254 = ssub.s32 %s42, %s49
      %p255 = scmp.eq.s32.totalorder %s254, 0
      %s257 = sadd.s32 %s256, 1
      %s258 = scalar_select %p255, %s256, %s257
      %p261 = pneg %p255
      %p262 = scmp.eq.s32.totalorder %s42, 1
      %p263 = por %p261, %p262
      %p264 = scmp.ne.s32.totalorder %s256, %s259
      %p265 = scmp.eq.s32.totalorder %s42, 0
      %p266 = por %p264, %p265
      %p267 = scmp.ne.s32.totalorder %s256, %s259
      %p268 = scmp.eq.s32.totalorder %s47, 1
      %p269 = por %p267, %p268
      %p270 = scmp.ne.s32.totalorder %s259, %s260
      %p271 = scmp.eq.s32.totalorder %s47, 0
      %p272 = por %p270, %p271
      %p273 = scmp.ne.s32.totalorder %s259, %s260
      %p274 = scmp.eq.s32.totalorder %s48, 1
      %p275 = por %p273, %p274
      %p277 = scmp.ne.s32.totalorder %s260, %s276
      %p278 = scmp.eq.s32.totalorder %s48, 0
      %p279 = por %p277, %p278
      %p280 = scmp.le.s32.totalorder 1, %s42
      %p281 = scmp.lt.s32.totalorder %s42, 3
      %p282 = pnand %p280, %p281
      %p283 = pneg %p282
      // Predicated region
      $region9: #{tpu_custom_call.1} parent=5 // pred_check
        _
      $region10: #{tpu_custom_call.1} parent=5 // pred_check_branch
        %285 = sbr.rel (%p282) target = $region12
      $region11: #{tpu_custom_call.1} parent=5 // pred_region
        %s286 = ssub.s32 %s42, 1
        // Predicated region
        $region13: #{tpu_custom_call.1} parent=11 // pred_check
          %p287 = pneg %p141
        $region14: #{tpu_custom_call.1} parent=11 // pred_check_branch
          %289 = sbr.rel (%p287) target = $region16
        $region15: #{tpu_custom_call.1} parent=11 // pred_region
          _
        $region16: #{tpu_custom_call.1} parent=11 // pred_fallthru
          _
        // Predicated region
        $region17: #{tpu_custom_call.1} parent=11 // pred_check
          %p290 = pneg %p162
        $region18: #{tpu_custom_call.1} parent=11 // pred_check_branch
          %292 = sbr.rel (%p290) target = $region20
        $region19: #{tpu_custom_call.1} parent=11 // pred_region
          _
        $region20: #{tpu_custom_call.1} parent=11 // pred_fallthru
          _
        // Predicated region
        $region21: #{tpu_custom_call.1} parent=11 // pred_check
          %p293 = pneg %p183
        $region22: #{tpu_custom_call.1} parent=11 // pred_check_branch
          %295 = sbr.rel (%p293) target = $region24
        $region23: #{tpu_custom_call.1} parent=11 // pred_region
          _
        $region24: #{tpu_custom_call.1} parent=11 // pred_fallthru
          _
        // Predicated region
        $region25: #{tpu_custom_call.1} parent=11 // pred_check
          %p296 = pneg %p204
        $region26: #{tpu_custom_call.1} parent=11 // pred_check_branch
          %298 = sbr.rel (%p296) target = $region28
        $region27: #{tpu_custom_call.1} parent=11 // pred_region
          _
        $region28: #{tpu_custom_call.1} parent=11 // pred_fallthru
          _
        // Predicated region
        $region29: #{tpu_custom_call.1} parent=11 // pred_check
          %p299 = pneg %p225
        $region30: #{tpu_custom_call.1} parent=11 // pred_check_branch
          %301 = sbr.rel (%p299) target = $region32
        $region31: #{tpu_custom_call.1} parent=11 // pred_region
          _
        $region32: #{tpu_custom_call.1} parent=11 // pred_fallthru
          _
        // Predicated region
        $region33: #{tpu_custom_call.1} parent=11 // pred_check
          %p302 = pneg %p246
        $region34: #{tpu_custom_call.1} parent=11 // pred_check_branch
          %304 = sbr.rel (%p302) target = $region36
        $region35: #{tpu_custom_call.1} parent=11 // pred_region
          _
        $region36: #{tpu_custom_call.1} parent=11 // pred_fallthru
          _
      $region12: #{tpu_custom_call.1} parent=5 // pred_fallthru
        _
      %p305 = scmp.lt.s32.totalorder %s42, 2
      // Predicated region
      $region37: #{tpu_custom_call.1} parent=5 // pred_check
        %p306 = pneg %p305
      $region38: #{tpu_custom_call.1} parent=5 // pred_check_branch
        %308 = sbr.rel (%p306) target = $region40
      $region39: #{tpu_custom_call.1} parent=5 // pred_region
        // Predicated region
        $region41: #{tpu_custom_call.1} parent=39 // pred_check
          %p309 = pneg %p62
        $region42: #{tpu_custom_call.1} parent=39 // pred_check_branch
          %311 = sbr.rel (%p309) target = $region44
        $region43: #{tpu_custom_call.1} parent=39 // pred_region
          %p312 = scmp.lt.s32.totalorder %s42, 1
          %s313 = scalar_select %p312, %s42, 1
          %s314 = smul.addr %s313, 16
          %s315 = smul.addr %s314, 4
          %s316 = scalar_lea.vmem %s3, %s315
        $region44: #{tpu_custom_call.1} parent=39 // pred_fallthru
          _
        // Predicated region
        $region45: #{tpu_custom_call.1} parent=39 // pred_check
          %p317 = pneg %p88
        $region46: #{tpu_custom_call.1} parent=39 // pred_check_branch
          %319 = sbr.rel (%p317) target = $region48
        $region47: #{tpu_custom_call.1} parent=39 // pred_region
          %s320 = sand.u32 %s78, 1
          %s321 = scalar_lea.sflag [#allocation10], %s320
          %s322 = sand.u32 %s78, 1
          %s323 = smul.addr %s322, 32
          %s324 = scalar_lea.vmem [#allocation9], %s323
          %326 = vsyncadd %s321, 0
          %s327 = smul.addr %s42, 8
          %s328 = smul.addr %s327, 4
          %s329 = scalar_lea.hbm %s4, %s328
          %s330 = sshll.u32 %s329, 4
          %s331 = int_to_ptr.hbm [resolvable:$true] %s330
          %s332 = sshll.u32 %s324, 4
          %s333 = int_to_ptr.vmem [resolvable:$true] %s332
          %338 = dma.hbm_to_vmem [thread:$0]  %s331, 512, %s333, %s321, 64, 64, 4
        $region48: #{tpu_custom_call.1} parent=39 // pred_fallthru
          _
        // Predicated region
        $region49: #{tpu_custom_call.1} parent=39 // pred_check
          %p339 = pneg %p114
        $region50: #{tpu_custom_call.1} parent=39 // pred_check_branch
          %341 = sbr.rel (%p339) target = $region52
        $region51: #{tpu_custom_call.1} parent=39 // pred_region
          %p342 = scmp.lt.s32.totalorder %s42, 1
          %s343 = scalar_select %p342, %s42, 1
          %s344 = smul.addr %s343, 4
          %s345 = smul.addr %s344, 4
          %s346 = scalar_lea.vmem %s5, %s345
        $region52: #{tpu_custom_call.1} parent=39 // pred_fallthru
          _
      $region40: #{tpu_custom_call.1} parent=5 // pred_fallthru
        _
      %p347 = scmp.le.s32.totalorder 1, %s42
      %p348 = scmp.lt.s32.totalorder %s42, 3
      %p349 = pnand %p347, %p348
      %p350 = pneg %p349
      // Predicated region
      $region53: #{tpu_custom_call.1} parent=5 // pred_check
        _
      $region54: #{tpu_custom_call.1} parent=5 // pred_check_branch
        %352 = sbr.rel (%p349) target = $region56
      $region55: #{tpu_custom_call.1} parent=5 // pred_region
        %s353 = ssub.s32 %s42, 1
        %s354 = sand.u32 %s81, 1
        %s355 = scalar_lea.sflag [#allocation10], %s354
        %s356 = sand.u32 %s81, 1
        %s357 = smul.addr %s356, 32
        %s358 = scalar_lea.vmem [#allocation9], %s357
        // Predicated region
        $region57: #{tpu_custom_call.1} parent=55 // pred_check
          %p359 = pneg %p94
        $region58: #{tpu_custom_call.1} parent=55 // pred_check_branch
          %361 = sbr.rel (%p359) target = $region60
        $region59: #{tpu_custom_call.1} parent=55 // pred_region
          %363 = dma.done %s355, 512
        $region60: #{tpu_custom_call.1} parent=55 // pred_fallthru
          _
        %p364 = scmp.lt.s32.totalorder %s47, 1
        %s365 = scalar_select %p364, %s47, 1
        %s366 = smul.addr %s365, 16
        %s367 = smul.addr %s366, 4
        %s368 = scalar_lea.vmem %s3, %s367
        %p369 = pneg %p68
        %p370 = pneg %p65
        %s371 = sand.u32 %s81, 1
        %s372 = scalar_lea.sflag [#allocation10], %s371
        %s373 = sand.u32 %s81, 1
        %s374 = smul.addr %s373, 32
        %s375 = scalar_lea.vmem [#allocation9], %s374
        %p376 = pneg %p94
        %p377 = pneg %p91
        %p378 = scmp.lt.s32.totalorder %s47, 1
        %s379 = scalar_select %p378, %s47, 1
        %s380 = smul.addr %s379, 4
        %s381 = smul.addr %s380, 4
        %s382 = scalar_lea.vmem %s5, %s381
        %p383 = pneg %p120
        %p384 = pneg %p117
        %p385 = pneg %p141
        %p386 = pneg %p138
        %p387 = pneg %p162
        %p388 = pneg %p159
        %p389 = pneg %p183
        %p390 = pneg %p180
        %p391 = pneg %p204
        %p392 = pneg %p201
        %p393 = pneg %p225
        %p394 = pneg %p222
        %p395 = pneg %p246
        %p396 = pneg %p243
        %p397 = pneg %p272
        %p398 = pneg %p269
        %s399 = sand.u32 %s259, 1
        %s400 = scalar_lea.sflag [#allocation11], %s399
        %s401 = sand.u32 %s259, 1
        %s402 = smul.addr %s401, 64
        %s403 = scalar_lea.vmem [#allocation12], %s402
        %p404 = scmp.lt.s32.totalorder %s47, 1
        %s405 = scalar_select %p404, %s47, 1
        %s406 = smul.addr %s405, 16
        %s407 = smul.addr %s406, 4
        %s408 = scalar_lea.vmem %s3, %s407
        %p409 = scmp.lt.s32.totalorder %s47, 1
        %s410 = scalar_select %p409, %s47, 1
        %s411 = smul.addr %s410, 4
        %s412 = smul.addr %s411, 4
        %s413 = scalar_lea.vmem %s5, %s412
        %v414 = vld [vmem:[%s6] sm:$0xff]
        %v415 = vld [vmem:[%s6 + $0x8] sm:$0xff]
        %vm416 = vcmask 142336
        %417 = vst.msk [vmem:[#allocation2] sm:$0xf] %vm416, 0.0
        %s418 = scalar_lea.vmem [#allocation2], 68
        %419 = vst.msk [vmem:[%s418] sm:$0xf] %vm416, 0.0
        loop: start=0, step=1, limit=16
        $region61: #{tpu_custom_call.1} parent=55 // loop_pre_header
          _
        $region62: #{tpu_custom_call.1} parent=55 // loop_header
          %s421 = sphi 0, %s425
          %p422 = scmp.ge.s32.totalorder %s421, 16
        $region63: #{tpu_custom_call.1} parent=55 // loop_header_branch
          %424 = sbr.rel (%p422) target = $region67
        $region64: #{tpu_custom_call.1} parent=55 // loop_body
          %s426 = sld [smem:[#allocation6 + %s421]]
          %s427 = smul.u32 %s426, 4
          %s428 = scalar_lea.vmem %s408, %s427
          %v429 = vld [vmem:[%s428] sm:$0xf]
          %s430 = sld [smem:[#allocation7 + %s421]]
          %s431 = smul.u32 %s430, 4
          %s432 = scalar_lea.vmem %s408, %s431
          %v433 = vld [vmem:[%s432] sm:$0xf]
          %s434 = sld [smem:[#allocation8 + %s421]]
          %v435 = vsub.f32 %v433, %v429
          %v436 = vstv %s434
          %v437 = vmul.f32 %v436, %v435
          %v438 = vadd.f32 %v429, %v437
          %vm439 = vcmask 130048
          %v441 = vsel %vm439, %v438, 0
          %443 = vmatpush.msra.mxu0 0.0
          %444 = vmatpush.msra.mxu0 0.0
          %445 = vmatpush.msra.mxu0 0.0
          %446 = vmatpush.msra.mxu0 0.0
          %447 = vmatpush.msra.mxu0 0.0
          %448 = vmatpush.msra.mxu0 0.0
          %449 = vmatpush.msra.mxu0 0.0
          %450 = vmatpush.msra.mxu0 0.0
          %451 = vmatpush.msra.mxu0 0.0
          %452 = vmatpush.msra.mxu0 0.0
          %453 = vmatpush.msra.mxu0 0.0
          %454 = vmatpush.msra.mxu0 0.0
          %455 = vmatpush.msra.mxu0 0.0
          %456 = vmatpush.msra.mxu0 0.0
          %v457 = vand.u32 %v415, 4294901760
          %458 = vmatpush.msra.mxu0 %v457
          %v459 = vand.u32 %v414, 4294901760
          %460 = vmatpush.msra.mxu0 %v459
          %v461 = vand.u32 %v441, 4294901760
          %v462 = vsub.f32 %v441, %v461
          %v463 = vand.u32 %v462, 4294901760
          %v464 = vsub.f32 %v462, %v463
          %v465 = vand.u32 %v464, 4294901760
          %466 = vmatmul.f32.gmra.mxu0 %v465
          %v467 = vpop.f32.mrf.mxu0
          %v468 = vadd.f32 0.0, %v467
          %469 = vdwg.mxu0
          %470 = vmatpush.msra.mxu0 0.0
          %471 = vmatpush.msra.mxu0 0.0
          %472 = vmatpush.msra.mxu0 0.0
          %473 = vmatpush.msra.mxu0 0.0
          %474 = vmatpush.msra.mxu0 0.0
          %475 = vmatpush.msra.mxu0 0.0
          %476 = vmatpush.msra.mxu0 0.0
          %477 = vmatpush.msra.mxu0 0.0
          %478 = vmatpush.msra.mxu0 0.0
          %479 = vmatpush.msra.mxu0 0.0
          %480 = vmatpush.msra.mxu0 0.0
          %481 = vmatpush.msra.mxu0 0.0
          %482 = vmatpush.msra.mxu0 0.0
          %483 = vmatpush.msra.mxu0 0.0
          %v484 = vand.u32 %v415, 4294901760
          %v485 = vsub.f32 %v415, %v484
          %v486 = vand.u32 %v485, 4294901760
          %v487 = vsub.f32 %v485, %v486
          %v488 = vand.u32 %v487, 4294901760
          %489 = vmatpush.msra.mxu0 %v488
          %v490 = vand.u32 %v414, 4294901760
          %v491 = vsub.f32 %v414, %v490
          %v492 = vand.u32 %v491, 4294901760
          %v493 = vsub.f32 %v491, %v492
          %v494 = vand.u32 %v493, 4294901760
          %495 = vmatpush.msra.mxu0 %v494
          %v496 = vand.u32 %v441, 4294901760
          %497 = vmatmul.f32.gmra.mxu0 %v496
          %v498 = vpop.f32.mrf.mxu0
          %v499 = vadd.f32 %v468, %v498
          %500 = vdwg.mxu0
          %501 = vmatpush.msra.mxu0 0.0
          %502 = vmatpush.msra.mxu0 0.0
          %503 = vmatpush.msra.mxu0 0.0
          %504 = vmatpush.msra.mxu0 0.0
          %505 = vmatpush.msra.mxu0 0.0
          %506 = vmatpush.msra.mxu0 0.0
          %507 = vmatpush.msra.mxu0 0.0
          %508 = vmatpush.msra.mxu0 0.0
          %509 = vmatpush.msra.mxu0 0.0
          %510 = vmatpush.msra.mxu0 0.0
          %511 = vmatpush.msra.mxu0 0.0
          %512 = vmatpush.msra.mxu0 0.0
          %513 = vmatpush.msra.mxu0 0.0
          %514 = vmatpush.msra.mxu0 0.0
          %v515 = vand.u32 %v415, 4294901760
          %v516 = vsub.f32 %v415, %v515
          %517 = vmatpush.msra.mxu0 %v516
          %v518 = vand.u32 %v414, 4294901760
          %v519 = vsub.f32 %v414, %v518
          %520 = vmatpush.msra.mxu0 %v519
          %v521 = vand.u32 %v441, 4294901760
          %v522 = vsub.f32 %v441, %v521
          %523 = vmatmul.f32.gmra.mxu0 %v522
          %v524 = vpop.f32.mrf.mxu0
          %v525 = vadd.f32 %v499, %v524
          %526 = vdwg.mxu0
          %527 = vmatpush.msra.mxu0 0.0
          %528 = vmatpush.msra.mxu0 0.0
          %529 = vmatpush.msra.mxu0 0.0
          %530 = vmatpush.msra.mxu0 0.0
          %531 = vmatpush.msra.mxu0 0.0
          %532 = vmatpush.msra.mxu0 0.0
          %533 = vmatpush.msra.mxu0 0.0
          %534 = vmatpush.msra.mxu0 0.0
          %535 = vmatpush.msra.mxu0 0.0
          %536 = vmatpush.msra.mxu0 0.0
          %537 = vmatpush.msra.mxu0 0.0
          %538 = vmatpush.msra.mxu0 0.0
          %539 = vmatpush.msra.mxu0 0.0
          %540 = vmatpush.msra.mxu0 0.0
          %v541 = vand.u32 %v415, 4294901760
          %542 = vmatpush.msra.mxu0 %v541
          %v543 = vand.u32 %v414, 4294901760
          %544 = vmatpush.msra.mxu0 %v543
          %v545 = vand.u32 %v441, 4294901760
          %v546 = vsub.f32 %v441, %v545
          %v547 = vand.u32 %v546, 4294901760
          %548 = vmatmul.f32.gmra.mxu0 %v547
          %v549 = vpop.f32.mrf.mxu0
          %v550 = vadd.f32 %v525, %v549
          %551 = vdwg.mxu0
          %552 = vmatpush.msra.mxu0 0.0
          %553 = vmatpush.msra.mxu0 0.0
          %554 = vmatpush.msra.mxu0 0.0
          %555 = vmatpush.msra.mxu0 0.0
          %556 = vmatpush.msra.mxu0 0.0
          %557 = vmatpush.msra.mxu0 0.0
          %558 = vmatpush.msra.mxu0 0.0
          %559 = vmatpush.msra.mxu0 0.0
          %560 = vmatpush.msra.mxu0 0.0
          %561 = vmatpush.msra.mxu0 0.0
          %562 = vmatpush.msra.mxu0 0.0
          %563 = vmatpush.msra.mxu0 0.0
          %564 = vmatpush.msra.mxu0 0.0
          %565 = vmatpush.msra.mxu0 0.0
          %v566 = vand.u32 %v415, 4294901760
          %v567 = vsub.f32 %v415, %v566
          %v568 = vand.u32 %v567, 4294901760
          %569 = vmatpush.msra.mxu0 %v568
          %v570 = vand.u32 %v414, 4294901760
          %v571 = vsub.f32 %v414, %v570
          %v572 = vand.u32 %v571, 4294901760
          %573 = vmatpush.msra.mxu0 %v572
          %v574 = vand.u32 %v441, 4294901760
          %575 = vmatmul.f32.gmra.mxu0 %v574
          %v576 = vpop.f32.mrf.mxu0
          %v577 = vadd.f32 %v550, %v576
          %578 = vdwg.mxu0
          %579 = vmatpush.msra.mxu0 0.0
          %580 = vmatpush.msra.mxu0 0.0
          %581 = vmatpush.msra.mxu0 0.0
          %582 = vmatpush.msra.mxu0 0.0
          %583 = vmatpush.msra.mxu0 0.0
          %584 = vmatpush.msra.mxu0 0.0
          %585 = vmatpush.msra.mxu0 0.0
          %586 = vmatpush.msra.mxu0 0.0
          %587 = vmatpush.msra.mxu0 0.0
          %588 = vmatpush.msra.mxu0 0.0
          %589 = vmatpush.msra.mxu0 0.0
          %590 = vmatpush.msra.mxu0 0.0
          %591 = vmatpush.msra.mxu0 0.0
          %592 = vmatpush.msra.mxu0 0.0
          %v593 = vand.u32 %v415, 4294901760
          %594 = vmatpush.msra.mxu0 %v593
          %v595 = vand.u32 %v414, 4294901760
          %596 = vmatpush.msra.mxu0 %v595
          %v597 = vand.u32 %v441, 4294901760
          %598 = vmatmul.f32.gmra.mxu0 %v597
          %v599 = vpop.f32.mrf.mxu0
          %v600 = vadd.f32 %v577, %v599
          %601 = vdwg.mxu0
          %s602 = sadd.s32 %s421, 1
          %s603 = smul.u32 %s602, 4
          %s604 = scalar_lea.vmem [#allocation2], %s603
          %605 = vst.msk [vmem:[%s604] sm:$0xf] %vm416, %v600
        $region65: #{tpu_custom_call.1} parent=55 // loop_footer
          %s425 = sadd.s32 1, %s421
        $region66: #{tpu_custom_call.1} parent=55 // loop_footer_branch
          %420 = sbr.rel target = $region62
        $region67: #{tpu_custom_call.1} parent=55 // loop_exit
          _
        %v606 = vld [vmem:[%s7] sm:$0xff]
        %607 = vst.msk [vmem:[#allocation3] sm:$0xf] %vm416, 0.0
        %s608 = scalar_lea.vmem [#allocation3], 68
        %609 = vst.msk [vmem:[%s608] sm:$0xf] %vm416, 0.0
        loop: start=0, step=1, limit=16
        $region68: #{tpu_custom_call.1} parent=55 // loop_pre_header
          _
        $region69: #{tpu_custom_call.1} parent=55 // loop_header
          %s611 = sphi 0, %s615
          %p612 = scmp.ge.s32.totalorder %s611, 16
        $region70: #{tpu_custom_call.1} parent=55 // loop_header_branch
          %614 = sbr.rel (%p612) target = $region74
        $region71: #{tpu_custom_call.1} parent=55 // loop_body
          %s616 = sshra.s32 %s611, 7
          %s617 = sand.u32 %s611, 127
          %s618 = sadd.s32 %s616, 1
          %s619 = smul.u32 %s618, 128
          %s620 = sshra.s32 %s611, 7
          %s621 = sand.u32 %s611, 127
          %s622 = sadd.s32 %s619, %s621
          %s623 = sld [smem:[#allocation6 + %s622]]
          %s624 = smul.u32 %s623, 4
          %s625 = scalar_lea.vmem %s358, %s624 [#allocation9]
          %v626 = vld [vmem:[%s625] sm:$0xf]
          %s627 = sld [smem:[#allocation7 + %s622]]
          %s628 = smul.u32 %s627, 4
          %s629 = scalar_lea.vmem %s358, %s628 [#allocation9]
          %v630 = vld [vmem:[%s629] sm:$0xf]
          %s631 = sld [smem:[#allocation8 + %s622]]
          %v632 = vsub.f32 %v630, %v626
          %v633 = vstv %s631
          %v634 = vmul.f32 %v633, %v632
          %v635 = vadd.f32 %v626, %v634
          %vm636 = vcmask 64512
          %v638 = vsel %vm636, %v635, 0
          %640 = vmatpush.msra.mxu0 0.0
          %641 = vmatpush.msra.mxu0 0.0
          %642 = vmatpush.msra.mxu0 0.0
          %643 = vmatpush.msra.mxu0 0.0
          %644 = vmatpush.msra.mxu0 0.0
          %645 = vmatpush.msra.mxu0 0.0
          %646 = vmatpush.msra.mxu0 0.0
          %647 = vmatpush.msra.mxu0 0.0
          %648 = vmatpush.msra.mxu0 0.0
          %649 = vmatpush.msra.mxu0 0.0
          %650 = vmatpush.msra.mxu0 0.0
          %651 = vmatpush.msra.mxu0 0.0
          %652 = vmatpush.msra.mxu0 0.0
          %653 = vmatpush.msra.mxu0 0.0
          %654 = vmatpush.msra.mxu0 0.0
          %v655 = vand.u32 %v606, 4294901760
          %656 = vmatpush.msra.mxu0 %v655
          %v657 = vand.u32 %v638, 4294901760
          %v658 = vsub.f32 %v638, %v657
          %v659 = vand.u32 %v658, 4294901760
          %v660 = vsub.f32 %v658, %v659
          %v661 = vand.u32 %v660, 4294901760
          %662 = vmatmul.f32.gmra.mxu0 %v661
          %v663 = vpop.f32.mrf.mxu0
          %v664 = vadd.f32 0.0, %v663
          %665 = vdwg.mxu0
          %666 = vmatpush.msra.mxu0 0.0
          %667 = vmatpush.msra.mxu0 0.0
          %668 = vmatpush.msra.mxu0 0.0
          %669 = vmatpush.msra.mxu0 0.0
          %670 = vmatpush.msra.mxu0 0.0
          %671 = vmatpush.msra.mxu0 0.0
          %672 = vmatpush.msra.mxu0 0.0
          %673 = vmatpush.msra.mxu0 0.0
          %674 = vmatpush.msra.mxu0 0.0
          %675 = vmatpush.msra.mxu0 0.0
          %676 = vmatpush.msra.mxu0 0.0
          %677 = vmatpush.msra.mxu0 0.0
          %678 = vmatpush.msra.mxu0 0.0
          %679 = vmatpush.msra.mxu0 0.0
          %680 = vmatpush.msra.mxu0 0.0
          %v681 = vand.u32 %v606, 4294901760
          %v682 = vsub.f32 %v606, %v681
          %v683 = vand.u32 %v682, 4294901760
          %v684 = vsub.f32 %v682, %v683
          %v685 = vand.u32 %v684, 4294901760
          %686 = vmatpush.msra.mxu0 %v685
          %v687 = vand.u32 %v638, 4294901760
          %688 = vmatmul.f32.gmra.mxu0 %v687
          %v689 = vpop.f32.mrf.mxu0
          %v690 = vadd.f32 %v664, %v689
          %691 = vdwg.mxu0
          %692 = vmatpush.msra.mxu0 0.0
          %693 = vmatpush.msra.mxu0 0.0
          %694 = vmatpush.msra.mxu0 0.0
          %695 = vmatpush.msra.mxu0 0.0
          %696 = vmatpush.msra.mxu0 0.0
          %697 = vmatpush.msra.mxu0 0.0
          %698 = vmatpush.msra.mxu0 0.0
          %699 = vmatpush.msra.mxu0 0.0
          %700 = vmatpush.msra.mxu0 0.0
          %701 = vmatpush.msra.mxu0 0.0
          %702 = vmatpush.msra.mxu0 0.0
          %703 = vmatpush.msra.mxu0 0.0
          %704 = vmatpush.msra.mxu0 0.0
          %705 = vmatpush.msra.mxu0 0.0
          %706 = vmatpush.msra.mxu0 0.0
          %v707 = vand.u32 %v606, 4294901760
          %v708 = vsub.f32 %v606, %v707
          %709 = vmatpush.msra.mxu0 %v708
          %v710 = vand.u32 %v638, 4294901760
          %v711 = vsub.f32 %v638, %v710
          %712 = vmatmul.f32.gmra.mxu0 %v711
          %v713 = vpop.f32.mrf.mxu0
          %v714 = vadd.f32 %v690, %v713
          %715 = vdwg.mxu0
          %716 = vmatpush.msra.mxu0 0.0
          %717 = vmatpush.msra.mxu0 0.0
          %718 = vmatpush.msra.mxu0 0.0
          %719 = vmatpush.msra.mxu0 0.0
          %720 = vmatpush.msra.mxu0 0.0
          %721 = vmatpush.msra.mxu0 0.0
          %722 = vmatpush.msra.mxu0 0.0
          %723 = vmatpush.msra.mxu0 0.0
          %724 = vmatpush.msra.mxu0 0.0
          %725 = vmatpush.msra.mxu0 0.0
          %726 = vmatpush.msra.mxu0 0.0
          %727 = vmatpush.msra.mxu0 0.0
          %728 = vmatpush.msra.mxu0 0.0
          %729 = vmatpush.msra.mxu0 0.0
          %730 = vmatpush.msra.mxu0 0.0
          %v731 = vand.u32 %v606, 4294901760
          %732 = vmatpush.msra.mxu0 %v731
          %v733 = vand.u32 %v638, 4294901760
          %v734 = vsub.f32 %v638, %v733
          %v735 = vand.u32 %v734, 4294901760
          %736 = vmatmul.f32.gmra.mxu0 %v735
          %v737 = vpop.f32.mrf.mxu0
          %v738 = vadd.f32 %v714, %v737
          %739 = vdwg.mxu0
          %740 = vmatpush.msra.mxu0 0.0
          %741 = vmatpush.msra.mxu0 0.0
          %742 = vmatpush.msra.mxu0 0.0
          %743 = vmatpush.msra.mxu0 0.0
          %744 = vmatpush.msra.mxu0 0.0
          %745 = vmatpush.msra.mxu0 0.0
          %746 = vmatpush.msra.mxu0 0.0
          %747 = vmatpush.msra.mxu0 0.0
          %748 = vmatpush.msra.mxu0 0.0
          %749 = vmatpush.msra.mxu0 0.0
          %750 = vmatpush.msra.mxu0 0.0
          %751 = vmatpush.msra.mxu0 0.0
          %752 = vmatpush.msra.mxu0 0.0
          %753 = vmatpush.msra.mxu0 0.0
          %754 = vmatpush.msra.mxu0 0.0
          %v755 = vand.u32 %v606, 4294901760
          %v756 = vsub.f32 %v606, %v755
          %v757 = vand.u32 %v756, 4294901760
          %758 = vmatpush.msra.mxu0 %v757
          %v759 = vand.u32 %v638, 4294901760
          %760 = vmatmul.f32.gmra.mxu0 %v759
          %v761 = vpop.f32.mrf.mxu0
          %v762 = vadd.f32 %v738, %v761
          %763 = vdwg.mxu0
          %764 = vmatpush.msra.mxu0 0.0
          %765 = vmatpush.msra.mxu0 0.0
          %766 = vmatpush.msra.mxu0 0.0
          %767 = vmatpush.msra.mxu0 0.0
          %768 = vmatpush.msra.mxu0 0.0
          %769 = vmatpush.msra.mxu0 0.0
          %770 = vmatpush.msra.mxu0 0.0
          %771 = vmatpush.msra.mxu0 0.0
          %772 = vmatpush.msra.mxu0 0.0
          %773 = vmatpush.msra.mxu0 0.0
          %774 = vmatpush.msra.mxu0 0.0
          %775 = vmatpush.msra.mxu0 0.0
          %776 = vmatpush.msra.mxu0 0.0
          %777 = vmatpush.msra.mxu0 0.0
          %778 = vmatpush.msra.mxu0 0.0
          %v779 = vand.u32 %v606, 4294901760
          %780 = vmatpush.msra.mxu0 %v779
          %v781 = vand.u32 %v638, 4294901760
          %782 = vmatmul.f32.gmra.mxu0 %v781
          %v783 = vpop.f32.mrf.mxu0
          %v784 = vadd.f32 %v762, %v783
          %785 = vdwg.mxu0
          %s786 = sadd.s32 %s611, 1
          %s787 = smul.u32 %s786, 4
          %s788 = scalar_lea.vmem [#allocation3], %s787
          %789 = vst.msk [vmem:[%s788] sm:$0xf] %vm416, %v784
        $region72: #{tpu_custom_call.1} parent=55 // loop_footer
          %s615 = sadd.s32 1, %s611
        $region73: #{tpu_custom_call.1} parent=55 // loop_footer_branch
          %610 = sbr.rel target = $region69
        $region74: #{tpu_custom_call.1} parent=55 // loop_exit
          _
        %v790 = vld [vmem:[%s8] sm:$0xf]
        %791 = vst.msk [vmem:[#allocation4] sm:$0xf] %vm416, 0.0
        %s792 = scalar_lea.vmem [#allocation4], 68
        %793 = vst.msk [vmem:[%s792] sm:$0xf] %vm416, 0.0
        loop: start=0, step=1, limit=16
        $region75: #{tpu_custom_call.1} parent=55 // loop_pre_header
          _
        $region76: #{tpu_custom_call.1} parent=55 // loop_header
          %s795 = sphi 0, %s799
          %p796 = scmp.ge.s32.totalorder %s795, 16
        $region77: #{tpu_custom_call.1} parent=55 // loop_header_branch
          %798 = sbr.rel (%p796) target = $region81
        $region78: #{tpu_custom_call.1} parent=55 // loop_body
          %s800 = sshra.s32 %s795, 7
          %s801 = sand.u32 %s795, 127
          %s802 = sadd.s32 %s800, 2
          %s803 = smul.u32 %s802, 128
          %s804 = sshra.s32 %s795, 7
          %s805 = sand.u32 %s795, 127
          %s806 = sadd.s32 %s803, %s805
          %s807 = sld [smem:[#allocation6 + %s806]]
          %s808 = smul.u32 %s807, 4
          %s809 = scalar_lea.vmem %s413, %s808
          %v810 = vld [vmem:[%s809] sm:$0xf]
          %s811 = sld [smem:[#allocation7 + %s806]]
          %s812 = smul.u32 %s811, 4
          %s813 = scalar_lea.vmem %s413, %s812
          %v814 = vld [vmem:[%s813] sm:$0xf]
          %s815 = sld [smem:[#allocation8 + %s806]]
          %v816 = vsub.f32 %v814, %v810
          %v817 = vstv %s815
          %v818 = vmul.f32 %v817, %v816
          %v819 = vadd.f32 %v810, %v818
          %vm820 = vcmask 31744
          %v822 = vsel %vm820, %v819, 0
          %vm824 = vcmask 1043456
          %v826 = vsel %vm824, %v790, 0
          %828 = vmatpush.msra.mxu0 0.0
          %829 = vmatpush.msra.mxu0 0.0
          %830 = vmatpush.msra.mxu0 0.0
          %831 = vmatpush.msra.mxu0 0.0
          %832 = vmatpush.msra.mxu0 0.0
          %833 = vmatpush.msra.mxu0 0.0
          %834 = vmatpush.msra.mxu0 0.0
          %835 = vmatpush.msra.mxu0 0.0
          %836 = vmatpush.msra.mxu0 0.0
          %837 = vmatpush.msra.mxu0 0.0
          %838 = vmatpush.msra.mxu0 0.0
          %839 = vmatpush.msra.mxu0 0.0
          %840 = vmatpush.msra.mxu0 0.0
          %841 = vmatpush.msra.mxu0 0.0
          %842 = vmatpush.msra.mxu0 0.0
          %v843 = vand.u32 %v826, 4294901760
          %844 = vmatpush.msra.mxu0 %v843
          %v845 = vand.u32 %v822, 4294901760
          %v846 = vsub.f32 %v822, %v845
          %v847 = vand.u32 %v846, 4294901760
          %v848 = vsub.f32 %v846, %v847
          %v849 = vand.u32 %v848, 4294901760
          %850 = vmatmul.f32.gmra.mxu0 %v849
          %v851 = vpop.f32.mrf.mxu0
          %v852 = vadd.f32 0.0, %v851
          %853 = vdwg.mxu0
          %854 = vmatpush.msra.mxu0 0.0
          %855 = vmatpush.msra.mxu0 0.0
          %856 = vmatpush.msra.mxu0 0.0
          %857 = vmatpush.msra.mxu0 0.0
          %858 = vmatpush.msra.mxu0 0.0
          %859 = vmatpush.msra.mxu0 0.0
          %860 = vmatpush.msra.mxu0 0.0
          %861 = vmatpush.msra.mxu0 0.0
          %862 = vmatpush.msra.mxu0 0.0
          %863 = vmatpush.msra.mxu0 0.0
          %864 = vmatpush.msra.mxu0 0.0
          %865 = vmatpush.msra.mxu0 0.0
          %866 = vmatpush.msra.mxu0 0.0
          %867 = vmatpush.msra.mxu0 0.0
          %868 = vmatpush.msra.mxu0 0.0
          %v869 = vand.u32 %v826, 4294901760
          %v870 = vsub.f32 %v826, %v869
          %v871 = vand.u32 %v870, 4294901760
          %v872 = vsub.f32 %v870, %v871
          %v873 = vand.u32 %v872, 4294901760
          %874 = vmatpush.msra.mxu0 %v873
          %v875 = vand.u32 %v822, 4294901760
          %876 = vmatmul.f32.gmra.mxu0 %v875
          %v877 = vpop.f32.mrf.mxu0
          %v878 = vadd.f32 %v852, %v877
          %879 = vdwg.mxu0
          %880 = vmatpush.msra.mxu0 0.0
          %881 = vmatpush.msra.mxu0 0.0
          %882 = vmatpush.msra.mxu0 0.0
          %883 = vmatpush.msra.mxu0 0.0
          %884 = vmatpush.msra.mxu0 0.0
          %885 = vmatpush.msra.mxu0 0.0
          %886 = vmatpush.msra.mxu0 0.0
          %887 = vmatpush.msra.mxu0 0.0
          %888 = vmatpush.msra.mxu0 0.0
          %889 = vmatpush.msra.mxu0 0.0
          %890 = vmatpush.msra.mxu0 0.0
          %891 = vmatpush.msra.mxu0 0.0
          %892 = vmatpush.msra.mxu0 0.0
          %893 = vmatpush.msra.mxu0 0.0
          %894 = vmatpush.msra.mxu0 0.0
          %v895 = vand.u32 %v826, 4294901760
          %v896 = vsub.f32 %v826, %v895
          %897 = vmatpush.msra.mxu0 %v896
          %v898 = vand.u32 %v822, 4294901760
          %v899 = vsub.f32 %v822, %v898
          %900 = vmatmul.f32.gmra.mxu0 %v899
          %v901 = vpop.f32.mrf.mxu0
          %v902 = vadd.f32 %v878, %v901
          %903 = vdwg.mxu0
          %904 = vmatpush.msra.mxu0 0.0
          %905 = vmatpush.msra.mxu0 0.0
          %906 = vmatpush.msra.mxu0 0.0
          %907 = vmatpush.msra.mxu0 0.0
          %908 = vmatpush.msra.mxu0 0.0
          %909 = vmatpush.msra.mxu0 0.0
          %910 = vmatpush.msra.mxu0 0.0
          %911 = vmatpush.msra.mxu0 0.0
          %912 = vmatpush.msra.mxu0 0.0
          %913 = vmatpush.msra.mxu0 0.0
          %914 = vmatpush.msra.mxu0 0.0
          %915 = vmatpush.msra.mxu0 0.0
          %916 = vmatpush.msra.mxu0 0.0
          %917 = vmatpush.msra.mxu0 0.0
          %918 = vmatpush.msra.mxu0 0.0
          %v919 = vand.u32 %v826, 4294901760
          %920 = vmatpush.msra.mxu0 %v919
          %v921 = vand.u32 %v822, 4294901760
          %v922 = vsub.f32 %v822, %v921
          %v923 = vand.u32 %v922, 4294901760
          %924 = vmatmul.f32.gmra.mxu0 %v923
          %v925 = vpop.f32.mrf.mxu0
          %v926 = vadd.f32 %v902, %v925
          %927 = vdwg.mxu0
          %928 = vmatpush.msra.mxu0 0.0
          %929 = vmatpush.msra.mxu0 0.0
          %930 = vmatpush.msra.mxu0 0.0
          %931 = vmatpush.msra.mxu0 0.0
          %932 = vmatpush.msra.mxu0 0.0
          %933 = vmatpush.msra.mxu0 0.0
          %934 = vmatpush.msra.mxu0 0.0
          %935 = vmatpush.msra.mxu0 0.0
          %936 = vmatpush.msra.mxu0 0.0
          %937 = vmatpush.msra.mxu0 0.0
          %938 = vmatpush.msra.mxu0 0.0
          %939 = vmatpush.msra.mxu0 0.0
          %940 = vmatpush.msra.mxu0 0.0
          %941 = vmatpush.msra.mxu0 0.0
          %942 = vmatpush.msra.mxu0 0.0
          %v943 = vand.u32 %v826, 4294901760
          %v944 = vsub.f32 %v826, %v943
          %v945 = vand.u32 %v944, 4294901760
          %946 = vmatpush.msra.mxu0 %v945
          %v947 = vand.u32 %v822, 4294901760
          %948 = vmatmul.f32.gmra.mxu0 %v947
          %v949 = vpop.f32.mrf.mxu0
          %v950 = vadd.f32 %v926, %v949
          %951 = vdwg.mxu0
          %952 = vmatpush.msra.mxu0 0.0
          %953 = vmatpush.msra.mxu0 0.0
          %954 = vmatpush.msra.mxu0 0.0
          %955 = vmatpush.msra.mxu0 0.0
          %956 = vmatpush.msra.mxu0 0.0
          %957 = vmatpush.msra.mxu0 0.0
          %958 = vmatpush.msra.mxu0 0.0
          %959 = vmatpush.msra.mxu0 0.0
          %960 = vmatpush.msra.mxu0 0.0
          %961 = vmatpush.msra.mxu0 0.0
          %962 = vmatpush.msra.mxu0 0.0
          %963 = vmatpush.msra.mxu0 0.0
          %964 = vmatpush.msra.mxu0 0.0
          %965 = vmatpush.msra.mxu0 0.0
          %966 = vmatpush.msra.mxu0 0.0
          %v967 = vand.u32 %v826, 4294901760
          %968 = vmatpush.msra.mxu0 %v967
          %v969 = vand.u32 %v822, 4294901760
          %970 = vmatmul.f32.gmra.mxu0 %v969
          %v971 = vpop.f32.mrf.mxu0
          %v972 = vadd.f32 %v950, %v971
          %973 = vdwg.mxu0
          %s974 = sadd.s32 %s795, 1
          %s975 = smul.u32 %s974, 4
          %s976 = scalar_lea.vmem [#allocation4], %s975
          %977 = vst.msk [vmem:[%s976] sm:$0xf] %vm416, %v972
        $region79: #{tpu_custom_call.1} parent=55 // loop_footer
          %s799 = sadd.s32 1, %s795
        $region80: #{tpu_custom_call.1} parent=55 // loop_footer_branch
          %794 = sbr.rel target = $region76
        $region81: #{tpu_custom_call.1} parent=55 // loop_exit
          _
        %v978 = vld [vmem:[%s9] sm:$0xff]
        %v979 = vld [vmem:[%s9 + $0x8] sm:$0xf]
        %s980 = scalar_lea.vmem %s9, 16
        %v981 = vld [vmem:[%s980] sm:$0xff]
        %v982 = vld [vmem:[%s980 + $0x8] sm:$0xf]
        %s983 = scalar_lea.vmem %s9, 32
        %v984 = vld [vmem:[%s983] sm:$0xff]
        %v985 = vld [vmem:[%s983 + $0x8] sm:$0xf]
        %s986 = scalar_lea.vmem %s9, 48
        %v987 = vld [vmem:[%s986] sm:$0xff]
        %v988 = vld [vmem:[%s986 + $0x8] sm:$0xf]
        %s989 = scalar_lea.vmem %s9, 64
        %v990 = vld [vmem:[%s989] sm:$0xff]
        %v991 = vld [vmem:[%s989 + $0x8] sm:$0xf]
        %s992 = scalar_lea.vmem %s9, 80
        %v993 = vld [vmem:[%s992] sm:$0xff]
        %v994 = vld [vmem:[%s992 + $0x8] sm:$0xf]
        %s995 = scalar_lea.vmem %s9, 96
        %v996 = vld [vmem:[%s995] sm:$0xff]
        %v997 = vld [vmem:[%s995 + $0x8] sm:$0xf]
        %s998 = scalar_lea.vmem %s9, 112
        %v999 = vld [vmem:[%s998] sm:$0xff]
        %v1000 = vld [vmem:[%s998 + $0x8] sm:$0xf]
        %s1001 = scalar_lea.vmem %s9, 128
        %v1002 = vld [vmem:[%s1001] sm:$0xff]
        %v1003 = vld [vmem:[%s1001 + $0x8] sm:$0xf]
        %v1004 = vld [vmem:[%s10] sm:$0xf]
        %v1005 = vld [vmem:[%s11] sm:$0xf]
        loop: start=0, step=1, limit=16
        $region82: #{tpu_custom_call.1} parent=55 // loop_pre_header
          _
        $region83: #{tpu_custom_call.1} parent=55 // loop_header
          %s1007 = sphi 0, %s1011
          %p1008 = scmp.ge.s32.totalorder %s1007, 16
        $region84: #{tpu_custom_call.1} parent=55 // loop_header_branch
          %1010 = sbr.rel (%p1008) target = $region88
        $region85: #{tpu_custom_call.1} parent=55 // loop_body
          %s1012 = smul.u32 %s1007, 4
          %s1013 = scalar_lea.vmem [#allocation2], %s1012
          %v1014 = vld [vmem:[%s1013] sm:$0xf]
          %vm1015 = vcmask 31744
          %v1017 = vsel %vm1015, %v978, 0
          %v1020 = vsel %vm1015, %v979, 0
          %vm1022 = vcmask 1043456
          %v1024 = vsel %vm1022, %v1014, 0
          %1026 = vmatpush.msra.mxu0 0.0
          %1027 = vmatpush.msra.mxu0 0.0
          %1028 = vmatpush.msra.mxu0 0.0
          %1029 = vmatpush.msra.mxu0 0.0
          %1030 = vmatpush.msra.mxu0 0.0
          %1031 = vmatpush.msra.mxu0 0.0
          %1032 = vmatpush.msra.mxu0 0.0
          %1033 = vmatpush.msra.mxu0 0.0
          %1034 = vmatpush.msra.mxu0 0.0
          %1035 = vmatpush.msra.mxu0 0.0
          %1036 = vmatpush.msra.mxu0 0.0
          %1037 = vmatpush.msra.mxu0 0.0
          %1038 = vmatpush.msra.mxu0 0.0
          %1039 = vmatpush.msra.mxu0 0.0
          %1040 = vmatpush.msra.mxu0 0.0
          %v1041 = vand.u32 %v1024, 4294901760
          %1042 = vmatpush.msra.mxu0 %v1041
          %v1043 = vand.u32 %v1017, 4294901760
          %v1044 = vsub.f32 %v1017, %v1043
          %v1045 = vand.u32 %v1044, 4294901760
          %v1046 = vsub.f32 %v1044, %v1045
          %v1047 = vand.u32 %v1046, 4294901760
          %1048 = vmatmul.f32.gmra.mxu0 %v1047
          %v1049 = vpop.f32.mrf.mxu0
          %v1050 = vadd.f32 0.0, %v1049
          %v1051 = vand.u32 %v1020, 4294901760
          %v1052 = vsub.f32 %v1020, %v1051
          %v1053 = vand.u32 %v1052, 4294901760
          %v1054 = vsub.f32 %v1052, %v1053
          %v1055 = vand.u32 %v1054, 4294901760
          %1056 = vmatmul.f32.gmra.mxu0 %v1055
          %v1057 = vpop.f32.mrf.mxu0
          %v1058 = vadd.f32 0.0, %v1057
          %1059 = vdwg.mxu0
          %1060 = vmatpush.msra.mxu0 0.0
          %1061 = vmatpush.msra.mxu0 0.0
          %1062 = vmatpush.msra.mxu0 0.0
          %1063 = vmatpush.msra.mxu0 0.0
          %1064 = vmatpush.msra.mxu0 0.0
          %1065 = vmatpush.msra.mxu0 0.0
          %1066 = vmatpush.msra.mxu0 0.0
          %1067 = vmatpush.msra.mxu0 0.0
          %1068 = vmatpush.msra.mxu0 0.0
          %1069 = vmatpush.msra.mxu0 0.0
          %1070 = vmatpush.msra.mxu0 0.0
          %1071 = vmatpush.msra.mxu0 0.0
          %1072 = vmatpush.msra.mxu0 0.0
          %1073 = vmatpush.msra.mxu0 0.0
          %1074 = vmatpush.msra.mxu0 0.0
          %v1075 = vand.u32 %v1024, 4294901760
          %v1076 = vsub.f32 %v1024, %v1075
          %v1077 = vand.u32 %v1076, 4294901760
          %v1078 = vsub.f32 %v1076, %v1077
          %v1079 = vand.u32 %v1078, 4294901760
          %1080 = vmatpush.msra.mxu0 %v1079
          %v1081 = vand.u32 %v1017, 4294901760
          %1082 = vmatmul.f32.gmra.mxu0 %v1081
          %v1083 = vpop.f32.mrf.mxu0
          %v1084 = vadd.f32 %v1050, %v1083
          %v1085 = vand.u32 %v1020, 4294901760
          %1086 = vmatmul.f32.gmra.mxu0 %v1085
          %v1087 = vpop.f32.mrf.mxu0
          %v1088 = vadd.f32 %v1058, %v1087
          %1089 = vdwg.mxu0
          %1090 = vmatpush.msra.mxu0 0.0
          %1091 = vmatpush.msra.mxu0 0.0
          %1092 = vmatpush.msra.mxu0 0.0
          %1093 = vmatpush.msra.mxu0 0.0
          %1094 = vmatpush.msra.mxu0 0.0
          %1095 = vmatpush.msra.mxu0 0.0
          %1096 = vmatpush.msra.mxu0 0.0
          %1097 = vmatpush.msra.mxu0 0.0
          %1098 = vmatpush.msra.mxu0 0.0
          %1099 = vmatpush.msra.mxu0 0.0
          %1100 = vmatpush.msra.mxu0 0.0
          %1101 = vmatpush.msra.mxu0 0.0
          %1102 = vmatpush.msra.mxu0 0.0
          %1103 = vmatpush.msra.mxu0 0.0
          %1104 = vmatpush.msra.mxu0 0.0
          %v1105 = vand.u32 %v1024, 4294901760
          %v1106 = vsub.f32 %v1024, %v1105
          %1107 = vmatpush.msra.mxu0 %v1106
          %v1108 = vand.u32 %v1017, 4294901760
          %v1109 = vsub.f32 %v1017, %v1108
          %1110 = vmatmul.f32.gmra.mxu0 %v1109
          %v1111 = vpop.f32.mrf.mxu0
          %v1112 = vadd.f32 %v1084, %v1111
          %v1113 = vand.u32 %v1020, 4294901760
          %v1114 = vsub.f32 %v1020, %v1113
          %1115 = vmatmul.f32.gmra.mxu0 %v1114
          %v1116 = vpop.f32.mrf.mxu0
          %v1117 = vadd.f32 %v1088, %v1116
          %1118 = vdwg.mxu0
          %1119 = vmatpush.msra.mxu0 0.0
          %1120 = vmatpush.msra.mxu0 0.0
          %1121 = vmatpush.msra.mxu0 0.0
          %1122 = vmatpush.msra.mxu0 0.0
          %1123 = vmatpush.msra.mxu0 0.0
          %1124 = vmatpush.msra.mxu0 0.0
          %1125 = vmatpush.msra.mxu0 0.0
          %1126 = vmatpush.msra.mxu0 0.0
          %1127 = vmatpush.msra.mxu0 0.0
          %1128 = vmatpush.msra.mxu0 0.0
          %1129 = vmatpush.msra.mxu0 0.0
          %1130 = vmatpush.msra.mxu0 0.0
          %1131 = vmatpush.msra.mxu0 0.0
          %1132 = vmatpush.msra.mxu0 0.0
          %1133 = vmatpush.msra.mxu0 0.0
          %v1134 = vand.u32 %v1024, 4294901760
          %1135 = vmatpush.msra.mxu0 %v1134
          %v1136 = vand.u32 %v1017, 4294901760
          %v1137 = vsub.f32 %v1017, %v1136
          %v1138 = vand.u32 %v1137, 4294901760
          %1139 = vmatmul.f32.gmra.mxu0 %v1138
          %v1140 = vpop.f32.mrf.mxu0
          %v1141 = vadd.f32 %v1112, %v1140
          %v1142 = vand.u32 %v1020, 4294901760
          %v1143 = vsub.f32 %v1020, %v1142
          %v1144 = vand.u32 %v1143, 4294901760
          %1145 = vmatmul.f32.gmra.mxu0 %v1144
          %v1146 = vpop.f32.mrf.mxu0
          %v1147 = vadd.f32 %v1117, %v1146
          %1148 = vdwg.mxu0
          %1149 = vmatpush.msra.mxu0 0.0
          %1150 = vmatpush.msra.mxu0 0.0
          %1151 = vmatpush.msra.mxu0 0.0
          %1152 = vmatpush.msra.mxu0 0.0
          %1153 = vmatpush.msra.mxu0 0.0
          %1154 = vmatpush.msra.mxu0 0.0
          %1155 = vmatpush.msra.mxu0 0.0
          %1156 = vmatpush.msra.mxu0 0.0
          %1157 = vmatpush.msra.mxu0 0.0
          %1158 = vmatpush.msra.mxu0 0.0
          %1159 = vmatpush.msra.mxu0 0.0
          %1160 = vmatpush.msra.mxu0 0.0
          %1161 = vmatpush.msra.mxu0 0.0
          %1162 = vmatpush.msra.mxu0 0.0
          %1163 = vmatpush.msra.mxu0 0.0
          %v1164 = vand.u32 %v1024, 4294901760
          %v1165 = vsub.f32 %v1024, %v1164
          %v1166 = vand.u32 %v1165, 4294901760
          %1167 = vmatpush.msra.mxu0 %v1166
          %v1168 = vand.u32 %v1017, 4294901760
          %1169 = vmatmul.f32.gmra.mxu0 %v1168
          %v1170 = vpop.f32.mrf.mxu0
          %v1171 = vadd.f32 %v1141, %v1170
          %v1172 = vand.u32 %v1020, 4294901760
          %1173 = vmatmul.f32.gmra.mxu0 %v1172
          %v1174 = vpop.f32.mrf.mxu0
          %v1175 = vadd.f32 %v1147, %v1174
          %1176 = vdwg.mxu0
          %1177 = vmatpush.msra.mxu0 0.0
          %1178 = vmatpush.msra.mxu0 0.0
          %1179 = vmatpush.msra.mxu0 0.0
          %1180 = vmatpush.msra.mxu0 0.0
          %1181 = vmatpush.msra.mxu0 0.0
          %1182 = vmatpush.msra.mxu0 0.0
          %1183 = vmatpush.msra.mxu0 0.0
          %1184 = vmatpush.msra.mxu0 0.0
          %1185 = vmatpush.msra.mxu0 0.0
          %1186 = vmatpush.msra.mxu0 0.0
          %1187 = vmatpush.msra.mxu0 0.0
          %1188 = vmatpush.msra.mxu0 0.0
          %1189 = vmatpush.msra.mxu0 0.0
          %1190 = vmatpush.msra.mxu0 0.0
          %1191 = vmatpush.msra.mxu0 0.0
          %v1192 = vand.u32 %v1024, 4294901760
          %1193 = vmatpush.msra.mxu0 %v1192
          %v1194 = vand.u32 %v1017, 4294901760
          %1195 = vmatmul.f32.gmra.mxu0 %v1194
          %v1196 = vpop.f32.mrf.mxu0
          %v1197 = vadd.f32 %v1171, %v1196
          %v1198 = vand.u32 %v1020, 4294901760
          %1199 = vmatmul.f32.gmra.mxu0 %v1198
          %v1200 = vpop.f32.mrf.mxu0
          %v1201 = vadd.f32 %v1175, %v1200
          %1202 = vdwg.mxu0
          %v1203 = vadd.f32 %v1197, 0.0
          %v1205 = vrot.slane %v1197, 4
          %1206 = vrot.lane.b32.xlu0 %v1205, 127
          %v1207 = vpop.permute.xlu0 %1206
          %v1209 = vadd.f32 %v1203, %v1207
          %1211 = vrot.lane.b32.xlu0 %v1201, 126
          %v1212 = vpop.permute.xlu0 %1211
          %v1214 = vadd.f32 %v1209, %v1212
          %s1215 = sadd.s32 %s1007, 1
          %s1216 = smul.u32 %s1215, 4
          %s1217 = scalar_lea.vmem [#allocation2], %s1216
          %v1218 = vld [vmem:[%s1217] sm:$0xf]
          %v1220 = vsel %vm1015, %v981, 0
          %v1223 = vsel %vm1015, %v982, 0
          %v1226 = vsel %vm1022, %v1218, 0
          %1228 = vmatpush.msra.mxu0 0.0
          %1229 = vmatpush.msra.mxu0 0.0
          %1230 = vmatpush.msra.mxu0 0.0
          %1231 = vmatpush.msra.mxu0 0.0
          %1232 = vmatpush.msra.mxu0 0.0
          %1233 = vmatpush.msra.mxu0 0.0
          %1234 = vmatpush.msra.mxu0 0.0
          %1235 = vmatpush.msra.mxu0 0.0
          %1236 = vmatpush.msra.mxu0 0.0
          %1237 = vmatpush.msra.mxu0 0.0
          %1238 = vmatpush.msra.mxu0 0.0
          %1239 = vmatpush.msra.mxu0 0.0
          %1240 = vmatpush.msra.mxu0 0.0
          %1241 = vmatpush.msra.mxu0 0.0
          %1242 = vmatpush.msra.mxu0 0.0
          %v1243 = vand.u32 %v1226, 4294901760
          %1244 = vmatpush.msra.mxu0 %v1243
          %v1245 = vand.u32 %v1220, 4294901760
          %v1246 = vsub.f32 %v1220, %v1245
          %v1247 = vand.u32 %v1246, 4294901760
          %v1248 = vsub.f32 %v1246, %v1247
          %v1249 = vand.u32 %v1248, 4294901760
          %1250 = vmatmul.f32.gmra.mxu0 %v1249
          %v1251 = vpop.f32.mrf.mxu0
          %v1252 = vadd.f32 0.0, %v1251
          %v1253 = vand.u32 %v1223, 4294901760
          %v1254 = vsub.f32 %v1223, %v1253
          %v1255 = vand.u32 %v1254, 4294901760
          %v1256 = vsub.f32 %v1254, %v1255
          %v1257 = vand.u32 %v1256, 4294901760
          %1258 = vmatmul.f32.gmra.mxu0 %v1257
          %v1259 = vpop.f32.mrf.mxu0
          %v1260 = vadd.f32 0.0, %v1259
          %1261 = vdwg.mxu0
          %1262 = vmatpush.msra.mxu0 0.0
          %1263 = vmatpush.msra.mxu0 0.0
          %1264 = vmatpush.msra.mxu0 0.0
          %1265 = vmatpush.msra.mxu0 0.0
          %1266 = vmatpush.msra.mxu0 0.0
          %1267 = vmatpush.msra.mxu0 0.0
          %1268 = vmatpush.msra.mxu0 0.0
          %1269 = vmatpush.msra.mxu0 0.0
          %1270 = vmatpush.msra.mxu0 0.0
          %1271 = vmatpush.msra.mxu0 0.0
          %1272 = vmatpush.msra.mxu0 0.0
          %1273 = vmatpush.msra.mxu0 0.0
          %1274 = vmatpush.msra.mxu0 0.0
          %1275 = vmatpush.msra.mxu0 0.0
          %1276 = vmatpush.msra.mxu0 0.0
          %v1277 = vand.u32 %v1226, 4294901760
          %v1278 = vsub.f32 %v1226, %v1277
          %v1279 = vand.u32 %v1278, 4294901760
          %v1280 = vsub.f32 %v1278, %v1279
          %v1281 = vand.u32 %v1280, 4294901760
          %1282 = vmatpush.msra.mxu0 %v1281
          %v1283 = vand.u32 %v1220, 4294901760
          %1284 = vmatmul.f32.gmra.mxu0 %v1283
          %v1285 = vpop.f32.mrf.mxu0
          %v1286 = vadd.f32 %v1252, %v1285
          %v1287 = vand.u32 %v1223, 4294901760
          %1288 = vmatmul.f32.gmra.mxu0 %v1287
          %v1289 = vpop.f32.mrf.mxu0
          %v1290 = vadd.f32 %v1260, %v1289
          %1291 = vdwg.mxu0
          %1292 = vmatpush.msra.mxu0 0.0
          %1293 = vmatpush.msra.mxu0 0.0
          %1294 = vmatpush.msra.mxu0 0.0
          %1295 = vmatpush.msra.mxu0 0.0
          %1296 = vmatpush.msra.mxu0 0.0
          %1297 = vmatpush.msra.mxu0 0.0
          %1298 = vmatpush.msra.mxu0 0.0
          %1299 = vmatpush.msra.mxu0 0.0
          %1300 = vmatpush.msra.mxu0 0.0
          %1301 = vmatpush.msra.mxu0 0.0
          %1302 = vmatpush.msra.mxu0 0.0
          %1303 = vmatpush.msra.mxu0 0.0
          %1304 = vmatpush.msra.mxu0 0.0
          %1305 = vmatpush.msra.mxu0 0.0
          %1306 = vmatpush.msra.mxu0 0.0
          %v1307 = vand.u32 %v1226, 4294901760
          %v1308 = vsub.f32 %v1226, %v1307
          %1309 = vmatpush.msra.mxu0 %v1308
          %v1310 = vand.u32 %v1220, 4294901760
          %v1311 = vsub.f32 %v1220, %v1310
          %1312 = vmatmul.f32.gmra.mxu0 %v1311
          %v1313 = vpop.f32.mrf.mxu0
          %v1314 = vadd.f32 %v1286, %v1313
          %v1315 = vand.u32 %v1223, 4294901760
          %v1316 = vsub.f32 %v1223, %v1315
          %1317 = vmatmul.f32.gmra.mxu0 %v1316
          %v1318 = vpop.f32.mrf.mxu0
          %v1319 = vadd.f32 %v1290, %v1318
          %1320 = vdwg.mxu0
          %1321 = vmatpush.msra.mxu0 0.0
          %1322 = vmatpush.msra.mxu0 0.0
          %1323 = vmatpush.msra.mxu0 0.0
          %1324 = vmatpush.msra.mxu0 0.0
          %1325 = vmatpush.msra.mxu0 0.0
          %1326 = vmatpush.msra.mxu0 0.0
          %1327 = vmatpush.msra.mxu0 0.0
          %1328 = vmatpush.msra.mxu0 0.0
          %1329 = vmatpush.msra.mxu0 0.0
          %1330 = vmatpush.msra.mxu0 0.0
          %1331 = vmatpush.msra.mxu0 0.0
          %1332 = vmatpush.msra.mxu0 0.0
          %1333 = vmatpush.msra.mxu0 0.0
          %1334 = vmatpush.msra.mxu0 0.0
          %1335 = vmatpush.msra.mxu0 0.0
          %v1336 = vand.u32 %v1226, 4294901760
          %1337 = vmatpush.msra.mxu0 %v1336
          %v1338 = vand.u32 %v1220, 4294901760
          %v1339 = vsub.f32 %v1220, %v1338
          %v1340 = vand.u32 %v1339, 4294901760
          %1341 = vmatmul.f32.gmra.mxu0 %v1340
          %v1342 = vpop.f32.mrf.mxu0
          %v1343 = vadd.f32 %v1314, %v1342
          %v1344 = vand.u32 %v1223, 4294901760
          %v1345 = vsub.f32 %v1223, %v1344
          %v1346 = vand.u32 %v1345, 4294901760
          %1347 = vmatmul.f32.gmra.mxu0 %v1346
          %v1348 = vpop.f32.mrf.mxu0
          %v1349 = vadd.f32 %v1319, %v1348
          %1350 = vdwg.mxu0
          %1351 = vmatpush.msra.mxu0 0.0
          %1352 = vmatpush.msra.mxu0 0.0
          %1353 = vmatpush.msra.mxu0 0.0
          %1354 = vmatpush.msra.mxu0 0.0
          %1355 = vmatpush.msra.mxu0 0.0
          %1356 = vmatpush.msra.mxu0 0.0
          %1357 = vmatpush.msra.mxu0 0.0
          %1358 = vmatpush.msra.mxu0 0.0
          %1359 = vmatpush.msra.mxu0 0.0
          %1360 = vmatpush.msra.mxu0 0.0
          %1361 = vmatpush.msra.mxu0 0.0
          %1362 = vmatpush.msra.mxu0 0.0
          %1363 = vmatpush.msra.mxu0 0.0
          %1364 = vmatpush.msra.mxu0 0.0
          %1365 = vmatpush.msra.mxu0 0.0
          %v1366 = vand.u32 %v1226, 4294901760
          %v1367 = vsub.f32 %v1226, %v1366
          %v1368 = vand.u32 %v1367, 4294901760
          %1369 = vmatpush.msra.mxu0 %v1368
          %v1370 = vand.u32 %v1220, 4294901760
          %1371 = vmatmul.f32.gmra.mxu0 %v1370
          %v1372 = vpop.f32.mrf.mxu0
          %v1373 = vadd.f32 %v1343, %v1372
          %v1374 = vand.u32 %v1223, 4294901760
          %1375 = vmatmul.f32.gmra.mxu0 %v1374
          %v1376 = vpop.f32.mrf.mxu0
          %v1377 = vadd.f32 %v1349, %v1376
          %1378 = vdwg.mxu0
          %1379 = vmatpush.msra.mxu0 0.0
          %1380 = vmatpush.msra.mxu0 0.0
          %1381 = vmatpush.msra.mxu0 0.0
          %1382 = vmatpush.msra.mxu0 0.0
          %1383 = vmatpush.msra.mxu0 0.0
          %1384 = vmatpush.msra.mxu0 0.0
          %1385 = vmatpush.msra.mxu0 0.0
          %1386 = vmatpush.msra.mxu0 0.0
          %1387 = vmatpush.msra.mxu0 0.0
          %1388 = vmatpush.msra.mxu0 0.0
          %1389 = vmatpush.msra.mxu0 0.0
          %1390 = vmatpush.msra.mxu0 0.0
          %1391 = vmatpush.msra.mxu0 0.0
          %1392 = vmatpush.msra.mxu0 0.0
          %1393 = vmatpush.msra.mxu0 0.0
          %v1394 = vand.u32 %v1226, 4294901760
          %1395 = vmatpush.msra.mxu0 %v1394
          %v1396 = vand.u32 %v1220, 4294901760
          %1397 = vmatmul.f32.gmra.mxu0 %v1396
          %v1398 = vpop.f32.mrf.mxu0
          %v1399 = vadd.f32 %v1373, %v1398
          %v1400 = vand.u32 %v1223, 4294901760
          %1401 = vmatmul.f32.gmra.mxu0 %v1400
          %v1402 = vpop.f32.mrf.mxu0
          %v1403 = vadd.f32 %v1377, %v1402
          %1404 = vdwg.mxu0
          %v1405 = vadd.f32 %v1214, %v1399
          %v1407 = vrot.slane %v1399, 4
          %1408 = vrot.lane.b32.xlu0 %v1407, 127
          %v1409 = vpop.permute.xlu0 %1408
          %v1411 = vadd.f32 %v1405, %v1409
          %1413 = vrot.lane.b32.xlu0 %v1403, 126
          %v1414 = vpop.permute.xlu0 %1413
          %v1416 = vadd.f32 %v1411, %v1414
          %s1417 = sadd.s32 %s1007, 2
          %s1418 = smul.u32 %s1417, 4
          %s1419 = scalar_lea.vmem [#allocation2], %s1418
          %v1420 = vld [vmem:[%s1419] sm:$0xf]
          %v1422 = vsel %vm1015, %v984, 0
          %v1425 = vsel %vm1015, %v985, 0
          %v1428 = vsel %vm1022, %v1420, 0
          %1430 = vmatpush.msra.mxu0 0.0
          %1431 = vmatpush.msra.mxu0 0.0
          %1432 = vmatpush.msra.mxu0 0.0
          %1433 = vmatpush.msra.mxu0 0.0
          %1434 = vmatpush.msra.mxu0 0.0
          %1435 = vmatpush.msra.mxu0 0.0
          %1436 = vmatpush.msra.mxu0 0.0
          %1437 = vmatpush.msra.mxu0 0.0
          %1438 = vmatpush.msra.mxu0 0.0
          %1439 = vmatpush.msra.mxu0 0.0
          %1440 = vmatpush.msra.mxu0 0.0
          %1441 = vmatpush.msra.mxu0 0.0
          %1442 = vmatpush.msra.mxu0 0.0
          %1443 = vmatpush.msra.mxu0 0.0
          %1444 = vmatpush.msra.mxu0 0.0
          %v1445 = vand.u32 %v1428, 4294901760
          %1446 = vmatpush.msra.mxu0 %v1445
          %v1447 = vand.u32 %v1422, 4294901760
          %v1448 = vsub.f32 %v1422, %v1447
          %v1449 = vand.u32 %v1448, 4294901760
          %v1450 = vsub.f32 %v1448, %v1449
          %v1451 = vand.u32 %v1450, 4294901760
          %1452 = vmatmul.f32.gmra.mxu0 %v1451
          %v1453 = vpop.f32.mrf.mxu0
          %v1454 = vadd.f32 0.0, %v1453
          %v1455 = vand.u32 %v1425, 4294901760
          %v1456 = vsub.f32 %v1425, %v1455
          %v1457 = vand.u32 %v1456, 4294901760
          %v1458 = vsub.f32 %v1456, %v1457
          %v1459 = vand.u32 %v1458, 4294901760
          %1460 = vmatmul.f32.gmra.mxu0 %v1459
          %v1461 = vpop.f32.mrf.mxu0
          %v1462 = vadd.f32 0.0, %v1461
          %1463 = vdwg.mxu0
          %1464 = vmatpush.msra.mxu0 0.0
          %1465 = vmatpush.msra.mxu0 0.0
          %1466 = vmatpush.msra.mxu0 0.0
          %1467 = vmatpush.msra.mxu0 0.0
          %1468 = vmatpush.msra.mxu0 0.0
          %1469 = vmatpush.msra.mxu0 0.0
          %1470 = vmatpush.msra.mxu0 0.0
          %1471 = vmatpush.msra.mxu0 0.0
          %1472 = vmatpush.msra.mxu0 0.0
          %1473 = vmatpush.msra.mxu0 0.0
          %1474 = vmatpush.msra.mxu0 0.0
          %1475 = vmatpush.msra.mxu0 0.0
          %1476 = vmatpush.msra.mxu0 0.0
          %1477 = vmatpush.msra.mxu0 0.0
          %1478 = vmatpush.msra.mxu0 0.0
          %v1479 = vand.u32 %v1428, 4294901760
          %v1480 = vsub.f32 %v1428, %v1479
          %v1481 = vand.u32 %v1480, 4294901760
          %v1482 = vsub.f32 %v1480, %v1481
          %v1483 = vand.u32 %v1482, 4294901760
          %1484 = vmatpush.msra.mxu0 %v1483
          %v1485 = vand.u32 %v1422, 4294901760
          %1486 = vmatmul.f32.gmra.mxu0 %v1485
          %v1487 = vpop.f32.mrf.mxu0
          %v1488 = vadd.f32 %v1454, %v1487
          %v1489 = vand.u32 %v1425, 4294901760
          %1490 = vmatmul.f32.gmra.mxu0 %v1489
          %v1491 = vpop.f32.mrf.mxu0
          %v1492 = vadd.f32 %v1462, %v1491
          %1493 = vdwg.mxu0
          %1494 = vmatpush.msra.mxu0 0.0
          %1495 = vmatpush.msra.mxu0 0.0
          %1496 = vmatpush.msra.mxu0 0.0
          %1497 = vmatpush.msra.mxu0 0.0
          %1498 = vmatpush.msra.mxu0 0.0
          %1499 = vmatpush.msra.mxu0 0.0
          %1500 = vmatpush.msra.mxu0 0.0
          %1501 = vmatpush.msra.mxu0 0.0
          %1502 = vmatpush.msra.mxu0 0.0
          %1503 = vmatpush.msra.mxu0 0.0
          %1504 = vmatpush.msra.mxu0 0.0
          %1505 = vmatpush.msra.mxu0 0.0
          %1506 = vmatpush.msra.mxu0 0.0
          %1507 = vmatpush.msra.mxu0 0.0
          %1508 = vmatpush.msra.mxu0 0.0
          %v1509 = vand.u32 %v1428, 4294901760
          %v1510 = vsub.f32 %v1428, %v1509
          %1511 = vmatpush.msra.mxu0 %v1510
          %v1512 = vand.u32 %v1422, 4294901760
          %v1513 = vsub.f32 %v1422, %v1512
          %1514 = vmatmul.f32.gmra.mxu0 %v1513
          %v1515 = vpop.f32.mrf.mxu0
          %v1516 = vadd.f32 %v1488, %v1515
          %v1517 = vand.u32 %v1425, 4294901760
          %v1518 = vsub.f32 %v1425, %v1517
          %1519 = vmatmul.f32.gmra.mxu0 %v1518
          %v1520 = vpop.f32.mrf.mxu0
          %v1521 = vadd.f32 %v1492, %v1520
          %1522 = vdwg.mxu0
          %1523 = vmatpush.msra.mxu0 0.0
          %1524 = vmatpush.msra.mxu0 0.0
          %1525 = vmatpush.msra.mxu0 0.0
          %1526 = vmatpush.msra.mxu0 0.0
          %1527 = vmatpush.msra.mxu0 0.0
          %1528 = vmatpush.msra.mxu0 0.0
          %1529 = vmatpush.msra.mxu0 0.0
          %1530 = vmatpush.msra.mxu0 0.0
          %1531 = vmatpush.msra.mxu0 0.0
          %1532 = vmatpush.msra.mxu0 0.0
          %1533 = vmatpush.msra.mxu0 0.0
          %1534 = vmatpush.msra.mxu0 0.0
          %1535 = vmatpush.msra.mxu0 0.0
          %1536 = vmatpush.msra.mxu0 0.0
          %1537 = vmatpush.msra.mxu0 0.0
          %v1538 = vand.u32 %v1428, 4294901760
          %1539 = vmatpush.msra.mxu0 %v1538
          %v1540 = vand.u32 %v1422, 4294901760
          %v1541 = vsub.f32 %v1422, %v1540
          %v1542 = vand.u32 %v1541, 4294901760
          %1543 = vmatmul.f32.gmra.mxu0 %v1542
          %v1544 = vpop.f32.mrf.mxu0
          %v1545 = vadd.f32 %v1516, %v1544
          %v1546 = vand.u32 %v1425, 4294901760
          %v1547 = vsub.f32 %v1425, %v1546
          %v1548 = vand.u32 %v1547, 4294901760
          %1549 = vmatmul.f32.gmra.mxu0 %v1548
          %v1550 = vpop.f32.mrf.mxu0
          %v1551 = vadd.f32 %v1521, %v1550
          %1552 = vdwg.mxu0
          %1553 = vmatpush.msra.mxu0 0.0
          %1554 = vmatpush.msra.mxu0 0.0
          %1555 = vmatpush.msra.mxu0 0.0
          %1556 = vmatpush.msra.mxu0 0.0
          %1557 = vmatpush.msra.mxu0 0.0
          %1558 = vmatpush.msra.mxu0 0.0
          %1559 = vmatpush.msra.mxu0 0.0
          %1560 = vmatpush.msra.mxu0 0.0
          %1561 = vmatpush.msra.mxu0 0.0
          %1562 = vmatpush.msra.mxu0 0.0
          %1563 = vmatpush.msra.mxu0 0.0
          %1564 = vmatpush.msra.mxu0 0.0
          %1565 = vmatpush.msra.mxu0 0.0
          %1566 = vmatpush.msra.mxu0 0.0
          %1567 = vmatpush.msra.mxu0 0.0
          %v1568 = vand.u32 %v1428, 4294901760
          %v1569 = vsub.f32 %v1428, %v1568
          %v1570 = vand.u32 %v1569, 4294901760
          %1571 = vmatpush.msra.mxu0 %v1570
          %v1572 = vand.u32 %v1422, 4294901760
          %1573 = vmatmul.f32.gmra.mxu0 %v1572
          %v1574 = vpop.f32.mrf.mxu0
          %v1575 = vadd.f32 %v1545, %v1574
          %v1576 = vand.u32 %v1425, 4294901760
          %1577 = vmatmul.f32.gmra.mxu0 %v1576
          %v1578 = vpop.f32.mrf.mxu0
          %v1579 = vadd.f32 %v1551, %v1578
          %1580 = vdwg.mxu0
          %1581 = vmatpush.msra.mxu0 0.0
          %1582 = vmatpush.msra.mxu0 0.0
          %1583 = vmatpush.msra.mxu0 0.0
          %1584 = vmatpush.msra.mxu0 0.0
          %1585 = vmatpush.msra.mxu0 0.0
          %1586 = vmatpush.msra.mxu0 0.0
          %1587 = vmatpush.msra.mxu0 0.0
          %1588 = vmatpush.msra.mxu0 0.0
          %1589 = vmatpush.msra.mxu0 0.0
          %1590 = vmatpush.msra.mxu0 0.0
          %1591 = vmatpush.msra.mxu0 0.0
          %1592 = vmatpush.msra.mxu0 0.0
          %1593 = vmatpush.msra.mxu0 0.0
          %1594 = vmatpush.msra.mxu0 0.0
          %1595 = vmatpush.msra.mxu0 0.0
          %v1596 = vand.u32 %v1428, 4294901760
          %1597 = vmatpush.msra.mxu0 %v1596
          %v1598 = vand.u32 %v1422, 4294901760
          %1599 = vmatmul.f32.gmra.mxu0 %v1598
          %v1600 = vpop.f32.mrf.mxu0
          %v1601 = vadd.f32 %v1575, %v1600
          %v1602 = vand.u32 %v1425, 4294901760
          %1603 = vmatmul.f32.gmra.mxu0 %v1602
          %v1604 = vpop.f32.mrf.mxu0
          %v1605 = vadd.f32 %v1579, %v1604
          %1606 = vdwg.mxu0
          %v1607 = vadd.f32 %v1416, %v1601
          %v1609 = vrot.slane %v1601, 4
          %1610 = vrot.lane.b32.xlu0 %v1609, 127
          %v1611 = vpop.permute.xlu0 %1610
          %v1613 = vadd.f32 %v1607, %v1611
          %1615 = vrot.lane.b32.xlu0 %v1605, 126
          %v1616 = vpop.permute.xlu0 %1615
          %v1618 = vadd.f32 %v1613, %v1616
          %s1619 = scalar_lea.vmem [#allocation3], %s1012
          %v1620 = vld [vmem:[%s1619] sm:$0xf]
          %v1622 = vsel %vm1015, %v987, 0
          %v1625 = vsel %vm1015, %v988, 0
          %v1628 = vsel %vm1022, %v1620, 0
          %1630 = vmatpush.msra.mxu0 0.0
          %1631 = vmatpush.msra.mxu0 0.0
          %1632 = vmatpush.msra.mxu0 0.0
          %1633 = vmatpush.msra.mxu0 0.0
          %1634 = vmatpush.msra.mxu0 0.0
          %1635 = vmatpush.msra.mxu0 0.0
          %1636 = vmatpush.msra.mxu0 0.0
          %1637 = vmatpush.msra.mxu0 0.0
          %1638 = vmatpush.msra.mxu0 0.0
          %1639 = vmatpush.msra.mxu0 0.0
          %1640 = vmatpush.msra.mxu0 0.0
          %1641 = vmatpush.msra.mxu0 0.0
          %1642 = vmatpush.msra.mxu0 0.0
          %1643 = vmatpush.msra.mxu0 0.0
          %1644 = vmatpush.msra.mxu0 0.0
          %v1645 = vand.u32 %v1628, 4294901760
          %1646 = vmatpush.msra.mxu0 %v1645
          %v1647 = vand.u32 %v1622, 4294901760
          %v1648 = vsub.f32 %v1622, %v1647
          %v1649 = vand.u32 %v1648, 4294901760
          %v1650 = vsub.f32 %v1648, %v1649
          %v1651 = vand.u32 %v1650, 4294901760
          %1652 = vmatmul.f32.gmra.mxu0 %v1651
          %v1653 = vpop.f32.mrf.mxu0
          %v1654 = vadd.f32 0.0, %v1653
          %v1655 = vand.u32 %v1625, 4294901760
          %v1656 = vsub.f32 %v1625, %v1655
          %v1657 = vand.u32 %v1656, 4294901760
          %v1658 = vsub.f32 %v1656, %v1657
          %v1659 = vand.u32 %v1658, 4294901760
          %1660 = vmatmul.f32.gmra.mxu0 %v1659
          %v1661 = vpop.f32.mrf.mxu0
          %v1662 = vadd.f32 0.0, %v1661
          %1663 = vdwg.mxu0
          %1664 = vmatpush.msra.mxu0 0.0
          %1665 = vmatpush.msra.mxu0 0.0
          %1666 = vmatpush.msra.mxu0 0.0
          %1667 = vmatpush.msra.mxu0 0.0
          %1668 = vmatpush.msra.mxu0 0.0
          %1669 = vmatpush.msra.mxu0 0.0
          %1670 = vmatpush.msra.mxu0 0.0
          %1671 = vmatpush.msra.mxu0 0.0
          %1672 = vmatpush.msra.mxu0 0.0
          %1673 = vmatpush.msra.mxu0 0.0
          %1674 = vmatpush.msra.mxu0 0.0
          %1675 = vmatpush.msra.mxu0 0.0
          %1676 = vmatpush.msra.mxu0 0.0
          %1677 = vmatpush.msra.mxu0 0.0
          %1678 = vmatpush.msra.mxu0 0.0
          %v1679 = vand.u32 %v1628, 4294901760
          %v1680 = vsub.f32 %v1628, %v1679
          %v1681 = vand.u32 %v1680, 4294901760
          %v1682 = vsub.f32 %v1680, %v1681
          %v1683 = vand.u32 %v1682, 4294901760
          %1684 = vmatpush.msra.mxu0 %v1683
          %v1685 = vand.u32 %v1622, 4294901760
          %1686 = vmatmul.f32.gmra.mxu0 %v1685
          %v1687 = vpop.f32.mrf.mxu0
          %v1688 = vadd.f32 %v1654, %v1687
          %v1689 = vand.u32 %v1625, 4294901760
          %1690 = vmatmul.f32.gmra.mxu0 %v1689
          %v1691 = vpop.f32.mrf.mxu0
          %v1692 = vadd.f32 %v1662, %v1691
          %1693 = vdwg.mxu0
          %1694 = vmatpush.msra.mxu0 0.0
          %1695 = vmatpush.msra.mxu0 0.0
          %1696 = vmatpush.msra.mxu0 0.0
          %1697 = vmatpush.msra.mxu0 0.0
          %1698 = vmatpush.msra.mxu0 0.0
          %1699 = vmatpush.msra.mxu0 0.0
          %1700 = vmatpush.msra.mxu0 0.0
          %1701 = vmatpush.msra.mxu0 0.0
          %1702 = vmatpush.msra.mxu0 0.0
          %1703 = vmatpush.msra.mxu0 0.0
          %1704 = vmatpush.msra.mxu0 0.0
          %1705 = vmatpush.msra.mxu0 0.0
          %1706 = vmatpush.msra.mxu0 0.0
          %1707 = vmatpush.msra.mxu0 0.0
          %1708 = vmatpush.msra.mxu0 0.0
          %v1709 = vand.u32 %v1628, 4294901760
          %v1710 = vsub.f32 %v1628, %v1709
          %1711 = vmatpush.msra.mxu0 %v1710
          %v1712 = vand.u32 %v1622, 4294901760
          %v1713 = vsub.f32 %v1622, %v1712
          %1714 = vmatmul.f32.gmra.mxu0 %v1713
          %v1715 = vpop.f32.mrf.mxu0
          %v1716 = vadd.f32 %v1688, %v1715
          %v1717 = vand.u32 %v1625, 4294901760
          %v1718 = vsub.f32 %v1625, %v1717
          %1719 = vmatmul.f32.gmra.mxu0 %v1718
          %v1720 = vpop.f32.mrf.mxu0
          %v1721 = vadd.f32 %v1692, %v1720
          %1722 = vdwg.mxu0
          %1723 = vmatpush.msra.mxu0 0.0
          %1724 = vmatpush.msra.mxu0 0.0
          %1725 = vmatpush.msra.mxu0 0.0
          %1726 = vmatpush.msra.mxu0 0.0
          %1727 = vmatpush.msra.mxu0 0.0
          %1728 = vmatpush.msra.mxu0 0.0
          %1729 = vmatpush.msra.mxu0 0.0
          %1730 = vmatpush.msra.mxu0 0.0
          %1731 = vmatpush.msra.mxu0 0.0
          %1732 = vmatpush.msra.mxu0 0.0
          %1733 = vmatpush.msra.mxu0 0.0
          %1734 = vmatpush.msra.mxu0 0.0
          %1735 = vmatpush.msra.mxu0 0.0
          %1736 = vmatpush.msra.mxu0 0.0
          %1737 = vmatpush.msra.mxu0 0.0
          %v1738 = vand.u32 %v1628, 4294901760
          %1739 = vmatpush.msra.mxu0 %v1738
          %v1740 = vand.u32 %v1622, 4294901760
          %v1741 = vsub.f32 %v1622, %v1740
          %v1742 = vand.u32 %v1741, 4294901760
          %1743 = vmatmul.f32.gmra.mxu0 %v1742
          %v1744 = vpop.f32.mrf.mxu0
          %v1745 = vadd.f32 %v1716, %v1744
          %v1746 = vand.u32 %v1625, 4294901760
          %v1747 = vsub.f32 %v1625, %v1746
          %v1748 = vand.u32 %v1747, 4294901760
          %1749 = vmatmul.f32.gmra.mxu0 %v1748
          %v1750 = vpop.f32.mrf.mxu0
          %v1751 = vadd.f32 %v1721, %v1750
          %1752 = vdwg.mxu0
          %1753 = vmatpush.msra.mxu0 0.0
          %1754 = vmatpush.msra.mxu0 0.0
          %1755 = vmatpush.msra.mxu0 0.0
          %1756 = vmatpush.msra.mxu0 0.0
          %1757 = vmatpush.msra.mxu0 0.0
          %1758 = vmatpush.msra.mxu0 0.0
          %1759 = vmatpush.msra.mxu0 0.0
          %1760 = vmatpush.msra.mxu0 0.0
          %1761 = vmatpush.msra.mxu0 0.0
          %1762 = vmatpush.msra.mxu0 0.0
          %1763 = vmatpush.msra.mxu0 0.0
          %1764 = vmatpush.msra.mxu0 0.0
          %1765 = vmatpush.msra.mxu0 0.0
          %1766 = vmatpush.msra.mxu0 0.0
          %1767 = vmatpush.msra.mxu0 0.0
          %v1768 = vand.u32 %v1628, 4294901760
          %v1769 = vsub.f32 %v1628, %v1768
          %v1770 = vand.u32 %v1769, 4294901760
          %1771 = vmatpush.msra.mxu0 %v1770
          %v1772 = vand.u32 %v1622, 4294901760
          %1773 = vmatmul.f32.gmra.mxu0 %v1772
          %v1774 = vpop.f32.mrf.mxu0
          %v1775 = vadd.f32 %v1745, %v1774
          %v1776 = vand.u32 %v1625, 4294901760
          %1777 = vmatmul.f32.gmra.mxu0 %v1776
          %v1778 = vpop.f32.mrf.mxu0
          %v1779 = vadd.f32 %v1751, %v1778
          %1780 = vdwg.mxu0
          %1781 = vmatpush.msra.mxu0 0.0
          %1782 = vmatpush.msra.mxu0 0.0
          %1783 = vmatpush.msra.mxu0 0.0
          %1784 = vmatpush.msra.mxu0 0.0
          %1785 = vmatpush.msra.mxu0 0.0
          %1786 = vmatpush.msra.mxu0 0.0
          %1787 = vmatpush.msra.mxu0 0.0
          %1788 = vmatpush.msra.mxu0 0.0
          %1789 = vmatpush.msra.mxu0 0.0
          %1790 = vmatpush.msra.mxu0 0.0
          %1791 = vmatpush.msra.mxu0 0.0
          %1792 = vmatpush.msra.mxu0 0.0
          %1793 = vmatpush.msra.mxu0 0.0
          %1794 = vmatpush.msra.mxu0 0.0
          %1795 = vmatpush.msra.mxu0 0.0
          %v1796 = vand.u32 %v1628, 4294901760
          %1797 = vmatpush.msra.mxu0 %v1796
          %v1798 = vand.u32 %v1622, 4294901760
          %1799 = vmatmul.f32.gmra.mxu0 %v1798
          %v1800 = vpop.f32.mrf.mxu0
          %v1801 = vadd.f32 %v1775, %v1800
          %v1802 = vand.u32 %v1625, 4294901760
          %1803 = vmatmul.f32.gmra.mxu0 %v1802
          %v1804 = vpop.f32.mrf.mxu0
          %v1805 = vadd.f32 %v1779, %v1804
          %1806 = vdwg.mxu0
          %v1807 = vadd.f32 %v1618, %v1801
          %v1809 = vrot.slane %v1801, 4
          %1810 = vrot.lane.b32.xlu0 %v1809, 127
          %v1811 = vpop.permute.xlu0 %1810
          %v1813 = vadd.f32 %v1807, %v1811
          %1815 = vrot.lane.b32.xlu0 %v1805, 126
          %v1816 = vpop.permute.xlu0 %1815
          %v1818 = vadd.f32 %v1813, %v1816
          %s1819 = scalar_lea.vmem [#allocation3], %s1216
          %v1820 = vld [vmem:[%s1819] sm:$0xf]
          %v1822 = vsel %vm1015, %v990, 0
          %v1825 = vsel %vm1015, %v991, 0
          %v1828 = vsel %vm1022, %v1820, 0
          %1830 = vmatpush.msra.mxu0 0.0
          %1831 = vmatpush.msra.mxu0 0.0
          %1832 = vmatpush.msra.mxu0 0.0
          %1833 = vmatpush.msra.mxu0 0.0
          %1834 = vmatpush.msra.mxu0 0.0
          %1835 = vmatpush.msra.mxu0 0.0
          %1836 = vmatpush.msra.mxu0 0.0
          %1837 = vmatpush.msra.mxu0 0.0
          %1838 = vmatpush.msra.mxu0 0.0
          %1839 = vmatpush.msra.mxu0 0.0
          %1840 = vmatpush.msra.mxu0 0.0
          %1841 = vmatpush.msra.mxu0 0.0
          %1842 = vmatpush.msra.mxu0 0.0
          %1843 = vmatpush.msra.mxu0 0.0
          %1844 = vmatpush.msra.mxu0 0.0
          %v1845 = vand.u32 %v1828, 4294901760
          %1846 = vmatpush.msra.mxu0 %v1845
          %v1847 = vand.u32 %v1822, 4294901760
          %v1848 = vsub.f32 %v1822, %v1847
          %v1849 = vand.u32 %v1848, 4294901760
          %v1850 = vsub.f32 %v1848, %v1849
          %v1851 = vand.u32 %v1850, 4294901760
          %1852 = vmatmul.f32.gmra.mxu0 %v1851
          %v1853 = vpop.f32.mrf.mxu0
          %v1854 = vadd.f32 0.0, %v1853
          %v1855 = vand.u32 %v1825, 4294901760
          %v1856 = vsub.f32 %v1825, %v1855
          %v1857 = vand.u32 %v1856, 4294901760
          %v1858 = vsub.f32 %v1856, %v1857
          %v1859 = vand.u32 %v1858, 4294901760
          %1860 = vmatmul.f32.gmra.mxu0 %v1859
          %v1861 = vpop.f32.mrf.mxu0
          %v1862 = vadd.f32 0.0, %v1861
          %1863 = vdwg.mxu0
          %1864 = vmatpush.msra.mxu0 0.0
          %1865 = vmatpush.msra.mxu0 0.0
          %1866 = vmatpush.msra.mxu0 0.0
          %1867 = vmatpush.msra.mxu0 0.0
          %1868 = vmatpush.msra.mxu0 0.0
          %1869 = vmatpush.msra.mxu0 0.0
          %1870 = vmatpush.msra.mxu0 0.0
          %1871 = vmatpush.msra.mxu0 0.0
          %1872 = vmatpush.msra.mxu0 0.0
          %1873 = vmatpush.msra.mxu0 0.0
          %1874 = vmatpush.msra.mxu0 0.0
          %1875 = vmatpush.msra.mxu0 0.0
          %1876 = vmatpush.msra.mxu0 0.0
          %1877 = vmatpush.msra.mxu0 0.0
          %1878 = vmatpush.msra.mxu0 0.0
          %v1879 = vand.u32 %v1828, 4294901760
          %v1880 = vsub.f32 %v1828, %v1879
          %v1881 = vand.u32 %v1880, 4294901760
          %v1882 = vsub.f32 %v1880, %v1881
          %v1883 = vand.u32 %v1882, 4294901760
          %1884 = vmatpush.msra.mxu0 %v1883
          %v1885 = vand.u32 %v1822, 4294901760
          %1886 = vmatmul.f32.gmra.mxu0 %v1885
          %v1887 = vpop.f32.mrf.mxu0
          %v1888 = vadd.f32 %v1854, %v1887
          %v1889 = vand.u32 %v1825, 4294901760
          %1890 = vmatmul.f32.gmra.mxu0 %v1889
          %v1891 = vpop.f32.mrf.mxu0
          %v1892 = vadd.f32 %v1862, %v1891
          %1893 = vdwg.mxu0
          %1894 = vmatpush.msra.mxu0 0.0
          %1895 = vmatpush.msra.mxu0 0.0
          %1896 = vmatpush.msra.mxu0 0.0
          %1897 = vmatpush.msra.mxu0 0.0
          %1898 = vmatpush.msra.mxu0 0.0
          %1899 = vmatpush.msra.mxu0 0.0
          %1900 = vmatpush.msra.mxu0 0.0
          %1901 = vmatpush.msra.mxu0 0.0
          %1902 = vmatpush.msra.mxu0 0.0
          %1903 = vmatpush.msra.mxu0 0.0
          %1904 = vmatpush.msra.mxu0 0.0
          %1905 = vmatpush.msra.mxu0 0.0
          %1906 = vmatpush.msra.mxu0 0.0
          %1907 = vmatpush.msra.mxu0 0.0
          %1908 = vmatpush.msra.mxu0 0.0
          %v1909 = vand.u32 %v1828, 4294901760
          %v1910 = vsub.f32 %v1828, %v1909
          %1911 = vmatpush.msra.mxu0 %v1910
          %v1912 = vand.u32 %v1822, 4294901760
          %v1913 = vsub.f32 %v1822, %v1912
          %1914 = vmatmul.f32.gmra.mxu0 %v1913
          %v1915 = vpop.f32.mrf.mxu0
          %v1916 = vadd.f32 %v1888, %v1915
          %v1917 = vand.u32 %v1825, 4294901760
          %v1918 = vsub.f32 %v1825, %v1917
          %1919 = vmatmul.f32.gmra.mxu0 %v1918
          %v1920 = vpop.f32.mrf.mxu0
          %v1921 = vadd.f32 %v1892, %v1920
          %1922 = vdwg.mxu0
          %1923 = vmatpush.msra.mxu0 0.0
          %1924 = vmatpush.msra.mxu0 0.0
          %1925 = vmatpush.msra.mxu0 0.0
          %1926 = vmatpush.msra.mxu0 0.0
          %1927 = vmatpush.msra.mxu0 0.0
          %1928 = vmatpush.msra.mxu0 0.0
          %1929 = vmatpush.msra.mxu0 0.0
          %1930 = vmatpush.msra.mxu0 0.0
          %1931 = vmatpush.msra.mxu0 0.0
          %1932 = vmatpush.msra.mxu0 0.0
          %1933 = vmatpush.msra.mxu0 0.0
          %1934 = vmatpush.msra.mxu0 0.0
          %1935 = vmatpush.msra.mxu0 0.0
          %1936 = vmatpush.msra.mxu0 0.0
          %1937 = vmatpush.msra.mxu0 0.0
          %v1938 = vand.u32 %v1828, 4294901760
          %1939 = vmatpush.msra.mxu0 %v1938
          %v1940 = vand.u32 %v1822, 4294901760
          %v1941 = vsub.f32 %v1822, %v1940
          %v1942 = vand.u32 %v1941, 4294901760
          %1943 = vmatmul.f32.gmra.mxu0 %v1942
          %v1944 = vpop.f32.mrf.mxu0
          %v1945 = vadd.f32 %v1916, %v1944
          %v1946 = vand.u32 %v1825, 4294901760
          %v1947 = vsub.f32 %v1825, %v1946
          %v1948 = vand.u32 %v1947, 4294901760
          %1949 = vmatmul.f32.gmra.mxu0 %v1948
          %v1950 = vpop.f32.mrf.mxu0
          %v1951 = vadd.f32 %v1921, %v1950
          %1952 = vdwg.mxu0
          %1953 = vmatpush.msra.mxu0 0.0
          %1954 = vmatpush.msra.mxu0 0.0
          %1955 = vmatpush.msra.mxu0 0.0
          %1956 = vmatpush.msra.mxu0 0.0
          %1957 = vmatpush.msra.mxu0 0.0
          %1958 = vmatpush.msra.mxu0 0.0
          %1959 = vmatpush.msra.mxu0 0.0
          %1960 = vmatpush.msra.mxu0 0.0
          %1961 = vmatpush.msra.mxu0 0.0
          %1962 = vmatpush.msra.mxu0 0.0
          %1963 = vmatpush.msra.mxu0 0.0
          %1964 = vmatpush.msra.mxu0 0.0
          %1965 = vmatpush.msra.mxu0 0.0
          %1966 = vmatpush.msra.mxu0 0.0
          %1967 = vmatpush.msra.mxu0 0.0
          %v1968 = vand.u32 %v1828, 4294901760
          %v1969 = vsub.f32 %v1828, %v1968
          %v1970 = vand.u32 %v1969, 4294901760
          %1971 = vmatpush.msra.mxu0 %v1970
          %v1972 = vand.u32 %v1822, 4294901760
          %1973 = vmatmul.f32.gmra.mxu0 %v1972
          %v1974 = vpop.f32.mrf.mxu0
          %v1975 = vadd.f32 %v1945, %v1974
          %v1976 = vand.u32 %v1825, 4294901760
          %1977 = vmatmul.f32.gmra.mxu0 %v1976
          %v1978 = vpop.f32.mrf.mxu0
          %v1979 = vadd.f32 %v1951, %v1978
          %1980 = vdwg.mxu0
          %1981 = vmatpush.msra.mxu0 0.0
          %1982 = vmatpush.msra.mxu0 0.0
          %1983 = vmatpush.msra.mxu0 0.0
          %1984 = vmatpush.msra.mxu0 0.0
          %1985 = vmatpush.msra.mxu0 0.0
          %1986 = vmatpush.msra.mxu0 0.0
          %1987 = vmatpush.msra.mxu0 0.0
          %1988 = vmatpush.msra.mxu0 0.0
          %1989 = vmatpush.msra.mxu0 0.0
          %1990 = vmatpush.msra.mxu0 0.0
          %1991 = vmatpush.msra.mxu0 0.0
          %1992 = vmatpush.msra.mxu0 0.0
          %1993 = vmatpush.msra.mxu0 0.0
          %1994 = vmatpush.msra.mxu0 0.0
          %1995 = vmatpush.msra.mxu0 0.0
          %v1996 = vand.u32 %v1828, 4294901760
          %1997 = vmatpush.msra.mxu0 %v1996
          %v1998 = vand.u32 %v1822, 4294901760
          %1999 = vmatmul.f32.gmra.mxu0 %v1998
          %v2000 = vpop.f32.mrf.mxu0
          %v2001 = vadd.f32 %v1975, %v2000
          %v2002 = vand.u32 %v1825, 4294901760
          %2003 = vmatmul.f32.gmra.mxu0 %v2002
          %v2004 = vpop.f32.mrf.mxu0
          %v2005 = vadd.f32 %v1979, %v2004
          %2006 = vdwg.mxu0
          %v2007 = vadd.f32 %v1818, %v2001
          %v2009 = vrot.slane %v2001, 4
          %2010 = vrot.lane.b32.xlu0 %v2009, 127
          %v2011 = vpop.permute.xlu0 %2010
          %v2013 = vadd.f32 %v2007, %v2011
          %2015 = vrot.lane.b32.xlu0 %v2005, 126
          %v2016 = vpop.permute.xlu0 %2015
          %v2018 = vadd.f32 %v2013, %v2016
          %s2019 = scalar_lea.vmem [#allocation3], %s1418
          %v2020 = vld [vmem:[%s2019] sm:$0xf]
          %v2022 = vsel %vm1015, %v993, 0
          %v2025 = vsel %vm1015, %v994, 0
          %v2028 = vsel %vm1022, %v2020, 0
          %2030 = vmatpush.msra.mxu0 0.0
          %2031 = vmatpush.msra.mxu0 0.0
          %2032 = vmatpush.msra.mxu0 0.0
          %2033 = vmatpush.msra.mxu0 0.0
          %2034 = vmatpush.msra.mxu0 0.0
          %2035 = vmatpush.msra.mxu0 0.0
          %2036 = vmatpush.msra.mxu0 0.0
          %2037 = vmatpush.msra.mxu0 0.0
          %2038 = vmatpush.msra.mxu0 0.0
          %2039 = vmatpush.msra.mxu0 0.0
          %2040 = vmatpush.msra.mxu0 0.0
          %2041 = vmatpush.msra.mxu0 0.0
          %2042 = vmatpush.msra.mxu0 0.0
          %2043 = vmatpush.msra.mxu0 0.0
          %2044 = vmatpush.msra.mxu0 0.0
          %v2045 = vand.u32 %v2028, 4294901760
          %2046 = vmatpush.msra.mxu0 %v2045
          %v2047 = vand.u32 %v2022, 4294901760
          %v2048 = vsub.f32 %v2022, %v2047
          %v2049 = vand.u32 %v2048, 4294901760
          %v2050 = vsub.f32 %v2048, %v2049
          %v2051 = vand.u32 %v2050, 4294901760
          %2052 = vmatmul.f32.gmra.mxu0 %v2051
          %v2053 = vpop.f32.mrf.mxu0
          %v2054 = vadd.f32 0.0, %v2053
          %v2055 = vand.u32 %v2025, 4294901760
          %v2056 = vsub.f32 %v2025, %v2055
          %v2057 = vand.u32 %v2056, 4294901760
          %v2058 = vsub.f32 %v2056, %v2057
          %v2059 = vand.u32 %v2058, 4294901760
          %2060 = vmatmul.f32.gmra.mxu0 %v2059
          %v2061 = vpop.f32.mrf.mxu0
          %v2062 = vadd.f32 0.0, %v2061
          %2063 = vdwg.mxu0
          %2064 = vmatpush.msra.mxu0 0.0
          %2065 = vmatpush.msra.mxu0 0.0
          %2066 = vmatpush.msra.mxu0 0.0
          %2067 = vmatpush.msra.mxu0 0.0
          %2068 = vmatpush.msra.mxu0 0.0
          %2069 = vmatpush.msra.mxu0 0.0
          %2070 = vmatpush.msra.mxu0 0.0
          %2071 = vmatpush.msra.mxu0 0.0
          %2072 = vmatpush.msra.mxu0 0.0
          %2073 = vmatpush.msra.mxu0 0.0
          %2074 = vmatpush.msra.mxu0 0.0
          %2075 = vmatpush.msra.mxu0 0.0
          %2076 = vmatpush.msra.mxu0 0.0
          %2077 = vmatpush.msra.mxu0 0.0
          %2078 = vmatpush.msra.mxu0 0.0
          %v2079 = vand.u32 %v2028, 4294901760
          %v2080 = vsub.f32 %v2028, %v2079
          %v2081 = vand.u32 %v2080, 4294901760
          %v2082 = vsub.f32 %v2080, %v2081
          %v2083 = vand.u32 %v2082, 4294901760
          %2084 = vmatpush.msra.mxu0 %v2083
          %v2085 = vand.u32 %v2022, 4294901760
          %2086 = vmatmul.f32.gmra.mxu0 %v2085
          %v2087 = vpop.f32.mrf.mxu0
          %v2088 = vadd.f32 %v2054, %v2087
          %v2089 = vand.u32 %v2025, 4294901760
          %2090 = vmatmul.f32.gmra.mxu0 %v2089
          %v2091 = vpop.f32.mrf.mxu0
          %v2092 = vadd.f32 %v2062, %v2091
          %2093 = vdwg.mxu0
          %2094 = vmatpush.msra.mxu0 0.0
          %2095 = vmatpush.msra.mxu0 0.0
          %2096 = vmatpush.msra.mxu0 0.0
          %2097 = vmatpush.msra.mxu0 0.0
          %2098 = vmatpush.msra.mxu0 0.0
          %2099 = vmatpush.msra.mxu0 0.0
          %2100 = vmatpush.msra.mxu0 0.0
          %2101 = vmatpush.msra.mxu0 0.0
          %2102 = vmatpush.msra.mxu0 0.0
          %2103 = vmatpush.msra.mxu0 0.0
          %2104 = vmatpush.msra.mxu0 0.0
          %2105 = vmatpush.msra.mxu0 0.0
          %2106 = vmatpush.msra.mxu0 0.0
          %2107 = vmatpush.msra.mxu0 0.0
          %2108 = vmatpush.msra.mxu0 0.0
          %v2109 = vand.u32 %v2028, 4294901760
          %v2110 = vsub.f32 %v2028, %v2109
          %2111 = vmatpush.msra.mxu0 %v2110
          %v2112 = vand.u32 %v2022, 4294901760
          %v2113 = vsub.f32 %v2022, %v2112
          %2114 = vmatmul.f32.gmra.mxu0 %v2113
          %v2115 = vpop.f32.mrf.mxu0
          %v2116 = vadd.f32 %v2088, %v2115
          %v2117 = vand.u32 %v2025, 4294901760
          %v2118 = vsub.f32 %v2025, %v2117
          %2119 = vmatmul.f32.gmra.mxu0 %v2118
          %v2120 = vpop.f32.mrf.mxu0
          %v2121 = vadd.f32 %v2092, %v2120
          %2122 = vdwg.mxu0
          %2123 = vmatpush.msra.mxu0 0.0
          %2124 = vmatpush.msra.mxu0 0.0
          %2125 = vmatpush.msra.mxu0 0.0
          %2126 = vmatpush.msra.mxu0 0.0
          %2127 = vmatpush.msra.mxu0 0.0
          %2128 = vmatpush.msra.mxu0 0.0
          %2129 = vmatpush.msra.mxu0 0.0
          %2130 = vmatpush.msra.mxu0 0.0
          %2131 = vmatpush.msra.mxu0 0.0
          %2132 = vmatpush.msra.mxu0 0.0
          %2133 = vmatpush.msra.mxu0 0.0
          %2134 = vmatpush.msra.mxu0 0.0
          %2135 = vmatpush.msra.mxu0 0.0
          %2136 = vmatpush.msra.mxu0 0.0
          %2137 = vmatpush.msra.mxu0 0.0
          %v2138 = vand.u32 %v2028, 4294901760
          %2139 = vmatpush.msra.mxu0 %v2138
          %v2140 = vand.u32 %v2022, 4294901760
          %v2141 = vsub.f32 %v2022, %v2140
          %v2142 = vand.u32 %v2141, 4294901760
          %2143 = vmatmul.f32.gmra.mxu0 %v2142
          %v2144 = vpop.f32.mrf.mxu0
          %v2145 = vadd.f32 %v2116, %v2144
          %v2146 = vand.u32 %v2025, 4294901760
          %v2147 = vsub.f32 %v2025, %v2146
          %v2148 = vand.u32 %v2147, 4294901760
          %2149 = vmatmul.f32.gmra.mxu0 %v2148
          %v2150 = vpop.f32.mrf.mxu0
          %v2151 = vadd.f32 %v2121, %v2150
          %2152 = vdwg.mxu0
          %2153 = vmatpush.msra.mxu0 0.0
          %2154 = vmatpush.msra.mxu0 0.0
          %2155 = vmatpush.msra.mxu0 0.0
          %2156 = vmatpush.msra.mxu0 0.0
          %2157 = vmatpush.msra.mxu0 0.0
          %2158 = vmatpush.msra.mxu0 0.0
          %2159 = vmatpush.msra.mxu0 0.0
          %2160 = vmatpush.msra.mxu0 0.0
          %2161 = vmatpush.msra.mxu0 0.0
          %2162 = vmatpush.msra.mxu0 0.0
          %2163 = vmatpush.msra.mxu0 0.0
          %2164 = vmatpush.msra.mxu0 0.0
          %2165 = vmatpush.msra.mxu0 0.0
          %2166 = vmatpush.msra.mxu0 0.0
          %2167 = vmatpush.msra.mxu0 0.0
          %v2168 = vand.u32 %v2028, 4294901760
          %v2169 = vsub.f32 %v2028, %v2168
          %v2170 = vand.u32 %v2169, 4294901760
          %2171 = vmatpush.msra.mxu0 %v2170
          %v2172 = vand.u32 %v2022, 4294901760
          %2173 = vmatmul.f32.gmra.mxu0 %v2172
          %v2174 = vpop.f32.mrf.mxu0
          %v2175 = vadd.f32 %v2145, %v2174
          %v2176 = vand.u32 %v2025, 4294901760
          %2177 = vmatmul.f32.gmra.mxu0 %v2176
          %v2178 = vpop.f32.mrf.mxu0
          %v2179 = vadd.f32 %v2151, %v2178
          %2180 = vdwg.mxu0
          %2181 = vmatpush.msra.mxu0 0.0
          %2182 = vmatpush.msra.mxu0 0.0
          %2183 = vmatpush.msra.mxu0 0.0
          %2184 = vmatpush.msra.mxu0 0.0
          %2185 = vmatpush.msra.mxu0 0.0
          %2186 = vmatpush.msra.mxu0 0.0
          %2187 = vmatpush.msra.mxu0 0.0
          %2188 = vmatpush.msra.mxu0 0.0
          %2189 = vmatpush.msra.mxu0 0.0
          %2190 = vmatpush.msra.mxu0 0.0
          %2191 = vmatpush.msra.mxu0 0.0
          %2192 = vmatpush.msra.mxu0 0.0
          %2193 = vmatpush.msra.mxu0 0.0
          %2194 = vmatpush.msra.mxu0 0.0
          %2195 = vmatpush.msra.mxu0 0.0
          %v2196 = vand.u32 %v2028, 4294901760
          %2197 = vmatpush.msra.mxu0 %v2196
          %v2198 = vand.u32 %v2022, 4294901760
          %2199 = vmatmul.f32.gmra.mxu0 %v2198
          %v2200 = vpop.f32.mrf.mxu0
          %v2201 = vadd.f32 %v2175, %v2200
          %v2202 = vand.u32 %v2025, 4294901760
          %2203 = vmatmul.f32.gmra.mxu0 %v2202
          %v2204 = vpop.f32.mrf.mxu0
          %v2205 = vadd.f32 %v2179, %v2204
          %2206 = vdwg.mxu0
          %v2207 = vadd.f32 %v2018, %v2201
          %v2209 = vrot.slane %v2201, 4
          %2210 = vrot.lane.b32.xlu0 %v2209, 127
          %v2211 = vpop.permute.xlu0 %2210
          %v2213 = vadd.f32 %v2207, %v2211
          %2215 = vrot.lane.b32.xlu0 %v2205, 126
          %v2216 = vpop.permute.xlu0 %2215
          %v2218 = vadd.f32 %v2213, %v2216
          %s2219 = scalar_lea.vmem [#allocation4], %s1012
          %v2220 = vld [vmem:[%s2219] sm:$0xf]
          %v2222 = vsel %vm1015, %v996, 0
          %v2225 = vsel %vm1015, %v997, 0
          %v2228 = vsel %vm1022, %v2220, 0
          %2230 = vmatpush.msra.mxu0 0.0
          %2231 = vmatpush.msra.mxu0 0.0
          %2232 = vmatpush.msra.mxu0 0.0
          %2233 = vmatpush.msra.mxu0 0.0
          %2234 = vmatpush.msra.mxu0 0.0
          %2235 = vmatpush.msra.mxu0 0.0
          %2236 = vmatpush.msra.mxu0 0.0
          %2237 = vmatpush.msra.mxu0 0.0
          %2238 = vmatpush.msra.mxu0 0.0
          %2239 = vmatpush.msra.mxu0 0.0
          %2240 = vmatpush.msra.mxu0 0.0
          %2241 = vmatpush.msra.mxu0 0.0
          %2242 = vmatpush.msra.mxu0 0.0
          %2243 = vmatpush.msra.mxu0 0.0
          %2244 = vmatpush.msra.mxu0 0.0
          %v2245 = vand.u32 %v2228, 4294901760
          %2246 = vmatpush.msra.mxu0 %v2245
          %v2247 = vand.u32 %v2222, 4294901760
          %v2248 = vsub.f32 %v2222, %v2247
          %v2249 = vand.u32 %v2248, 4294901760
          %v2250 = vsub.f32 %v2248, %v2249
          %v2251 = vand.u32 %v2250, 4294901760
          %2252 = vmatmul.f32.gmra.mxu0 %v2251
          %v2253 = vpop.f32.mrf.mxu0
          %v2254 = vadd.f32 0.0, %v2253
          %v2255 = vand.u32 %v2225, 4294901760
          %v2256 = vsub.f32 %v2225, %v2255
          %v2257 = vand.u32 %v2256, 4294901760
          %v2258 = vsub.f32 %v2256, %v2257
          %v2259 = vand.u32 %v2258, 4294901760
          %2260 = vmatmul.f32.gmra.mxu0 %v2259
          %v2261 = vpop.f32.mrf.mxu0
          %v2262 = vadd.f32 0.0, %v2261
          %2263 = vdwg.mxu0
          %2264 = vmatpush.msra.mxu0 0.0
          %2265 = vmatpush.msra.mxu0 0.0
          %2266 = vmatpush.msra.mxu0 0.0
          %2267 = vmatpush.msra.mxu0 0.0
          %2268 = vmatpush.msra.mxu0 0.0
          %2269 = vmatpush.msra.mxu0 0.0
          %2270 = vmatpush.msra.mxu0 0.0
          %2271 = vmatpush.msra.mxu0 0.0
          %2272 = vmatpush.msra.mxu0 0.0
          %2273 = vmatpush.msra.mxu0 0.0
          %2274 = vmatpush.msra.mxu0 0.0
          %2275 = vmatpush.msra.mxu0 0.0
          %2276 = vmatpush.msra.mxu0 0.0
          %2277 = vmatpush.msra.mxu0 0.0
          %2278 = vmatpush.msra.mxu0 0.0
          %v2279 = vand.u32 %v2228, 4294901760
          %v2280 = vsub.f32 %v2228, %v2279
          %v2281 = vand.u32 %v2280, 4294901760
          %v2282 = vsub.f32 %v2280, %v2281
          %v2283 = vand.u32 %v2282, 4294901760
          %2284 = vmatpush.msra.mxu0 %v2283
          %v2285 = vand.u32 %v2222, 4294901760
          %2286 = vmatmul.f32.gmra.mxu0 %v2285
          %v2287 = vpop.f32.mrf.mxu0
          %v2288 = vadd.f32 %v2254, %v2287
          %v2289 = vand.u32 %v2225, 4294901760
          %2290 = vmatmul.f32.gmra.mxu0 %v2289
          %v2291 = vpop.f32.mrf.mxu0
          %v2292 = vadd.f32 %v2262, %v2291
          %2293 = vdwg.mxu0
          %2294 = vmatpush.msra.mxu0 0.0
          %2295 = vmatpush.msra.mxu0 0.0
          %2296 = vmatpush.msra.mxu0 0.0
          %2297 = vmatpush.msra.mxu0 0.0
          %2298 = vmatpush.msra.mxu0 0.0
          %2299 = vmatpush.msra.mxu0 0.0
          %2300 = vmatpush.msra.mxu0 0.0
          %2301 = vmatpush.msra.mxu0 0.0
          %2302 = vmatpush.msra.mxu0 0.0
          %2303 = vmatpush.msra.mxu0 0.0
          %2304 = vmatpush.msra.mxu0 0.0
          %2305 = vmatpush.msra.mxu0 0.0
          %2306 = vmatpush.msra.mxu0 0.0
          %2307 = vmatpush.msra.mxu0 0.0
          %2308 = vmatpush.msra.mxu0 0.0
          %v2309 = vand.u32 %v2228, 4294901760
          %v2310 = vsub.f32 %v2228, %v2309
          %2311 = vmatpush.msra.mxu0 %v2310
          %v2312 = vand.u32 %v2222, 4294901760
          %v2313 = vsub.f32 %v2222, %v2312
          %2314 = vmatmul.f32.gmra.mxu0 %v2313
          %v2315 = vpop.f32.mrf.mxu0
          %v2316 = vadd.f32 %v2288, %v2315
          %v2317 = vand.u32 %v2225, 4294901760
          %v2318 = vsub.f32 %v2225, %v2317
          %2319 = vmatmul.f32.gmra.mxu0 %v2318
          %v2320 = vpop.f32.mrf.mxu0
          %v2321 = vadd.f32 %v2292, %v2320
          %2322 = vdwg.mxu0
          %2323 = vmatpush.msra.mxu0 0.0
          %2324 = vmatpush.msra.mxu0 0.0
          %2325 = vmatpush.msra.mxu0 0.0
          %2326 = vmatpush.msra.mxu0 0.0
          %2327 = vmatpush.msra.mxu0 0.0
          %2328 = vmatpush.msra.mxu0 0.0
          %2329 = vmatpush.msra.mxu0 0.0
          %2330 = vmatpush.msra.mxu0 0.0
          %2331 = vmatpush.msra.mxu0 0.0
          %2332 = vmatpush.msra.mxu0 0.0
          %2333 = vmatpush.msra.mxu0 0.0
          %2334 = vmatpush.msra.mxu0 0.0
          %2335 = vmatpush.msra.mxu0 0.0
          %2336 = vmatpush.msra.mxu0 0.0
          %2337 = vmatpush.msra.mxu0 0.0
          %v2338 = vand.u32 %v2228, 4294901760
          %2339 = vmatpush.msra.mxu0 %v2338
          %v2340 = vand.u32 %v2222, 4294901760
          %v2341 = vsub.f32 %v2222, %v2340
          %v2342 = vand.u32 %v2341, 4294901760
          %2343 = vmatmul.f32.gmra.mxu0 %v2342
          %v2344 = vpop.f32.mrf.mxu0
          %v2345 = vadd.f32 %v2316, %v2344
          %v2346 = vand.u32 %v2225, 4294901760
          %v2347 = vsub.f32 %v2225, %v2346
          %v2348 = vand.u32 %v2347, 4294901760
          %2349 = vmatmul.f32.gmra.mxu0 %v2348
          %v2350 = vpop.f32.mrf.mxu0
          %v2351 = vadd.f32 %v2321, %v2350
          %2352 = vdwg.mxu0
          %2353 = vmatpush.msra.mxu0 0.0
          %2354 = vmatpush.msra.mxu0 0.0
          %2355 = vmatpush.msra.mxu0 0.0
          %2356 = vmatpush.msra.mxu0 0.0
          %2357 = vmatpush.msra.mxu0 0.0
          %2358 = vmatpush.msra.mxu0 0.0
          %2359 = vmatpush.msra.mxu0 0.0
          %2360 = vmatpush.msra.mxu0 0.0
          %2361 = vmatpush.msra.mxu0 0.0
          %2362 = vmatpush.msra.mxu0 0.0
          %2363 = vmatpush.msra.mxu0 0.0
          %2364 = vmatpush.msra.mxu0 0.0
          %2365 = vmatpush.msra.mxu0 0.0
          %2366 = vmatpush.msra.mxu0 0.0
          %2367 = vmatpush.msra.mxu0 0.0
          %v2368 = vand.u32 %v2228, 4294901760
          %v2369 = vsub.f32 %v2228, %v2368
          %v2370 = vand.u32 %v2369, 4294901760
          %2371 = vmatpush.msra.mxu0 %v2370
          %v2372 = vand.u32 %v2222, 4294901760
          %2373 = vmatmul.f32.gmra.mxu0 %v2372
          %v2374 = vpop.f32.mrf.mxu0
          %v2375 = vadd.f32 %v2345, %v2374
          %v2376 = vand.u32 %v2225, 4294901760
          %2377 = vmatmul.f32.gmra.mxu0 %v2376
          %v2378 = vpop.f32.mrf.mxu0
          %v2379 = vadd.f32 %v2351, %v2378
          %2380 = vdwg.mxu0
          %2381 = vmatpush.msra.mxu0 0.0
          %2382 = vmatpush.msra.mxu0 0.0
          %2383 = vmatpush.msra.mxu0 0.0
          %2384 = vmatpush.msra.mxu0 0.0
          %2385 = vmatpush.msra.mxu0 0.0
          %2386 = vmatpush.msra.mxu0 0.0
          %2387 = vmatpush.msra.mxu0 0.0
          %2388 = vmatpush.msra.mxu0 0.0
          %2389 = vmatpush.msra.mxu0 0.0
          %2390 = vmatpush.msra.mxu0 0.0
          %2391 = vmatpush.msra.mxu0 0.0
          %2392 = vmatpush.msra.mxu0 0.0
          %2393 = vmatpush.msra.mxu0 0.0
          %2394 = vmatpush.msra.mxu0 0.0
          %2395 = vmatpush.msra.mxu0 0.0
          %v2396 = vand.u32 %v2228, 4294901760
          %2397 = vmatpush.msra.mxu0 %v2396
          %v2398 = vand.u32 %v2222, 4294901760
          %2399 = vmatmul.f32.gmra.mxu0 %v2398
          %v2400 = vpop.f32.mrf.mxu0
          %v2401 = vadd.f32 %v2375, %v2400
          %v2402 = vand.u32 %v2225, 4294901760
          %2403 = vmatmul.f32.gmra.mxu0 %v2402
          %v2404 = vpop.f32.mrf.mxu0
          %v2405 = vadd.f32 %v2379, %v2404
          %2406 = vdwg.mxu0
          %v2407 = vadd.f32 %v2218, %v2401
          %v2409 = vrot.slane %v2401, 4
          %2410 = vrot.lane.b32.xlu0 %v2409, 127
          %v2411 = vpop.permute.xlu0 %2410
          %v2413 = vadd.f32 %v2407, %v2411
          %2415 = vrot.lane.b32.xlu0 %v2405, 126
          %v2416 = vpop.permute.xlu0 %2415
          %v2418 = vadd.f32 %v2413, %v2416
          %s2419 = scalar_lea.vmem [#allocation4], %s1216
          %v2420 = vld [vmem:[%s2419] sm:$0xf]
          %v2422 = vsel %vm1015, %v999, 0
          %v2425 = vsel %vm1015, %v1000, 0
          %v2428 = vsel %vm1022, %v2420, 0
          %2430 = vmatpush.msra.mxu0 0.0
          %2431 = vmatpush.msra.mxu0 0.0
          %2432 = vmatpush.msra.mxu0 0.0
          %2433 = vmatpush.msra.mxu0 0.0
          %2434 = vmatpush.msra.mxu0 0.0
          %2435 = vmatpush.msra.mxu0 0.0
          %2436 = vmatpush.msra.mxu0 0.0
          %2437 = vmatpush.msra.mxu0 0.0
          %2438 = vmatpush.msra.mxu0 0.0
          %2439 = vmatpush.msra.mxu0 0.0
          %2440 = vmatpush.msra.mxu0 0.0
          %2441 = vmatpush.msra.mxu0 0.0
          %2442 = vmatpush.msra.mxu0 0.0
          %2443 = vmatpush.msra.mxu0 0.0
          %2444 = vmatpush.msra.mxu0 0.0
          %v2445 = vand.u32 %v2428, 4294901760
          %2446 = vmatpush.msra.mxu0 %v2445
          %v2447 = vand.u32 %v2422, 4294901760
          %v2448 = vsub.f32 %v2422, %v2447
          %v2449 = vand.u32 %v2448, 4294901760
          %v2450 = vsub.f32 %v2448, %v2449
          %v2451 = vand.u32 %v2450, 4294901760
          %2452 = vmatmul.f32.gmra.mxu0 %v2451
          %v2453 = vpop.f32.mrf.mxu0
          %v2454 = vadd.f32 0.0, %v2453
          %v2455 = vand.u32 %v2425, 4294901760
          %v2456 = vsub.f32 %v2425, %v2455
          %v2457 = vand.u32 %v2456, 4294901760
          %v2458 = vsub.f32 %v2456, %v2457
          %v2459 = vand.u32 %v2458, 4294901760
          %2460 = vmatmul.f32.gmra.mxu0 %v2459
          %v2461 = vpop.f32.mrf.mxu0
          %v2462 = vadd.f32 0.0, %v2461
          %2463 = vdwg.mxu0
          %2464 = vmatpush.msra.mxu0 0.0
          %2465 = vmatpush.msra.mxu0 0.0
          %2466 = vmatpush.msra.mxu0 0.0
          %2467 = vmatpush.msra.mxu0 0.0
          %2468 = vmatpush.msra.mxu0 0.0
          %2469 = vmatpush.msra.mxu0 0.0
          %2470 = vmatpush.msra.mxu0 0.0
          %2471 = vmatpush.msra.mxu0 0.0
          %2472 = vmatpush.msra.mxu0 0.0
          %2473 = vmatpush.msra.mxu0 0.0
          %2474 = vmatpush.msra.mxu0 0.0
          %2475 = vmatpush.msra.mxu0 0.0
          %2476 = vmatpush.msra.mxu0 0.0
          %2477 = vmatpush.msra.mxu0 0.0
          %2478 = vmatpush.msra.mxu0 0.0
          %v2479 = vand.u32 %v2428, 4294901760
          %v2480 = vsub.f32 %v2428, %v2479
          %v2481 = vand.u32 %v2480, 4294901760
          %v2482 = vsub.f32 %v2480, %v2481
          %v2483 = vand.u32 %v2482, 4294901760
          %2484 = vmatpush.msra.mxu0 %v2483
          %v2485 = vand.u32 %v2422, 4294901760
          %2486 = vmatmul.f32.gmra.mxu0 %v2485
          %v2487 = vpop.f32.mrf.mxu0
          %v2488 = vadd.f32 %v2454, %v2487
          %v2489 = vand.u32 %v2425, 4294901760
          %2490 = vmatmul.f32.gmra.mxu0 %v2489
          %v2491 = vpop.f32.mrf.mxu0
          %v2492 = vadd.f32 %v2462, %v2491
          %2493 = vdwg.mxu0
          %2494 = vmatpush.msra.mxu0 0.0
          %2495 = vmatpush.msra.mxu0 0.0
          %2496 = vmatpush.msra.mxu0 0.0
          %2497 = vmatpush.msra.mxu0 0.0
          %2498 = vmatpush.msra.mxu0 0.0
          %2499 = vmatpush.msra.mxu0 0.0
          %2500 = vmatpush.msra.mxu0 0.0
          %2501 = vmatpush.msra.mxu0 0.0
          %2502 = vmatpush.msra.mxu0 0.0
          %2503 = vmatpush.msra.mxu0 0.0
          %2504 = vmatpush.msra.mxu0 0.0
          %2505 = vmatpush.msra.mxu0 0.0
          %2506 = vmatpush.msra.mxu0 0.0
          %2507 = vmatpush.msra.mxu0 0.0
          %2508 = vmatpush.msra.mxu0 0.0
          %v2509 = vand.u32 %v2428, 4294901760
          %v2510 = vsub.f32 %v2428, %v2509
          %2511 = vmatpush.msra.mxu0 %v2510
          %v2512 = vand.u32 %v2422, 4294901760
          %v2513 = vsub.f32 %v2422, %v2512
          %2514 = vmatmul.f32.gmra.mxu0 %v2513
          %v2515 = vpop.f32.mrf.mxu0
          %v2516 = vadd.f32 %v2488, %v2515
          %v2517 = vand.u32 %v2425, 4294901760
          %v2518 = vsub.f32 %v2425, %v2517
          %2519 = vmatmul.f32.gmra.mxu0 %v2518
          %v2520 = vpop.f32.mrf.mxu0
          %v2521 = vadd.f32 %v2492, %v2520
          %2522 = vdwg.mxu0
          %2523 = vmatpush.msra.mxu0 0.0
          %2524 = vmatpush.msra.mxu0 0.0
          %2525 = vmatpush.msra.mxu0 0.0
          %2526 = vmatpush.msra.mxu0 0.0
          %2527 = vmatpush.msra.mxu0 0.0
          %2528 = vmatpush.msra.mxu0 0.0
          %2529 = vmatpush.msra.mxu0 0.0
          %2530 = vmatpush.msra.mxu0 0.0
          %2531 = vmatpush.msra.mxu0 0.0
          %2532 = vmatpush.msra.mxu0 0.0
          %2533 = vmatpush.msra.mxu0 0.0
          %2534 = vmatpush.msra.mxu0 0.0
          %2535 = vmatpush.msra.mxu0 0.0
          %2536 = vmatpush.msra.mxu0 0.0
          %2537 = vmatpush.msra.mxu0 0.0
          %v2538 = vand.u32 %v2428, 4294901760
          %2539 = vmatpush.msra.mxu0 %v2538
          %v2540 = vand.u32 %v2422, 4294901760
          %v2541 = vsub.f32 %v2422, %v2540
          %v2542 = vand.u32 %v2541, 4294901760
          %2543 = vmatmul.f32.gmra.mxu0 %v2542
          %v2544 = vpop.f32.mrf.mxu0
          %v2545 = vadd.f32 %v2516, %v2544
          %v2546 = vand.u32 %v2425, 4294901760
          %v2547 = vsub.f32 %v2425, %v2546
          %v2548 = vand.u32 %v2547, 4294901760
          %2549 = vmatmul.f32.gmra.mxu0 %v2548
          %v2550 = vpop.f32.mrf.mxu0
          %v2551 = vadd.f32 %v2521, %v2550
          %2552 = vdwg.mxu0
          %2553 = vmatpush.msra.mxu0 0.0
          %2554 = vmatpush.msra.mxu0 0.0
          %2555 = vmatpush.msra.mxu0 0.0
          %2556 = vmatpush.msra.mxu0 0.0
          %2557 = vmatpush.msra.mxu0 0.0
          %2558 = vmatpush.msra.mxu0 0.0
          %2559 = vmatpush.msra.mxu0 0.0
          %2560 = vmatpush.msra.mxu0 0.0
          %2561 = vmatpush.msra.mxu0 0.0
          %2562 = vmatpush.msra.mxu0 0.0
          %2563 = vmatpush.msra.mxu0 0.0
          %2564 = vmatpush.msra.mxu0 0.0
          %2565 = vmatpush.msra.mxu0 0.0
          %2566 = vmatpush.msra.mxu0 0.0
          %2567 = vmatpush.msra.mxu0 0.0
          %v2568 = vand.u32 %v2428, 4294901760
          %v2569 = vsub.f32 %v2428, %v2568
          %v2570 = vand.u32 %v2569, 4294901760
          %2571 = vmatpush.msra.mxu0 %v2570
          %v2572 = vand.u32 %v2422, 4294901760
          %2573 = vmatmul.f32.gmra.mxu0 %v2572
          %v2574 = vpop.f32.mrf.mxu0
          %v2575 = vadd.f32 %v2545, %v2574
          %v2576 = vand.u32 %v2425, 4294901760
          %2577 = vmatmul.f32.gmra.mxu0 %v2576
          %v2578 = vpop.f32.mrf.mxu0
          %v2579 = vadd.f32 %v2551, %v2578
          %2580 = vdwg.mxu0
          %2581 = vmatpush.msra.mxu0 0.0
          %2582 = vmatpush.msra.mxu0 0.0
          %2583 = vmatpush.msra.mxu0 0.0
          %2584 = vmatpush.msra.mxu0 0.0
          %2585 = vmatpush.msra.mxu0 0.0
          %2586 = vmatpush.msra.mxu0 0.0
          %2587 = vmatpush.msra.mxu0 0.0
          %2588 = vmatpush.msra.mxu0 0.0
          %2589 = vmatpush.msra.mxu0 0.0
          %2590 = vmatpush.msra.mxu0 0.0
          %2591 = vmatpush.msra.mxu0 0.0
          %2592 = vmatpush.msra.mxu0 0.0
          %2593 = vmatpush.msra.mxu0 0.0
          %2594 = vmatpush.msra.mxu0 0.0
          %2595 = vmatpush.msra.mxu0 0.0
          %v2596 = vand.u32 %v2428, 4294901760
          %2597 = vmatpush.msra.mxu0 %v2596
          %v2598 = vand.u32 %v2422, 4294901760
          %2599 = vmatmul.f32.gmra.mxu0 %v2598
          %v2600 = vpop.f32.mrf.mxu0
          %v2601 = vadd.f32 %v2575, %v2600
          %v2602 = vand.u32 %v2425, 4294901760
          %2603 = vmatmul.f32.gmra.mxu0 %v2602
          %v2604 = vpop.f32.mrf.mxu0
          %v2605 = vadd.f32 %v2579, %v2604
          %2606 = vdwg.mxu0
          %v2607 = vadd.f32 %v2418, %v2601
          %v2609 = vrot.slane %v2601, 4
          %2610 = vrot.lane.b32.xlu0 %v2609, 127
          %v2611 = vpop.permute.xlu0 %2610
          %v2613 = vadd.f32 %v2607, %v2611
          %2615 = vrot.lane.b32.xlu0 %v2605, 126
          %v2616 = vpop.permute.xlu0 %2615
          %v2618 = vadd.f32 %v2613, %v2616
          %s2619 = scalar_lea.vmem [#allocation4], %s1418
          %v2620 = vld [vmem:[%s2619] sm:$0xf]
          %v2622 = vsel %vm1015, %v1002, 0
          %v2625 = vsel %vm1015, %v1003, 0
          %v2628 = vsel %vm1022, %v2620, 0
          %2630 = vmatpush.msra.mxu0 0.0
          %2631 = vmatpush.msra.mxu0 0.0
          %2632 = vmatpush.msra.mxu0 0.0
          %2633 = vmatpush.msra.mxu0 0.0
          %2634 = vmatpush.msra.mxu0 0.0
          %2635 = vmatpush.msra.mxu0 0.0
          %2636 = vmatpush.msra.mxu0 0.0
          %2637 = vmatpush.msra.mxu0 0.0
          %2638 = vmatpush.msra.mxu0 0.0
          %2639 = vmatpush.msra.mxu0 0.0
          %2640 = vmatpush.msra.mxu0 0.0
          %2641 = vmatpush.msra.mxu0 0.0
          %2642 = vmatpush.msra.mxu0 0.0
          %2643 = vmatpush.msra.mxu0 0.0
          %2644 = vmatpush.msra.mxu0 0.0
          %v2645 = vand.u32 %v2628, 4294901760
          %2646 = vmatpush.msra.mxu0 %v2645
          %v2647 = vand.u32 %v2622, 4294901760
          %v2648 = vsub.f32 %v2622, %v2647
          %v2649 = vand.u32 %v2648, 4294901760
          %v2650 = vsub.f32 %v2648, %v2649
          %v2651 = vand.u32 %v2650, 4294901760
          %2652 = vmatmul.f32.gmra.mxu0 %v2651
          %v2653 = vpop.f32.mrf.mxu0
          %v2654 = vadd.f32 0.0, %v2653
          %v2655 = vand.u32 %v2625, 4294901760
          %v2656 = vsub.f32 %v2625, %v2655
          %v2657 = vand.u32 %v2656, 4294901760
          %v2658 = vsub.f32 %v2656, %v2657
          %v2659 = vand.u32 %v2658, 4294901760
          %2660 = vmatmul.f32.gmra.mxu0 %v2659
          %v2661 = vpop.f32.mrf.mxu0
          %v2662 = vadd.f32 0.0, %v2661
          %2663 = vdwg.mxu0
          %2664 = vmatpush.msra.mxu0 0.0
          %2665 = vmatpush.msra.mxu0 0.0
          %2666 = vmatpush.msra.mxu0 0.0
          %2667 = vmatpush.msra.mxu0 0.0
          %2668 = vmatpush.msra.mxu0 0.0
          %2669 = vmatpush.msra.mxu0 0.0
          %2670 = vmatpush.msra.mxu0 0.0
          %2671 = vmatpush.msra.mxu0 0.0
          %2672 = vmatpush.msra.mxu0 0.0
          %2673 = vmatpush.msra.mxu0 0.0
          %2674 = vmatpush.msra.mxu0 0.0
          %2675 = vmatpush.msra.mxu0 0.0
          %2676 = vmatpush.msra.mxu0 0.0
          %2677 = vmatpush.msra.mxu0 0.0
          %2678 = vmatpush.msra.mxu0 0.0
          %v2679 = vand.u32 %v2628, 4294901760
          %v2680 = vsub.f32 %v2628, %v2679
          %v2681 = vand.u32 %v2680, 4294901760
          %v2682 = vsub.f32 %v2680, %v2681
          %v2683 = vand.u32 %v2682, 4294901760
          %2684 = vmatpush.msra.mxu0 %v2683
          %v2685 = vand.u32 %v2622, 4294901760
          %2686 = vmatmul.f32.gmra.mxu0 %v2685
          %v2687 = vpop.f32.mrf.mxu0
          %v2688 = vadd.f32 %v2654, %v2687
          %v2689 = vand.u32 %v2625, 4294901760
          %2690 = vmatmul.f32.gmra.mxu0 %v2689
          %v2691 = vpop.f32.mrf.mxu0
          %v2692 = vadd.f32 %v2662, %v2691
          %2693 = vdwg.mxu0
          %2694 = vmatpush.msra.mxu0 0.0
          %2695 = vmatpush.msra.mxu0 0.0
          %2696 = vmatpush.msra.mxu0 0.0
          %2697 = vmatpush.msra.mxu0 0.0
          %2698 = vmatpush.msra.mxu0 0.0
          %2699 = vmatpush.msra.mxu0 0.0
          %2700 = vmatpush.msra.mxu0 0.0
          %2701 = vmatpush.msra.mxu0 0.0
          %2702 = vmatpush.msra.mxu0 0.0
          %2703 = vmatpush.msra.mxu0 0.0
          %2704 = vmatpush.msra.mxu0 0.0
          %2705 = vmatpush.msra.mxu0 0.0
          %2706 = vmatpush.msra.mxu0 0.0
          %2707 = vmatpush.msra.mxu0 0.0
          %2708 = vmatpush.msra.mxu0 0.0
          %v2709 = vand.u32 %v2628, 4294901760
          %v2710 = vsub.f32 %v2628, %v2709
          %2711 = vmatpush.msra.mxu0 %v2710
          %v2712 = vand.u32 %v2622, 4294901760
          %v2713 = vsub.f32 %v2622, %v2712
          %2714 = vmatmul.f32.gmra.mxu0 %v2713
          %v2715 = vpop.f32.mrf.mxu0
          %v2716 = vadd.f32 %v2688, %v2715
          %v2717 = vand.u32 %v2625, 4294901760
          %v2718 = vsub.f32 %v2625, %v2717
          %2719 = vmatmul.f32.gmra.mxu0 %v2718
          %v2720 = vpop.f32.mrf.mxu0
          %v2721 = vadd.f32 %v2692, %v2720
          %2722 = vdwg.mxu0
          %2723 = vmatpush.msra.mxu0 0.0
          %2724 = vmatpush.msra.mxu0 0.0
          %2725 = vmatpush.msra.mxu0 0.0
          %2726 = vmatpush.msra.mxu0 0.0
          %2727 = vmatpush.msra.mxu0 0.0
          %2728 = vmatpush.msra.mxu0 0.0
          %2729 = vmatpush.msra.mxu0 0.0
          %2730 = vmatpush.msra.mxu0 0.0
          %2731 = vmatpush.msra.mxu0 0.0
          %2732 = vmatpush.msra.mxu0 0.0
          %2733 = vmatpush.msra.mxu0 0.0
          %2734 = vmatpush.msra.mxu0 0.0
          %2735 = vmatpush.msra.mxu0 0.0
          %2736 = vmatpush.msra.mxu0 0.0
          %2737 = vmatpush.msra.mxu0 0.0
          %v2738 = vand.u32 %v2628, 4294901760
          %2739 = vmatpush.msra.mxu0 %v2738
          %v2740 = vand.u32 %v2622, 4294901760
          %v2741 = vsub.f32 %v2622, %v2740
          %v2742 = vand.u32 %v2741, 4294901760
          %2743 = vmatmul.f32.gmra.mxu0 %v2742
          %v2744 = vpop.f32.mrf.mxu0
          %v2745 = vadd.f32 %v2716, %v2744
          %v2746 = vand.u32 %v2625, 4294901760
          %v2747 = vsub.f32 %v2625, %v2746
          %v2748 = vand.u32 %v2747, 4294901760
          %2749 = vmatmul.f32.gmra.mxu0 %v2748
          %v2750 = vpop.f32.mrf.mxu0
          %v2751 = vadd.f32 %v2721, %v2750
          %2752 = vdwg.mxu0
          %2753 = vmatpush.msra.mxu0 0.0
          %2754 = vmatpush.msra.mxu0 0.0
          %2755 = vmatpush.msra.mxu0 0.0
          %2756 = vmatpush.msra.mxu0 0.0
          %2757 = vmatpush.msra.mxu0 0.0
          %2758 = vmatpush.msra.mxu0 0.0
          %2759 = vmatpush.msra.mxu0 0.0
          %2760 = vmatpush.msra.mxu0 0.0
          %2761 = vmatpush.msra.mxu0 0.0
          %2762 = vmatpush.msra.mxu0 0.0
          %2763 = vmatpush.msra.mxu0 0.0
          %2764 = vmatpush.msra.mxu0 0.0
          %2765 = vmatpush.msra.mxu0 0.0
          %2766 = vmatpush.msra.mxu0 0.0
          %2767 = vmatpush.msra.mxu0 0.0
          %v2768 = vand.u32 %v2628, 4294901760
          %v2769 = vsub.f32 %v2628, %v2768
          %v2770 = vand.u32 %v2769, 4294901760
          %2771 = vmatpush.msra.mxu0 %v2770
          %v2772 = vand.u32 %v2622, 4294901760
          %2773 = vmatmul.f32.gmra.mxu0 %v2772
          %v2774 = vpop.f32.mrf.mxu0
          %v2775 = vadd.f32 %v2745, %v2774
          %v2776 = vand.u32 %v2625, 4294901760
          %2777 = vmatmul.f32.gmra.mxu0 %v2776
          %v2778 = vpop.f32.mrf.mxu0
          %v2779 = vadd.f32 %v2751, %v2778
          %2780 = vdwg.mxu0
          %2781 = vmatpush.msra.mxu0 0.0
          %2782 = vmatpush.msra.mxu0 0.0
          %2783 = vmatpush.msra.mxu0 0.0
          %2784 = vmatpush.msra.mxu0 0.0
          %2785 = vmatpush.msra.mxu0 0.0
          %2786 = vmatpush.msra.mxu0 0.0
          %2787 = vmatpush.msra.mxu0 0.0
          %2788 = vmatpush.msra.mxu0 0.0
          %2789 = vmatpush.msra.mxu0 0.0
          %2790 = vmatpush.msra.mxu0 0.0
          %2791 = vmatpush.msra.mxu0 0.0
          %2792 = vmatpush.msra.mxu0 0.0
          %2793 = vmatpush.msra.mxu0 0.0
          %2794 = vmatpush.msra.mxu0 0.0
          %2795 = vmatpush.msra.mxu0 0.0
          %v2796 = vand.u32 %v2628, 4294901760
          %2797 = vmatpush.msra.mxu0 %v2796
          %v2798 = vand.u32 %v2622, 4294901760
          %2799 = vmatmul.f32.gmra.mxu0 %v2798
          %v2800 = vpop.f32.mrf.mxu0
          %v2801 = vadd.f32 %v2775, %v2800
          %v2802 = vand.u32 %v2625, 4294901760
          %2803 = vmatmul.f32.gmra.mxu0 %v2802
          %v2804 = vpop.f32.mrf.mxu0
          %v2805 = vadd.f32 %v2779, %v2804
          %2806 = vdwg.mxu0
          %v2807 = vadd.f32 %v2618, %v2801
          %v2809 = vrot.slane %v2801, 4
          %2810 = vrot.lane.b32.xlu0 %v2809, 127
          %v2811 = vpop.permute.xlu0 %2810
          %v2813 = vadd.f32 %v2807, %v2811
          %2815 = vrot.lane.b32.xlu0 %v2805, 126
          %v2816 = vpop.permute.xlu0 %2815
          %v2818 = vadd.f32 %v2813, %v2816
          %2820 = vset.pattern.permute.xlu0 0
          %2821 = vperm.xlu0 %2820, %v1004
          %v2822 = vpop.permute.xlu0 %2821
          %v2824 = vmul.f32 %v2818, %v2822
          %2826 = vset.pattern.permute.xlu0 0
          %2827 = vperm.xlu0 %2826, %v1005
          %v2828 = vpop.permute.xlu0 %2827
          %v2830 = vadd.f32 %v2824, %v2828
          %v2831 = vmax.f32 %v2830, 0.0
          %s2832 = scalar_lea.vmem %s403, %s1012 [#allocation12]
          %vm2833 = vcmask 125952
          %2834 = vst.msk [vmem:[%s2832] sm:$0xf] %vm2833, %v2831
        $region86: #{tpu_custom_call.1} parent=55 // loop_footer
          %s1011 = sadd.s32 1, %s1007
        $region87: #{tpu_custom_call.1} parent=55 // loop_footer_branch
          %1006 = sbr.rel target = $region83
        $region88: #{tpu_custom_call.1} parent=55 // loop_exit
          _
        %s2835 = sand.u32 %s259, 1
        %s2836 = scalar_lea.sflag [#allocation11], %s2835
        %s2837 = sand.u32 %s259, 1
        %s2838 = smul.addr %s2837, 64
        %s2839 = scalar_lea.vmem [#allocation12], %s2838
        // Predicated region
        $region89: #{tpu_custom_call.1} parent=55 // pred_check
          %p2840 = pneg %p269
        $region90: #{tpu_custom_call.1} parent=55 // pred_check_branch
          %2842 = sbr.rel (%p2840) target = $region92
        $region91: #{tpu_custom_call.1} parent=55 // pred_region
          %2844 = vsyncadd %s2836, 0
          %s2845 = smul.addr %s47, 16
          %s2846 = smul.addr %s2845, 4
          %s2847 = scalar_lea.hbm %s12, %s2846
          %s2848 = sshll.u32 %s2839, 4
          %s2849 = int_to_ptr.vmem [resolvable:$true] %s2848
          %s2850 = sshll.u32 %s2847, 4
          %s2851 = int_to_ptr.hbm [resolvable:$true] %s2850
          %2856 = dma.vmem_to_hbm [thread:$0]  %s2849, 1024, %s2851, %s2836, 64, 64, 4
        $region92: #{tpu_custom_call.1} parent=55 // pred_fallthru
          _
      $region56: #{tpu_custom_call.1} parent=5 // pred_fallthru
        _
      %p2857 = scmp.le.s32.totalorder 2, %s42
      // Predicated region
      $region93: #{tpu_custom_call.1} parent=5 // pred_check
        %p2858 = pneg %p2857
      $region94: #{tpu_custom_call.1} parent=5 // pred_check_branch
        %2860 = sbr.rel (%p2858) target = $region96
      $region95: #{tpu_custom_call.1} parent=5 // pred_region
        %s2861 = ssub.s32 %s42, 2
        // Predicated region
        $region97: #{tpu_custom_call.1} parent=95 // pred_check
          %p2862 = pneg %p275
        $region98: #{tpu_custom_call.1} parent=95 // pred_check_branch
          %2864 = sbr.rel (%p2862) target = $region100
        $region99: #{tpu_custom_call.1} parent=95 // pred_region
          %s2865 = sand.u32 %s260, 1
          %s2866 = scalar_lea.sflag [#allocation11], %s2865
          %s2867 = sand.u32 %s260, 1
          %s2868 = smul.addr %s2867, 64
          %s2869 = scalar_lea.vmem [#allocation12], %s2868
          %2871 = dma.done %s2866, 1024
        $region100: #{tpu_custom_call.1} parent=95 // pred_fallthru
          _
      $region96: #{tpu_custom_call.1} parent=5 // pred_fallthru
        _
    $region6: #{tpu_custom_call.1} parent=1 // loop_footer
      %s46 = sadd.s32 1, %s42
    $region7: #{tpu_custom_call.1} parent=1 // loop_footer_branch
      %41 = sbr.rel target = $region3
    $region8: #{tpu_custom_call.1} parent=1 // loop_exit
      _
    %2872 = vsyncpa [#allocation10], 1
    %s2873 = scalar_lea.sflag [#allocation10], 1
    %2874 = vsyncpa %s2873, 1
    %2875 = vsyncpa [#allocation11], 1
    %s2876 = scalar_lea.sflag [#allocation11], 1
    %2877 = vsyncpa %s2876, 1

</llo_original>
